<compile_context>
chip_gen: v6e
topology: v6e:2x2x1
jax: 0.10.0
libtpu: 0.0.40
codegen_flags: <defaults>
</compile_context>

<pallas_src>
import jax
import jax.numpy as jnp
import numpy as np
from jax.experimental import pallas as pl
from jax.experimental.pallas import tpu as pltpu

KSIZE = 5
STRIDE = 2
BN_EPS = 1e-5


def conv2d_size_out(size, kernel_size=KSIZE, stride=STRIDE):
    return (size - (kernel_size - 1) - 1) // stride + 1


def _round_up(v, m):
    return ((v + m - 1) // m) * m


# ---------------------------------------------------------------------------
# One-time parameter preprocessing (numpy; fully hoisted out of the fwd path)
# ---------------------------------------------------------------------------
def prepare_params(params, h, w, batch_tile):
    """Precompute packed, padded, MXU-ready constants.

    Activation layout (per batch tile of Nb samples): flat [h*Nb (rows, padded
    to x8), w*C (cols, c minor, padded to x128)].  A stride-2 5x5 conv layer is
        tall = SEL @ x                      (one row-gather matmul)
        wide = concat_kh(tall row blocks)   (lane concat, 128-aligned)
        y    = wide @ W_kstacked            (one banded matmul, K = 5*w_in*C)
    followed by one-pass training-mode BN (G fold / E broadcast) + ReLU.
    """
    n_b = batch_tile
    c_in0 = params["w1"].shape[1]
    outputs = params["head_w"].shape[0]

    # ---- logical per-layer dims ----
    raw = []
    hh, ww, cc = h, w, c_in0
    for wkey in ("w1", "w2", "w3"):
        assert hh >= KSIZE and ww >= KSIZE, "spatial size too small for conv"
        oc = params[wkey].shape[0]
        oh, ow = conv2d_size_out(hh), conv2d_size_out(ww)
        raw.append(dict(h_in=hh, w_in=ww, c_in=cc, oh=oh, ow=ow, oc=oc))
        hh, ww, cc = oh, ow, oc
    n_layers = len(raw)
    OCP = max(d["oc"] for d in raw)

    # ---- padded dims: rows -> multiples of 8, conv-input cols -> x128 ----
    layers = []
    for i, d in enumerate(raw):
        hinNp = _round_up(d["h_in"] * n_b, 8) if i == 0 else layers[i - 1]["ohNp"]
        wcp_in = (_round_up(d["w_in"] * d["c_in"], 128) if i == 0
                  else layers[i - 1]["owocp"])
        ohNp = _round_up(d["oh"] * n_b, 8)
        owoc = d["ow"] * d["oc"]
        owocp = owoc if i == n_layers - 1 else _round_up(owoc, 128)
        layers.append(dict(d, hinNp=hinNp, wcp_in=wcp_in, ohNp=ohNp, owocp=owocp))

    # ---- SEL_all: packed one-hot row gathers [sum_l 5*ohNp_l, max hinNp] ----
    sel_width = max(L["hinNp"] for L in layers)
    sel_blocks, sel_offs, off = [], [], 0
    for L in layers:
        s = np.zeros((KSIZE * L["ohNp"], sel_width), np.float32)
        for kh in range(KSIZE):
            for r in range(L["oh"]):
                for n in range(n_b):
                    s[kh * L["ohNp"] + r * n_b + n,
                      (STRIDE * r + kh) * n_b + n] = 1.0
        sel_blocks.append(s)
        sel_offs.append(off)
        off += s.shape[0]
    sel_all = np.concatenate(sel_blocks, axis=0)

    # ---- W_all: K-stacked banded conv weights + head weight, one slab ----
    w_width = max(max(L["owocp"] for L in layers), outputs)
    w_blocks, w_offs, off = [], [], 0
    for L, wkey in zip(layers, ("w1", "w2", "w3")):
        wt = np.asarray(params[wkey], np.float32)          # [oc, c, 5, 5]
        c, oc = L["c_in"], L["oc"]
        blk = np.zeros((KSIZE * L["wcp_in"], w_width), np.float32)
        for kh in range(KSIZE):
            for kw in range(KSIZE):
                sub = wt[:, :, kh, kw].T                   # [c, oc]
                for ow_ in range(L["ow"]):
                    wp = STRIDE * ow_ + kw                 # input column position
                    if wp < L["w_in"]:
                        r0 = kh * L["wcp_in"] + wp * c
                        blk[r0:r0 + c, ow_ * oc:(ow_ + 1) * oc] = sub
        w_blocks.append(blk)
        w_offs.append(off)
        off += blk.shape[0]
    # head weight, pre-permuted for the NCHW flatten, appended to the slab
    L3 = layers[-1]
    oh3, ow3, oc3 = L3["oh"], L3["ow"], L3["oc"]
    hw = np.asarray(params["head_w"], np.float32).reshape(outputs, oc3, oh3, ow3)
    hw = hw.transpose(2, 3, 1, 0)                          # [oh3, ow3, oc3, outputs]
    wh_blk = _round_up(ow3 * oc3, 8)
    wh_off = off
    for r in range(oh3):
        blk = np.zeros((wh_blk, w_width), np.float32)
        blk[:ow3 * oc3, :outputs] = hw[r].reshape(ow3 * oc3, outputs)
        w_blocks.append(blk)
        off += wh_blk
    w_all = np.concatenate(w_blocks, axis=0)

    # ---- G_all / E_all: per-channel fold / broadcast 0-1 matrices ----
    e_width = max(L["owocp"] for L in layers)
    g_blocks, g_offs, off = [], [], 0
    e_blocks = []
    for L in layers:
        g = np.zeros((L["owocp"], OCP), np.float32)
        e = np.zeros((OCP, e_width), np.float32)
        for w_ in range(L["ow"]):
            for ch in range(L["oc"]):
                g[w_ * L["oc"] + ch, ch] = 1.0
                e[ch, w_ * L["oc"] + ch] = 1.0
        g_blocks.append(g)
        g_offs.append(off)
        off += L["owocp"]
        e_blocks.append(e)
    g_all = np.concatenate(g_blocks, axis=0)
    e_all = np.concatenate(e_blocks, axis=0)

    # ---- smalls: gamma / beta (OCP-wide per-layer slots) + head bias ----
    sb = np.zeros((3, max(n_layers * OCP, outputs)), np.float32)
    for i, (gk, bk) in enumerate((("g1", "beta1"), ("g2", "beta2"), ("g3", "beta3"))):
        oc = layers[i]["oc"]
        sb[0, i * OCP:i * OCP + oc] = np.asarray(params[gk], np.float32)
        sb[1, i * OCP:i * OCP + oc] = np.asarray(params[bk], np.float32)
    sb[2, :outputs] = np.asarray(params["head_b"], np.float32)
    # NOTE: conv biases b1/b2/b3 intentionally dropped (cancelled exactly by
    # training-mode BN's batch-mean subtraction).  Eval-mode (running stats)
    # BN would need them back.

    prepped = dict(
        SEL=jnp.asarray(sel_all, jnp.bfloat16),   # exact 0/1 -> bf16 is lossless
        W=jnp.asarray(w_all, jnp.bfloat16),       # bf16 MXU operands
        G=jnp.asarray(g_all, jnp.float32),        # BN stat math stays f32
        E=jnp.asarray(e_all, jnp.float32),
        SB=jnp.asarray(sb, jnp.float32),
    )
    cfg = dict(layers=layers, sel_offs=sel_offs, w_offs=w_offs, g_offs=g_offs,
               wh_off=wh_off, wh_blk=wh_blk, OCP=OCP, outputs=outputs,
               n_batch=n_b, in_rows=layers[0]["hinNp"], in_cols=layers[0]["wcp_in"])
    return prepped, cfg


# ---------------------------------------------------------------------------
# The fused kernel: (conv -> BN -> ReLU) x3 + linear head, all in VMEM
# ---------------------------------------------------------------------------
def _make_dqn_kernel(cfg):
    layers = cfg["layers"]
    n_b = cfg["n_batch"]
    outputs = cfg["outputs"]
    OCP = cfg["OCP"]
    sel_offs, w_offs, g_offs = cfg["sel_offs"], cfg["w_offs"], cfg["g_offs"]
    wh_off, wh_blk = cfg["wh_off"], cfg["wh_blk"]

    def kernel(x_ref, sel_ref, w_ref, g_ref, e_ref, sb_ref, o_ref):
        x = x_ref[...].astype(jnp.bfloat16)                       # [hinNp0, wcp0]
        for li, L in enumerate(layers):
            ohNp, wcp, owocp, hinNp = L["ohNp"], L["wcp_in"], L["owocp"], L["hinNp"]

            # ---- conv: 1 row-gather matmul + 1 K-stacked banded matmul ----
            sel = sel_ref[sel_offs[li]:sel_offs[li] + KSIZE * ohNp, :hinNp]
            tall = jnp.dot(sel, x, preferred_element_type=jnp.float32)  # [5*ohNp, wcp]
            wide = jnp.concatenate(
                [tall[k * ohNp:(k + 1) * ohNp, :] for k in range(KSIZE)],
                axis=1).astype(jnp.bfloat16)                      # [ohNp, 5*wcp]
            wk = w_ref[w_offs[li]:w_offs[li] + KSIZE * wcp, :owocp]
            y = jnp.dot(wide, wk, preferred_element_type=jnp.float32)   # [ohNp, owocp]

            # ---- training-mode BatchNorm + ReLU (conv bias cancelled) ----
            inv_cnt = 1.0 / float(n_b * L["oh"] * L["ow"])        # true count only
            sums = jnp.concatenate(
                [jnp.sum(y, axis=0, keepdims=True),
                 jnp.sum(y * y, axis=0, keepdims=True)], axis=0)  # [2, owocp]
            stats = jnp.dot(sums, g_ref[g_offs[li]:g_offs[li] + owocp, :],
                            preferred_element_type=jnp.float32) * inv_cnt  # [2, OCP]
            mean, msq = stats[0:1, :], stats[1:2, :]
            var = jnp.maximum(msq - mean * mean, 0.0)
            gamma = sb_ref[0:1, li * OCP:(li + 1) * OCP]
            beta = sb_ref[1:2, li * OCP:(li + 1) * OCP]
            scale = gamma * jax.lax.rsqrt(var + BN_EPS)
            shift = beta - mean * scale
            bc = jnp.dot(jnp.concatenate([scale, shift], axis=0),
                         e_ref[li * OCP:(li + 1) * OCP, :owocp],
                         preferred_element_type=jnp.float32)      # [2, owocp]
            x = jnp.maximum(y * bc[0:1, :] + bc[1:2, :], 0.0).astype(jnp.bfloat16)

        # ---- fused linear head (NCHW flatten folded into the packed Wh) ----
        last = layers[-1]
        owoc3 = last["ow"] * last["oc"]
        acc = None
        for r in range(last["oh"]):
            blk = x[r * n_b:(r + 1) * n_b, :owoc3]                # true rows only
            whr = w_ref[wh_off + r * wh_blk:wh_off + r * wh_blk + owoc3, :outputs]
            part = jnp.dot(blk, whr, preferred_element_type=jnp.float32)
            acc = part if acc is None else acc + part
        o_ref[...] = acc + sb_ref[2:3, :outputs]                  # [Nb, outputs]

    return kernel


def dqn_forward(x_nchw, prepped, cfg):
    n, c, h, w = x_nchw.shape
    nb = cfg["n_batch"]
    assert n % nb == 0, "batch must be a multiple of the batch tile"
    t = n // nb
    outputs = cfg["outputs"]

    # Boundary layout change only: NCHW -> [T, H*Nb, W*C] tiles (c minor),
    # zero-padded to the kernel's (x8 rows, x128 cols) layout.
    xt = (x_nchw.astype(jnp.float32)
          .reshape(t, nb, c, h, w)
          .transpose(0, 3, 1, 4, 2)
          .reshape(t, h * nb, w * c))
    rows, cols = cfg["in_rows"], cfg["in_cols"]
    xt = jnp.pad(xt, ((0, 0), (0, rows - h * nb), (0, cols - w * c)))

    out = pl.pallas_call(
        _make_dqn_kernel(cfg),
        out_shape=jax.ShapeDtypeStruct((t, nb, outputs), jnp.float32),
        grid=(t,),
        in_specs=[
            pl.BlockSpec((None, rows, cols), lambda i: (i, 0, 0)),     # per-tile input
            pl.BlockSpec(prepped["SEL"].shape, lambda i: (0, 0)),      # resident consts
            pl.BlockSpec(prepped["W"].shape, lambda i: (0, 0)),
            pl.BlockSpec(prepped["G"].shape, lambda i: (0, 0)),
            pl.BlockSpec(prepped["E"].shape, lambda i: (0, 0)),
            pl.BlockSpec(prepped["SB"].shape, lambda i: (0, 0)),
        ],
        out_specs=pl.BlockSpec((None, nb, outputs), lambda i: (i, 0, 0)),
        compiler_params=pltpu.CompilerParams(
            dimension_semantics=("parallel",)),   # batch tiles -> v7x megacore
    )(xt, prepped["SEL"], prepped["W"], prepped["G"], prepped["E"], prepped["SB"])
    return out.reshape(n, outputs)


# ---------------------------------------------------------------------------
# Pure-JAX f32 reference (mirrors the PyTorch forward, incl. conv biases)
# ---------------------------------------------------------------------------
def dqn_forward_ref(x, params):
    def conv(x, w, b):
        y = jax.lax.conv_general_dilated(
            x, w, (STRIDE, STRIDE), "VALID",
            dimension_numbers=("NCHW", "OIHW", "NCHW"))
        return y + b.reshape(1, -1, 1, 1)

    def bn_relu(y, g, beta):
        mean = y.mean(axis=(0, 2, 3), keepdims=True)
        var = ((y - mean) ** 2).mean(axis=(0, 2, 3), keepdims=True)
        y = (y - mean) / jnp.sqrt(var + BN_EPS) * g.reshape(1, -1, 1, 1)
        y = y + beta.reshape(1, -1, 1, 1)
        return jnp.maximum(y, 0.0)

    x = bn_relu(conv(x, params["w1"], params["b1"]), params["g1"], params["beta1"])
    x = bn_relu(conv(x, params["w2"], params["b2"]), params["g2"], params["beta2"])
    x = bn_relu(conv(x, params["w3"], params["b3"]), params["g3"], params["beta3"])
    flat = x.reshape(x.shape[0], -1)
    return flat @ params["head_w"].T + params["head_b"]


def init_params(key, h, w, outputs):
    convw = conv2d_size_out(conv2d_size_out(conv2d_size_out(w)))
    convh = conv2d_size_out(conv2d_size_out(conv2d_size_out(h)))
    linear_input_size = convw * convh * 32

    ks = jax.random.split(key, 14)
    nrm = lambda k, shape, scale: scale * jax.random.normal(k, shape, jnp.float32)
    return {
        "w1": nrm(ks[0], (16, 3, KSIZE, KSIZE), 0.1),
        "b1": nrm(ks[1], (16,), 0.1),
        "g1": 1.0 + nrm(ks[2], (16,), 0.05),
        "beta1": nrm(ks[3], (16,), 0.05),
        "w2": nrm(ks[4], (32, 16, KSIZE, KSIZE), 0.05),
        "b2": nrm(ks[5], (32,), 0.1),
        "g2": 1.0 + nrm(ks[6], (32,), 0.05),
        "beta2": nrm(ks[7], (32,), 0.05),
        "w3": nrm(ks[8], (32, 32, KSIZE, KSIZE), 0.05),
        "b3": nrm(ks[9], (32,), 0.1),
        "g3": 1.0 + nrm(ks[10], (32,), 0.05),
        "beta3": nrm(ks[11], (32,), 0.05),
        "head_w": nrm(ks[12], (outputs, linear_input_size), 0.1),
        "head_b": nrm(ks[13], (outputs,), 0.1),
    }


if __name__ == "__main__":
    # batch=2, 3-channel 32x32 frames, 4 actions  (32 -> 14 -> 5 -> 1 spatial).
    B, H, W, OUTPUTS = 2, 32, 32, 4

    key = jax.random.PRNGKey(0)
    kx, kp = jax.random.split(key)
    x = jax.random.normal(kx, (B, 3, H, W), dtype=jnp.float32)
    params = init_params(kp, H, W, OUTPUTS)

    prepped, cfg = prepare_params(params, H, W, batch_tile=B)
    fwd = jax.jit(lambda xx: dqn_forward(xx, prepped, cfg))

    out = jax.block_until_ready(fwd(x))
    ref = jax.block_until_ready(dqn_forward_ref(x, params))

    assert out.shape == (B, OUTPUTS)
    # bf16 MXU operands (per perf review) vs. an all-f32 reference -> tolerance
    # relaxed accordingly; BN statistics and elementwise math remain f32.
    np.testing.assert_allclose(np.asarray(out), np.asarray(ref), rtol=5e-2, atol=5e-2)
    print("KERNEL_OK")
</pallas_src>

<mosaic_0001>
module attributes {stable_mosaic.version = 11 : i64} {
  func.func @kernel(%arg0: i32, %arg1: memref<1x64x128xf32, #tpu.memory_space<vmem>>, %arg2: memref<280x64xbf16, #tpu.memory_space<vmem>>, %arg3: memref<3232x256xbf16, #tpu.memory_space<vmem>>, %arg4: memref<544x32xf32, #tpu.memory_space<vmem>>, %arg5: memref<96x256xf32, #tpu.memory_space<vmem>>, %arg6: memref<3x96xf32, #tpu.memory_space<vmem>>, %arg7: memref<1x2x4xf32, #tpu.memory_space<vmem>>) attributes {dimension_semantics = [#tpu.dimension_semantics<parallel>], iteration_bounds = array<i64: 1>, scalar_prefetch = 0 : i64, scratch_operands = 0 : i64, tpu.core_type = #tpu.core_type<tc>, window_params = [{transform_indices = @transform_0, window_bounds = array<i64: 1, 64, 128>}, {pipeline_mode = #tpu.pipeline_mode<synchronous>, transform_indices = @transform_1, window_bounds = array<i64: 280, 64>}, {pipeline_mode = #tpu.pipeline_mode<synchronous>, transform_indices = @transform_2, window_bounds = array<i64: 3232, 256>}, {pipeline_mode = #tpu.pipeline_mode<synchronous>, transform_indices = @transform_3, window_bounds = array<i64: 544, 32>}, {pipeline_mode = #tpu.pipeline_mode<synchronous>, transform_indices = @transform_4, window_bounds = array<i64: 96, 256>}, {pipeline_mode = #tpu.pipeline_mode<synchronous>, transform_indices = @transform_5, window_bounds = array<i64: 3, 96>}, {transform_indices = @transform_6, window_bounds = array<i64: 1, 2, 4>}]} {
    %c0 = arith.constant 0 : index
    %c0_0 = arith.constant 0 : index
    %c0_1 = arith.constant 0 : index
    %0 = vector.load %arg1[%c0, %c0_0, %c0_1] : memref<1x64x128xf32, #tpu.memory_space<vmem>>, vector<1x64x128xf32>
    %1 = vector.shape_cast %0 : vector<1x64x128xf32> to vector<64x128xf32>
    %2 = arith.truncf %1 : vector<64x128xf32> to vector<64x128xbf16>
    %c0_2 = arith.constant 0 : index
    %c0_3 = arith.constant 0 : index
    %3 = vector.load %arg2[%c0_2, %c0_3] : memref<280x64xbf16, #tpu.memory_space<vmem>>, vector<160x64xbf16>
    %cst = arith.constant dense<0.000000e+00> : vector<160x128xf32>
    %4 = tpu.matmul %3, %2, %cst {dimension_numbers = #tpu.dot_dimension_numbers<[1], [0], [0], [1], [0, 0, 1, 1], [], []>} : vector<160x64xbf16>, vector<64x128xbf16>, vector<160x128xf32> -> vector<160x128xf32>
    %5 = vector.extract_strided_slice %4 {offsets = [0, 0], sizes = [32, 128], strides = [1, 1]} : vector<160x128xf32> to vector<32x128xf32>
    %6 = vector.extract_strided_slice %4 {offsets = [32, 0], sizes = [32, 128], strides = [1, 1]} : vector<160x128xf32> to vector<32x128xf32>
    %7 = vector.extract_strided_slice %4 {offsets = [64, 0], sizes = [32, 128], strides = [1, 1]} : vector<160x128xf32> to vector<32x128xf32>
    %8 = vector.extract_strided_slice %4 {offsets = [96, 0], sizes = [32, 128], strides = [1, 1]} : vector<160x128xf32> to vector<32x128xf32>
    %9 = vector.extract_strided_slice %4 {offsets = [128, 0], sizes = [32, 128], strides = [1, 1]} : vector<160x128xf32> to vector<32x128xf32>
    %10 = tpu.concatenate %5, %6, %7, %8, %9 in 1 : vector<32x128xf32>, vector<32x128xf32>, vector<32x128xf32>, vector<32x128xf32>, vector<32x128xf32> -> vector<32x640xf32>
    %11 = arith.truncf %10 : vector<32x640xf32> to vector<32x640xbf16>
    %c0_4 = arith.constant 0 : index
    %c0_5 = arith.constant 0 : index
    %12 = vector.load %arg3[%c0_4, %c0_5] : memref<3232x256xbf16, #tpu.memory_space<vmem>>, vector<640x256xbf16>
    %cst_6 = arith.constant dense<0.000000e+00> : vector<32x256xf32>
    %13 = tpu.matmul %11, %12, %cst_6 {dimension_numbers = #tpu.dot_dimension_numbers<[1], [0], [0], [1], [0, 0, 1, 1], [], []>} : vector<32x640xbf16>, vector<640x256xbf16>, vector<32x256xf32> -> vector<32x256xf32>
    %cst_7 = arith.constant dense<0.000000e+00> : vector<256xf32>
    %14 = vector.multi_reduction <add>, %13, %cst_7 [0] : vector<32x256xf32> to vector<256xf32>
    %15 = vector.shape_cast %14 : vector<256xf32> to vector<1x256xf32>
    %16 = arith.mulf %13, %13 : vector<32x256xf32>
    %cst_8 = arith.constant dense<0.000000e+00> : vector<256xf32>
    %17 = vector.multi_reduction <add>, %16, %cst_8 [0] : vector<32x256xf32> to vector<256xf32>
    %18 = vector.shape_cast %17 : vector<256xf32> to vector<1x256xf32>
    %19 = tpu.concatenate %15, %18 in 0 : vector<1x256xf32>, vector<1x256xf32> -> vector<2x256xf32>
    %c0_9 = arith.constant 0 : index
    %c0_10 = arith.constant 0 : index
    %20 = vector.load %arg4[%c0_9, %c0_10] : memref<544x32xf32, #tpu.memory_space<vmem>>, vector<256x32xf32>
    %cst_11 = arith.constant dense<0.000000e+00> : vector<2x32xf32>
    %21 = tpu.matmul %19, %20, %cst_11 {dimension_numbers = #tpu.dot_dimension_numbers<[1], [0], [0], [1], [0, 0, 1, 1], [], []>} : vector<2x256xf32>, vector<256x32xf32>, vector<2x32xf32> -> vector<2x32xf32>
    %cst_12 = arith.constant 0.00255102036 : f32
    %22 = vector.broadcast %cst_12 : f32 to vector<2x32xf32>
    %23 = arith.mulf %21, %22 : vector<2x32xf32>
    %24 = vector.extract_strided_slice %23 {offsets = [0, 0], sizes = [1, 32], strides = [1, 1]} : vector<2x32xf32> to vector<1x32xf32>
    %25 = vector.extract_strided_slice %23 {offsets = [1, 0], sizes = [1, 32], strides = [1, 1]} : vector<2x32xf32> to vector<1x32xf32>
    %26 = arith.mulf %24, %24 : vector<1x32xf32>
    %27 = arith.subf %25, %26 : vector<1x32xf32>
    %cst_13 = arith.constant 0.000000e+00 : f32
    %28 = vector.broadcast %cst_13 : f32 to vector<1x32xf32>
    %29 = arith.maximumf %27, %28 : vector<1x32xf32>
    %c0_14 = arith.constant 0 : index
    %c0_15 = arith.constant 0 : index
    %30 = vector.load %arg6[%c0_14, %c0_15] : memref<3x96xf32, #tpu.memory_space<vmem>>, vector<1x32xf32>
    %c1 = arith.constant 1 : index
    %c0_16 = arith.constant 0 : index
    %31 = vector.load %arg6[%c1, %c0_16] : memref<3x96xf32, #tpu.memory_space<vmem>>, vector<1x32xf32>
    %cst_17 = arith.constant 9.99999974E-6 : f32
    %32 = vector.broadcast %cst_17 : f32 to vector<1x32xf32>
    %33 = arith.addf %29, %32 : vector<1x32xf32>
    %34 = math.rsqrt %33 : vector<1x32xf32>
    %35 = arith.mulf %30, %34 : vector<1x32xf32>
    %36 = arith.mulf %24, %35 : vector<1x32xf32>
    %37 = arith.subf %31, %36 : vector<1x32xf32>
    %38 = tpu.concatenate %35, %37 in 0 : vector<1x32xf32>, vector<1x32xf32> -> vector<2x32xf32>
    %c0_18 = arith.constant 0 : index
    %c0_19 = arith.constant 0 : index
    %39 = vector.load %arg5[%c0_18, %c0_19] : memref<96x256xf32, #tpu.memory_space<vmem>>, vector<32x256xf32>
    %cst_20 = arith.constant dense<0.000000e+00> : vector<2x256xf32>
    %40 = tpu.matmul %38, %39, %cst_20 {dimension_numbers = #tpu.dot_dimension_numbers<[1], [0], [0], [1], [0, 0, 1, 1], [], []>} : vector<2x32xf32>, vector<32x256xf32>, vector<2x256xf32> -> vector<2x256xf32>
    %41 = vector.extract_strided_slice %40 {offsets = [0, 0], sizes = [1, 256], strides = [1, 1]} : vector<2x256xf32> to vector<1x256xf32>
    %42 = vector.broadcast %41 : vector<1x256xf32> to vector<32x256xf32>
    %43 = arith.mulf %13, %42 : vector<32x256xf32>
    %44 = vector.extract_strided_slice %40 {offsets = [1, 0], sizes = [1, 256], strides = [1, 1]} : vector<2x256xf32> to vector<1x256xf32>
    %45 = vector.broadcast %44 : vector<1x256xf32> to vector<32x256xf32>
    %46 = arith.addf %43, %45 : vector<32x256xf32>
    %cst_21 = arith.constant 0.000000e+00 : f32
    %47 = vector.broadcast %cst_21 : f32 to vector<32x256xf32>
    %48 = arith.maximumf %46, %47 : vector<32x256xf32>
    %49 = arith.truncf %48 : vector<32x256xf32> to vector<32x256xbf16>
    %c160 = arith.constant 160 : index
    %c0_22 = arith.constant 0 : index
    %50 = vector.load %arg2[%c160, %c0_22] : memref<280x64xbf16, #tpu.memory_space<vmem>>, vector<80x32xbf16>
    %cst_23 = arith.constant dense<0.000000e+00> : vector<80x256xf32>
    %51 = tpu.matmul %50, %49, %cst_23 {dimension_numbers = #tpu.dot_dimension_numbers<[1], [0], [0], [1], [0, 0, 1, 1], [], []>} : vector<80x32xbf16>, vector<32x256xbf16>, vector<80x256xf32> -> vector<80x256xf32>
    %52 = vector.extract_strided_slice %51 {offsets = [0, 0], sizes = [16, 256], strides = [1, 1]} : vector<80x256xf32> to vector<16x256xf32>
    %53 = vector.extract_strided_slice %51 {offsets = [16, 0], sizes = [16, 256], strides = [1, 1]} : vector<80x256xf32> to vector<16x256xf32>
    %54 = vector.extract_strided_slice %51 {offsets = [32, 0], sizes = [16, 256], strides = [1, 1]} : vector<80x256xf32> to vector<16x256xf32>
    %55 = vector.extract_strided_slice %51 {offsets = [48, 0], sizes = [16, 256], strides = [1, 1]} : vector<80x256xf32> to vector<16x256xf32>
    %56 = vector.extract_strided_slice %51 {offsets = [64, 0], sizes = [16, 256], strides = [1, 1]} : vector<80x256xf32> to vector<16x256xf32>
    %57 = tpu.concatenate %52, %53, %54, %55, %56 in 1 : vector<16x256xf32>, vector<16x256xf32>, vector<16x256xf32>, vector<16x256xf32>, vector<16x256xf32> -> vector<16x1280xf32>
    %58 = arith.truncf %57 : vector<16x1280xf32> to vector<16x1280xbf16>
    %c640 = arith.constant 640 : index
    %c0_24 = arith.constant 0 : index
    %59 = vector.load %arg3[%c640, %c0_24] : memref<3232x256xbf16, #tpu.memory_space<vmem>>, vector<1280x256xbf16>
    %cst_25 = arith.constant dense<0.000000e+00> : vector<16x256xf32>
    %60 = tpu.matmul %58, %59, %cst_25 {dimension_numbers = #tpu.dot_dimension_numbers<[1], [0], [0], [1], [0, 0, 1, 1], [], []>} : vector<16x1280xbf16>, vector<1280x256xbf16>, vector<16x256xf32> -> vector<16x256xf32>
    %cst_26 = arith.constant dense<0.000000e+00> : vector<256xf32>
    %61 = vector.multi_reduction <add>, %60, %cst_26 [0] : vector<16x256xf32> to vector<256xf32>
    %62 = vector.shape_cast %61 : vector<256xf32> to vector<1x256xf32>
    %63 = arith.mulf %60, %60 : vector<16x256xf32>
    %cst_27 = arith.constant dense<0.000000e+00> : vector<256xf32>
    %64 = vector.multi_reduction <add>, %63, %cst_27 [0] : vector<16x256xf32> to vector<256xf32>
    %65 = vector.shape_cast %64 : vector<256xf32> to vector<1x256xf32>
    %66 = tpu.concatenate %62, %65 in 0 : vector<1x256xf32>, vector<1x256xf32> -> vector<2x256xf32>
    %c256 = arith.constant 256 : index
    %c0_28 = arith.constant 0 : index
    %67 = vector.load %arg4[%c256, %c0_28] : memref<544x32xf32, #tpu.memory_space<vmem>>, vector<256x32xf32>
    %cst_29 = arith.constant dense<0.000000e+00> : vector<2x32xf32>
    %68 = tpu.matmul %66, %67, %cst_29 {dimension_numbers = #tpu.dot_dimension_numbers<[1], [0], [0], [1], [0, 0, 1, 1], [], []>} : vector<2x256xf32>, vector<256x32xf32>, vector<2x32xf32> -> vector<2x32xf32>
    %cst_30 = arith.constant 2.000000e-02 : f32
    %69 = vector.broadcast %cst_30 : f32 to vector<2x32xf32>
    %70 = arith.mulf %68, %69 : vector<2x32xf32>
    %71 = vector.extract_strided_slice %70 {offsets = [0, 0], sizes = [1, 32], strides = [1, 1]} : vector<2x32xf32> to vector<1x32xf32>
    %72 = vector.extract_strided_slice %70 {offsets = [1, 0], sizes = [1, 32], strides = [1, 1]} : vector<2x32xf32> to vector<1x32xf32>
    %73 = arith.mulf %71, %71 : vector<1x32xf32>
    %74 = arith.subf %72, %73 : vector<1x32xf32>
    %cst_31 = arith.constant 0.000000e+00 : f32
    %75 = vector.broadcast %cst_31 : f32 to vector<1x32xf32>
    %76 = arith.maximumf %74, %75 : vector<1x32xf32>
    %c0_32 = arith.constant 0 : index
    %c32 = arith.constant 32 : index
    %77 = vector.load %arg6[%c0_32, %c32] : memref<3x96xf32, #tpu.memory_space<vmem>>, vector<1x32xf32>
    %c1_33 = arith.constant 1 : index
    %c32_34 = arith.constant 32 : index
    %78 = vector.load %arg6[%c1_33, %c32_34] : memref<3x96xf32, #tpu.memory_space<vmem>>, vector<1x32xf32>
    %cst_35 = arith.constant 9.99999974E-6 : f32
    %79 = vector.broadcast %cst_35 : f32 to vector<1x32xf32>
    %80 = arith.addf %76, %79 : vector<1x32xf32>
    %81 = math.rsqrt %80 : vector<1x32xf32>
    %82 = arith.mulf %77, %81 : vector<1x32xf32>
    %83 = arith.mulf %71, %82 : vector<1x32xf32>
    %84 = arith.subf %78, %83 : vector<1x32xf32>
    %85 = tpu.concatenate %82, %84 in 0 : vector<1x32xf32>, vector<1x32xf32> -> vector<2x32xf32>
    %c32_36 = arith.constant 32 : index
    %c0_37 = arith.constant 0 : index
    %86 = vector.load %arg5[%c32_36, %c0_37] : memref<96x256xf32, #tpu.memory_space<vmem>>, vector<32x256xf32>
    %cst_38 = arith.constant dense<0.000000e+00> : vector<2x256xf32>
    %87 = tpu.matmul %85, %86, %cst_38 {dimension_numbers = #tpu.dot_dimension_numbers<[1], [0], [0], [1], [0, 0, 1, 1], [], []>} : vector<2x32xf32>, vector<32x256xf32>, vector<2x256xf32> -> vector<2x256xf32>
    %88 = vector.extract_strided_slice %87 {offsets = [0, 0], sizes = [1, 256], strides = [1, 1]} : vector<2x256xf32> to vector<1x256xf32>
    %89 = vector.broadcast %88 : vector<1x256xf32> to vector<16x256xf32>
    %90 = arith.mulf %60, %89 : vector<16x256xf32>
    %91 = vector.extract_strided_slice %87 {offsets = [1, 0], sizes = [1, 256], strides = [1, 1]} : vector<2x256xf32> to vector<1x256xf32>
    %92 = vector.broadcast %91 : vector<1x256xf32> to vector<16x256xf32>
    %93 = arith.addf %90, %92 : vector<16x256xf32>
    %cst_39 = arith.constant 0.000000e+00 : f32
    %94 = vector.broadcast %cst_39 : f32 to vector<16x256xf32>
    %95 = arith.maximumf %93, %94 : vector<16x256xf32>
    %96 = arith.truncf %95 : vector<16x256xf32> to vector<16x256xbf16>
    %c240 = arith.constant 240 : index
    %c0_40 = arith.constant 0 : index
    %97 = vector.load %arg2[%c240, %c0_40] : memref<280x64xbf16, #tpu.memory_space<vmem>>, vector<40x16xbf16>
    %cst_41 = arith.constant dense<0.000000e+00> : vector<40x256xf32>
    %98 = tpu.matmul %97, %96, %cst_41 {dimension_numbers = #tpu.dot_dimension_numbers<[1], [0], [0], [1], [0, 0, 1, 1], [], []>} : vector<40x16xbf16>, vector<16x256xbf16>, vector<40x256xf32> -> vector<40x256xf32>
    %99 = vector.extract_strided_slice %98 {offsets = [0, 0], sizes = [8, 256], strides = [1, 1]} : vector<40x256xf32> to vector<8x256xf32>
    %100 = vector.extract_strided_slice %98 {offsets = [8, 0], sizes = [8, 256], strides = [1, 1]} : vector<40x256xf32> to vector<8x256xf32>
    %101 = vector.extract_strided_slice %98 {offsets = [16, 0], sizes = [8, 256], strides = [1, 1]} : vector<40x256xf32> to vector<8x256xf32>
    %102 = vector.extract_strided_slice %98 {offsets = [24, 0], sizes = [8, 256], strides = [1, 1]} : vector<40x256xf32> to vector<8x256xf32>
    %103 = vector.extract_strided_slice %98 {offsets = [32, 0], sizes = [8, 256], strides = [1, 1]} : vector<40x256xf32> to vector<8x256xf32>
    %104 = tpu.concatenate %99, %100, %101, %102, %103 in 1 : vector<8x256xf32>, vector<8x256xf32>, vector<8x256xf32>, vector<8x256xf32>, vector<8x256xf32> -> vector<8x1280xf32>
    %105 = arith.truncf %104 : vector<8x1280xf32> to vector<8x1280xbf16>
    %c1920 = arith.constant 1920 : index
    %c0_42 = arith.constant 0 : index
    %106 = vector.load %arg3[%c1920, %c0_42] : memref<3232x256xbf16, #tpu.memory_space<vmem>>, vector<1280x32xbf16>
    %cst_43 = arith.constant dense<0.000000e+00> : vector<8x32xf32>
    %107 = tpu.matmul %105, %106, %cst_43 {dimension_numbers = #tpu.dot_dimension_numbers<[1], [0], [0], [1], [0, 0, 1, 1], [], []>} : vector<8x1280xbf16>, vector<1280x32xbf16>, vector<8x32xf32> -> vector<8x32xf32>
    %cst_44 = arith.constant dense<0.000000e+00> : vector<32xf32>
    %108 = vector.multi_reduction <add>, %107, %cst_44 [0] : vector<8x32xf32> to vector<32xf32>
    %109 = vector.shape_cast %108 : vector<32xf32> to vector<1x32xf32>
    %110 = arith.mulf %107, %107 : vector<8x32xf32>
    %cst_45 = arith.constant dense<0.000000e+00> : vector<32xf32>
    %111 = vector.multi_reduction <add>, %110, %cst_45 [0] : vector<8x32xf32> to vector<32xf32>
    %112 = vector.shape_cast %111 : vector<32xf32> to vector<1x32xf32>
    %113 = tpu.concatenate %109, %112 in 0 : vector<1x32xf32>, vector<1x32xf32> -> vector<2x32xf32>
    %c512 = arith.constant 512 : index
    %c0_46 = arith.constant 0 : index
    %114 = vector.load %arg4[%c512, %c0_46] : memref<544x32xf32, #tpu.memory_space<vmem>>, vector<32x32xf32>
    %cst_47 = arith.constant dense<0.000000e+00> : vector<2x32xf32>
    %115 = tpu.matmul %113, %114, %cst_47 {dimension_numbers = #tpu.dot_dimension_numbers<[1], [0], [0], [1], [0, 0, 1, 1], [], []>} : vector<2x32xf32>, vector<32x32xf32>, vector<2x32xf32> -> vector<2x32xf32>
    %cst_48 = arith.constant 5.000000e-01 : f32
    %116 = vector.broadcast %cst_48 : f32 to vector<2x32xf32>
    %117 = arith.mulf %115, %116 : vector<2x32xf32>
    %118 = vector.extract_strided_slice %117 {offsets = [0, 0], sizes = [1, 32], strides = [1, 1]} : vector<2x32xf32> to vector<1x32xf32>
    %119 = vector.extract_strided_slice %117 {offsets = [1, 0], sizes = [1, 32], strides = [1, 1]} : vector<2x32xf32> to vector<1x32xf32>
    %120 = arith.mulf %118, %118 : vector<1x32xf32>
    %121 = arith.subf %119, %120 : vector<1x32xf32>
    %cst_49 = arith.constant 0.000000e+00 : f32
    %122 = vector.broadcast %cst_49 : f32 to vector<1x32xf32>
    %123 = arith.maximumf %121, %122 : vector<1x32xf32>
    %c0_50 = arith.constant 0 : index
    %c64 = arith.constant 64 : index
    %124 = vector.load %arg6[%c0_50, %c64] : memref<3x96xf32, #tpu.memory_space<vmem>>, vector<1x32xf32>
    %c1_51 = arith.constant 1 : index
    %c64_52 = arith.constant 64 : index
    %125 = vector.load %arg6[%c1_51, %c64_52] : memref<3x96xf32, #tpu.memory_space<vmem>>, vector<1x32xf32>
    %cst_53 = arith.constant 9.99999974E-6 : f32
    %126 = vector.broadcast %cst_53 : f32 to vector<1x32xf32>
    %127 = arith.addf %123, %126 : vector<1x32xf32>
    %128 = math.rsqrt %127 : vector<1x32xf32>
    %129 = arith.mulf %124, %128 : vector<1x32xf32>
    %130 = arith.mulf %118, %129 : vector<1x32xf32>
    %131 = arith.subf %125, %130 : vector<1x32xf32>
    %132 = tpu.concatenate %129, %131 in 0 : vector<1x32xf32>, vector<1x32xf32> -> vector<2x32xf32>
    %c64_54 = arith.constant 64 : index
    %c0_55 = arith.constant 0 : index
    %133 = vector.load %arg5[%c64_54, %c0_55] : memref<96x256xf32, #tpu.memory_space<vmem>>, vector<32x32xf32>
    %cst_56 = arith.constant dense<0.000000e+00> : vector<2x32xf32>
    %134 = tpu.matmul %132, %133, %cst_56 {dimension_numbers = #tpu.dot_dimension_numbers<[1], [0], [0], [1], [0, 0, 1, 1], [], []>} : vector<2x32xf32>, vector<32x32xf32>, vector<2x32xf32> -> vector<2x32xf32>
    %135 = vector.extract_strided_slice %134 {offsets = [0, 0], sizes = [1, 32], strides = [1, 1]} : vector<2x32xf32> to vector<1x32xf32>
    %136 = vector.broadcast %135 : vector<1x32xf32> to vector<8x32xf32>
    %137 = arith.mulf %107, %136 : vector<8x32xf32>
    %138 = vector.extract_strided_slice %134 {offsets = [1, 0], sizes = [1, 32], strides = [1, 1]} : vector<2x32xf32> to vector<1x32xf32>
    %139 = vector.broadcast %138 : vector<1x32xf32> to vector<8x32xf32>
    %140 = arith.addf %137, %139 : vector<8x32xf32>
    %cst_57 = arith.constant 0.000000e+00 : f32
    %141 = vector.broadcast %cst_57 : f32 to vector<8x32xf32>
    %142 = arith.maximumf %140, %141 : vector<8x32xf32>
    %143 = arith.truncf %142 : vector<8x32xf32> to vector<8x32xbf16>
    %144 = vector.extract_strided_slice %143 {offsets = [0, 0], sizes = [2, 32], strides = [1, 1]} : vector<8x32xbf16> to vector<2x32xbf16>
    %c3200 = arith.constant 3200 : index
    %c0_58 = arith.constant 0 : index
    %145 = vector.load %arg3[%c3200, %c0_58] : memref<3232x256xbf16, #tpu.memory_space<vmem>>, vector<32x4xbf16>
    %cst_59 = arith.constant dense<0.000000e+00> : vector<2x4xf32>
    %146 = tpu.matmul %144, %145, %cst_59 {dimension_numbers = #tpu.dot_dimension_numbers<[1], [0], [0], [1], [0, 0, 1, 1], [], []>} : vector<2x32xbf16>, vector<32x4xbf16>, vector<2x4xf32> -> vector<2x4xf32>
    %c2 = arith.constant 2 : index
    %c0_60 = arith.constant 0 : index
    %147 = vector.load %arg6[%c2, %c0_60] : memref<3x96xf32, #tpu.memory_space<vmem>>, vector<1x4xf32>
    %148 = vector.broadcast %147 : vector<1x4xf32> to vector<2x4xf32>
    %149 = arith.addf %146, %148 : vector<2x4xf32>
    %c0_61 = arith.constant 0 : index
    %c0_62 = arith.constant 0 : index
    %c0_63 = arith.constant 0 : index
    %150 = vector.load %arg7[%c0_61, %c0_62, %c0_63] : memref<1x2x4xf32, #tpu.memory_space<vmem>>, vector<1x2x4xf32>
    %151 = vector.shape_cast %150 : vector<1x2x4xf32> to vector<2x4xf32>
    %152 = vector.shape_cast %149 : vector<2x4xf32> to vector<1x2x4xf32>
    tpu.vector_store %arg7[%c0_61, %c0_62, %c0_63], %152 {strides = array<i32>} : memref<1x2x4xf32, #tpu.memory_space<vmem>>, vector<1x2x4xf32>,
    return
  }
  func.func @transform_0(%arg0: i32) -> (i32, i32, i32) {
    %c0_i32 = arith.constant 0 : i32
    %c0_i32_0 = arith.constant 0 : i32
    %c0_i32_1 = arith.constant 0 : i32
    return %arg0, %c0_i32, %c0_i32_0 : i32, i32, i32
  }
  func.func @transform_1(%arg0: i32) -> (i32, i32) {
    %c0_i32 = arith.constant 0 : i32
    %c0_i32_0 = arith.constant 0 : i32
    %c0_i32_1 = arith.constant 0 : i32
    return %c0_i32, %c0_i32_0 : i32, i32
  }
  func.func @transform_2(%arg0: i32) -> (i32, i32) {
    %c0_i32 = arith.constant 0 : i32
    %c0_i32_0 = arith.constant 0 : i32
    %c0_i32_1 = arith.constant 0 : i32
    return %c0_i32, %c0_i32_0 : i32, i32
  }
  func.func @transform_3(%arg0: i32) -> (i32, i32) {
    %c0_i32 = arith.constant 0 : i32
    %c0_i32_0 = arith.constant 0 : i32
    %c0_i32_1 = arith.constant 0 : i32
    return %c0_i32, %c0_i32_0 : i32, i32
  }
  func.func @transform_4(%arg0: i32) -> (i32, i32) {
    %c0_i32 = arith.constant 0 : i32
    %c0_i32_0 = arith.constant 0 : i32
    %c0_i32_1 = arith.constant 0 : i32
    return %c0_i32, %c0_i32_0 : i32, i32
  }
  func.func @transform_5(%arg0: i32) -> (i32, i32) {
    %c0_i32 = arith.constant 0 : i32
    %c0_i32_0 = arith.constant 0 : i32
    %c0_i32_1 = arith.constant 0 : i32
    return %c0_i32, %c0_i32_0 : i32, i32
  }
  func.func @transform_6(%arg0: i32) -> (i32, i32, i32) {
    %c0_i32 = arith.constant 0 : i32
    %c0_i32_0 = arith.constant 0 : i32
    %c0_i32_1 = arith.constant 0 : i32
    return %arg0, %c0_i32, %c0_i32_0 : i32, i32, i32
  }
}

</mosaic_0001>

<llo_original>
// kernel: _lambda_.1
$region0: #{_lambda_.1}
  #allocation0 [shape = 'u32[]', space=smem, size = 0x4, offset = 0x4, fixed_abs, tag = 'smem constant byte address 0x4 - core index']
  #allocation1 [shape = 'u32[144,128]{1,0:T(1,128)}', space=vmem, size = 0x12000, scoped, tag = 'internal scratch']
  %s0 = inlined_call_operand.vmem [shape: f32[1,64,128], index: 0, kind: input, shape index: {}]
  %s1 = inlined_call_operand.vmem [shape: bf16[280,64], index: 1, kind: input, shape index: {}]
  %s2 = inlined_call_operand.vmem [shape: bf16[3232,256], index: 2, kind: input, shape index: {}]
  %s3 = inlined_call_operand.vmem [shape: f32[544,32], index: 3, kind: input, shape index: {}]
  %s4 = inlined_call_operand.vmem [shape: f32[96,256], index: 4, kind: input, shape index: {}]
  %s5 = inlined_call_operand.vmem [shape: f32[3,96], index: 5, kind: input, shape index: {}]
  %s6 = inlined_call_operand.hbm [shape: f32[1,2,4], index: 6, kind: output, shape index: {}]
  %s7 = sld [smem:[#allocation0]]
  $region34: #{_lambda_.1} parent=0
    _
  %s9 = ssub.s32 1, %s7
  %s10 = scalar_select 0, %s9, %s7
  $region1: #{_lambda_.1} parent=0
    #allocation2 [shape = 'u8[1024]{0}', space=vmem, size = 0x400, scoped, tag = 'output window, operand 0, single buffered']
    #allocation3 [shape = 's32[1]{0}', space=sflag, size = 0x4, scoped, tag = 'scoped memory for _lambda_.1']
    %11 = vsyncpa [#allocation3], 0
    // Predicated region
    $region2: #{_lambda_.1} parent=1 // pred_check
      _
    $region3: #{_lambda_.1} parent=1 // pred_check_branch
      %13 = sbr.rel (0) target = $region5
    $region4: #{_lambda_.1} parent=1 // pred_region
      _
    $region5: #{_lambda_.1} parent=1 // pred_fallthru
      _
    // Predicated region
    $region6: #{_lambda_.1} parent=1 // pred_check
      _
    $region7: #{_lambda_.1} parent=1 // pred_check_branch
      %15 = sbr.rel (0) target = $region9
    $region8: #{_lambda_.1} parent=1 // pred_region
      _
    $region9: #{_lambda_.1} parent=1 // pred_fallthru
      _
    // Predicated region
    $region10: #{_lambda_.1} parent=1 // pred_check
      _
    $region11: #{_lambda_.1} parent=1 // pred_check_branch
      %17 = sbr.rel (0) target = $region13
    $region12: #{_lambda_.1} parent=1 // pred_region
      _
    $region13: #{_lambda_.1} parent=1 // pred_fallthru
      _
    // Predicated region
    $region14: #{_lambda_.1} parent=1 // pred_check
      _
    $region15: #{_lambda_.1} parent=1 // pred_check_branch
      %19 = sbr.rel (0) target = $region17
    $region16: #{_lambda_.1} parent=1 // pred_region
      _
    $region17: #{_lambda_.1} parent=1 // pred_fallthru
      _
    // Predicated region
    $region18: #{_lambda_.1} parent=1 // pred_check
      _
    $region19: #{_lambda_.1} parent=1 // pred_check_branch
      %21 = sbr.rel (0) target = $region21
    $region20: #{_lambda_.1} parent=1 // pred_region
      _
    $region21: #{_lambda_.1} parent=1 // pred_fallthru
      _
    // Predicated region
    $region22: #{_lambda_.1} parent=1 // pred_check
      _
    $region23: #{_lambda_.1} parent=1 // pred_check_branch
      %23 = sbr.rel (0) target = $region25
    $region24: #{_lambda_.1} parent=1 // pred_region
      _
    $region25: #{_lambda_.1} parent=1 // pred_fallthru
      _
    %v25 = vld [vmem:[%s0] sm:$0xff]
    %v26 = vld [vmem:[%s0 + $0x8] sm:$0xff]
    %v27 = vld [vmem:[%s0 + $0x10] sm:$0xff]
    %v28 = vld [vmem:[%s0 + $0x18] sm:$0xff]
    %v29 = vld [vmem:[%s0 + $0x20] sm:$0xff]
    %v30 = vld [vmem:[%s0 + $0x28] sm:$0xff]
    %v31 = vld [vmem:[%s0 + $0x30] sm:$0xff]
    %v32 = vld [vmem:[%s0 + $0x38] sm:$0xff]
    %v33 = vpack.c.bf16 %v26, %v25
    %v34 = vpack.c.bf16 %v28, %v27
    %v35 = vpack.c.bf16 %v30, %v29
    %v36 = vpack.c.bf16 %v32, %v31
    %v37 = vld [vmem:[%s1] sm:$0xf]
    %v38 = vld [vmem:[%s1 + $0x4] sm:$0xf]
    %v39 = vld [vmem:[%s1 + $0x8] sm:$0xf]
    %v40 = vld [vmem:[%s1 + $0xc] sm:$0xf]
    %v41 = vld [vmem:[%s1 + $0x10] sm:$0xf]
    %v42 = vld [vmem:[%s1 + $0x14] sm:$0xf]
    %v43 = vld [vmem:[%s1 + $0x18] sm:$0xf]
    %v44 = vld [vmem:[%s1 + $0x1c] sm:$0xf]
    %v45 = vld [vmem:[%s1 + $0x20] sm:$0xf]
    %v46 = vld [vmem:[%s1 + $0x24] sm:$0xf]
    %v47 = vld [vmem:[%s1 + $0x28] sm:$0xf]
    %v48 = vld [vmem:[%s1 + $0x2c] sm:$0xf]
    %v49 = vld [vmem:[%s1 + $0x30] sm:$0xf]
    %v50 = vld [vmem:[%s1 + $0x34] sm:$0xf]
    %v51 = vld [vmem:[%s1 + $0x38] sm:$0xf]
    %v52 = vld [vmem:[%s1 + $0x3c] sm:$0xf]
    %v53 = vld [vmem:[%s1 + $0x40] sm:$0xf]
    %v54 = vld [vmem:[%s1 + $0x44] sm:$0xf]
    %v55 = vld [vmem:[%s1 + $0x48] sm:$0xf]
    %v56 = vld [vmem:[%s1 + $0x4c] sm:$0xf]
    %v77 = vunpack.c.l.b16 %v37
    %v78 = vunpack.c.l.b16 %v38
    %v79 = vunpack.c.l.b16 %v39
    %v80 = vunpack.c.l.b16 %v40
    %v81 = vunpack.c.l.b16 %v41
    %v82 = vunpack.c.l.b16 %v42
    %v83 = vunpack.c.l.b16 %v43
    %v84 = vunpack.c.l.b16 %v44
    %v85 = vunpack.c.l.b16 %v45
    %v86 = vunpack.c.l.b16 %v46
    %v87 = vunpack.c.l.b16 %v47
    %v88 = vunpack.c.l.b16 %v48
    %v89 = vunpack.c.l.b16 %v49
    %v90 = vunpack.c.l.b16 %v50
    %v91 = vunpack.c.l.b16 %v51
    %v92 = vunpack.c.l.b16 %v52
    %v93 = vunpack.c.l.b16 %v53
    %v94 = vunpack.c.l.b16 %v54
    %v95 = vunpack.c.l.b16 %v55
    %v96 = vunpack.c.l.b16 %v56
    %v97 = vpack.c.b16 %v78, %v77
    %v98 = vpack.c.b16 %v80, %v79
    %v99 = vpack.c.b16 %v82, %v81
    %v100 = vpack.c.b16 %v84, %v83
    %v101 = vpack.c.b16 %v86, %v85
    %v102 = vpack.c.b16 %v88, %v87
    %v103 = vpack.c.b16 %v90, %v89
    %v104 = vpack.c.b16 %v92, %v91
    %v105 = vpack.c.b16 %v94, %v93
    %v106 = vpack.c.b16 %v96, %v95
    %vm107 = vcmask 523264
    %v109 = vsel %vm107, %v97, 0
    %v112 = vsel %vm107, %v98, 0
    %v115 = vsel %vm107, %v99, 0
    %v118 = vsel %vm107, %v100, 0
    %v121 = vsel %vm107, %v101, 0
    %v124 = vsel %vm107, %v102, 0
    %v127 = vsel %vm107, %v103, 0
    %v130 = vsel %vm107, %v104, 0
    %v133 = vsel %vm107, %v105, 0
    %v136 = vsel %vm107, %v106, 0
    %138 = vmatprep.subr.bf16.mxu0 0
    %139 = vmatpush1.bf16.msra.mxu0 0
    %140 = vmatprep.subr.bf16.mxu0 0
    %141 = vmatpush1.bf16.msra.mxu0 0
    %142 = vmatprep.subr.bf16.mxu0 0
    %143 = vmatpush1.bf16.msra.mxu0 0
    %144 = vmatprep.subr.bf16.mxu0 0
    %145 = vmatpush1.bf16.msra.mxu0 0
    %146 = vmatprep.subr.bf16.mxu0 0
    %147 = vmatpush1.bf16.msra.mxu0 %v36
    %148 = vmatprep.subr.bf16.mxu0 0
    %149 = vmatpush1.bf16.msra.mxu0 %v35
    %150 = vmatprep.subr.bf16.mxu0 0
    %151 = vmatpush1.bf16.msra.mxu0 %v34
    %152 = vmatprep.subr.bf16.mxu0 0
    %153 = vmatpush1.bf16.msra.mxu0 %v33
    %154 = vmatprep.subr.bf16.mxu0 0
    %155 = vmatpush2.bf16.msra.mxu0 0
    %156 = vmatprep.subr.bf16.mxu0 0
    %157 = vmatpush2.bf16.msra.mxu0 0
    %158 = vmatprep.subr.bf16.mxu0 0
    %159 = vmatpush2.bf16.msra.mxu0 0
    %160 = vmatprep.subr.bf16.mxu0 0
    %161 = vmatpush2.bf16.msra.mxu0 0
    %162 = vmatprep.subr.bf16.mxu0 0
    %163 = vmatpush2.bf16.msra.mxu0 0
    %164 = vmatprep.subr.bf16.mxu0 0
    %165 = vmatpush2.bf16.msra.mxu0 0
    %166 = vmatprep.subr.bf16.mxu0 0
    %167 = vmatpush2.bf16.msra.mxu0 0
    %168 = vmatprep.subr.bf16.mxu0 0
    %169 = vmatpush2.bf16.msra.mxu0 0
    %170 = vmatprep.mubr.bf16.mxu0 0
    %171 = vmatmul.mubr.bf16.gmra.mxu0 %v109
    %v172 = vpop.f32.mrf.mxu0
    %v173 = vadd.f32 0.0, %v172
    %v174 = vpop.f32.mrf.mxu0
    %v175 = vpop.f32.mrf.mxu0
    %v176 = vadd.f32 0.0, %v175
    %v177 = vpop.f32.mrf.mxu0
    %178 = vmatprep.mubr.bf16.mxu0 0
    %179 = vmatmul.mubr.bf16.gmra.mxu0 %v112
    %v180 = vpop.f32.mrf.mxu0
    %v181 = vadd.f32 0.0, %v180
    %v182 = vpop.f32.mrf.mxu0
    %v183 = vpop.f32.mrf.mxu0
    %v184 = vadd.f32 0.0, %v183
    %v185 = vpop.f32.mrf.mxu0
    %186 = vmatprep.mubr.bf16.mxu0 0
    %187 = vmatmul.mubr.bf16.gmra.mxu0 %v115
    %v188 = vpop.f32.mrf.mxu0
    %v189 = vadd.f32 0.0, %v188
    %v190 = vpop.f32.mrf.mxu0
    %v191 = vpop.f32.mrf.mxu0
    %v192 = vadd.f32 0.0, %v191
    %v193 = vpop.f32.mrf.mxu0
    %194 = vmatprep.mubr.bf16.mxu0 0
    %195 = vmatmul.mubr.bf16.gmra.mxu0 %v118
    %v196 = vpop.f32.mrf.mxu0
    %v197 = vadd.f32 0.0, %v196
    %v198 = vpop.f32.mrf.mxu0
    %v199 = vpop.f32.mrf.mxu0
    %v200 = vadd.f32 0.0, %v199
    %v201 = vpop.f32.mrf.mxu0
    %202 = vmatprep.mubr.bf16.mxu0 0
    %203 = vmatmul.mubr.bf16.gmra.mxu0 %v121
    %v204 = vpop.f32.mrf.mxu0
    %v205 = vadd.f32 0.0, %v204
    %v206 = vpop.f32.mrf.mxu0
    %v207 = vpop.f32.mrf.mxu0
    %v208 = vadd.f32 0.0, %v207
    %v209 = vpop.f32.mrf.mxu0
    %210 = vmatprep.mubr.bf16.mxu0 0
    %211 = vmatmul.mubr.bf16.gmra.mxu0 %v124
    %v212 = vpop.f32.mrf.mxu0
    %v213 = vadd.f32 0.0, %v212
    %v214 = vpop.f32.mrf.mxu0
    %v215 = vpop.f32.mrf.mxu0
    %v216 = vadd.f32 0.0, %v215
    %v217 = vpop.f32.mrf.mxu0
    %218 = vmatprep.mubr.bf16.mxu0 0
    %219 = vmatmul.mubr.bf16.gmra.mxu0 %v127
    %v220 = vpop.f32.mrf.mxu0
    %v221 = vadd.f32 0.0, %v220
    %v222 = vpop.f32.mrf.mxu0
    %v223 = vpop.f32.mrf.mxu0
    %v224 = vadd.f32 0.0, %v223
    %v225 = vpop.f32.mrf.mxu0
    %226 = vmatprep.mubr.bf16.mxu0 0
    %227 = vmatmul.mubr.bf16.gmra.mxu0 %v130
    %v228 = vpop.f32.mrf.mxu0
    %v229 = vadd.f32 0.0, %v228
    %v230 = vpop.f32.mrf.mxu0
    %v231 = vpop.f32.mrf.mxu0
    %v232 = vadd.f32 0.0, %v231
    %v233 = vpop.f32.mrf.mxu0
    %234 = vmatprep.mubr.bf16.mxu0 0
    %235 = vmatmul.mubr.bf16.gmra.mxu0 %v133
    %v236 = vpop.f32.mrf.mxu0
    %v237 = vadd.f32 0.0, %v236
    %v238 = vpop.f32.mrf.mxu0
    %v239 = vpop.f32.mrf.mxu0
    %v240 = vadd.f32 0.0, %v239
    %v241 = vpop.f32.mrf.mxu0
    %242 = vmatprep.mubr.bf16.mxu0 0
    %243 = vmatmul.mubr.bf16.gmra.mxu0 %v136
    %v244 = vpop.f32.mrf.mxu0
    %v245 = vadd.f32 0.0, %v244
    %v246 = vpop.f32.mrf.mxu0
    %v247 = vpop.f32.mrf.mxu0
    %v248 = vadd.f32 0.0, %v247
    %v249 = vpop.f32.mrf.mxu0
    %250 = vdwg.mxu0
    %v251 = vpack.c.bf16 %v176, %v173
    %v252 = vpack.c.bf16 %v192, %v189
    %v253 = vpack.c.bf16 %v208, %v205
    %v254 = vpack.c.bf16 %v224, %v221
    %v255 = vpack.c.bf16 %v240, %v237
    %v256 = vpack.c.bf16 %v184, %v181
    %v257 = vpack.c.bf16 %v200, %v197
    %v258 = vpack.c.bf16 %v216, %v213
    %v259 = vpack.c.bf16 %v232, %v229
    %v260 = vpack.c.bf16 %v248, %v245
    %v261 = vld [vmem:[%s2] sm:$0xff]
    %v262 = vld [vmem:[%s2 + $0x8] sm:$0xff]
    %v263 = vld [vmem:[%s2 + $0x10] sm:$0xff]
    %v264 = vld [vmem:[%s2 + $0x18] sm:$0xff]
    %v265 = vld [vmem:[%s2 + $0x20] sm:$0xff]
    %v266 = vld [vmem:[%s2 + $0x28] sm:$0xff]
    %v267 = vld [vmem:[%s2 + $0x30] sm:$0xff]
    %v268 = vld [vmem:[%s2 + $0x38] sm:$0xff]
    %v269 = vld [vmem:[%s2 + $0x40] sm:$0xff]
    %v270 = vld [vmem:[%s2 + $0x48] sm:$0xff]
    %v271 = vld [vmem:[%s2 + $0x50] sm:$0xff]
    %v272 = vld [vmem:[%s2 + $0x58] sm:$0xff]
    %v273 = vld [vmem:[%s2 + $0x60] sm:$0xff]
    %v274 = vld [vmem:[%s2 + $0x68] sm:$0xff]
    %v275 = vld [vmem:[%s2 + $0x70] sm:$0xff]
    %v276 = vld [vmem:[%s2 + $0x78] sm:$0xff]
    %v277 = vld [vmem:[%s2 + $0x80] sm:$0xff]
    %v278 = vld [vmem:[%s2 + $0x88] sm:$0xff]
    %v279 = vld [vmem:[%s2 + $0x90] sm:$0xff]
    %v280 = vld [vmem:[%s2 + $0x98] sm:$0xff]
    %v281 = vld [vmem:[%s2 + $0xa0] sm:$0xff]
    %v282 = vld [vmem:[%s2 + $0xa8] sm:$0xff]
    %v283 = vld [vmem:[%s2 + $0xb0] sm:$0xff]
    %v284 = vld [vmem:[%s2 + $0xb8] sm:$0xff]
    %v285 = vld [vmem:[%s2 + $0xc0] sm:$0xff]
    %v286 = vld [vmem:[%s2 + $0xc8] sm:$0xff]
    %v287 = vld [vmem:[%s2 + $0xd0] sm:$0xff]
    %v288 = vld [vmem:[%s2 + $0xd8] sm:$0xff]
    %v289 = vld [vmem:[%s2 + $0xe0] sm:$0xff]
    %v290 = vld [vmem:[%s2 + $0xe8] sm:$0xff]
    %v291 = vld [vmem:[%s2 + $0xf0] sm:$0xff]
    %v292 = vld [vmem:[%s2 + $0xf8] sm:$0xff]
    %v293 = vld [vmem:[%s2 + $0x100] sm:$0xff]
    %v294 = vld [vmem:[%s2 + $0x108] sm:$0xff]
    %v295 = vld [vmem:[%s2 + $0x110] sm:$0xff]
    %v296 = vld [vmem:[%s2 + $0x118] sm:$0xff]
    %v297 = vld [vmem:[%s2 + $0x120] sm:$0xff]
    %v298 = vld [vmem:[%s2 + $0x128] sm:$0xff]
    %v299 = vld [vmem:[%s2 + $0x130] sm:$0xff]
    %v300 = vld [vmem:[%s2 + $0x138] sm:$0xff]
    %v301 = vld [vmem:[%s2 + $0x140] sm:$0xff]
    %v302 = vld [vmem:[%s2 + $0x148] sm:$0xff]
    %v303 = vld [vmem:[%s2 + $0x150] sm:$0xff]
    %v304 = vld [vmem:[%s2 + $0x158] sm:$0xff]
    %v305 = vld [vmem:[%s2 + $0x160] sm:$0xff]
    %v306 = vld [vmem:[%s2 + $0x168] sm:$0xff]
    %v307 = vld [vmem:[%s2 + $0x170] sm:$0xff]
    %v308 = vld [vmem:[%s2 + $0x178] sm:$0xff]
    %v309 = vld [vmem:[%s2 + $0x180] sm:$0xff]
    %v310 = vld [vmem:[%s2 + $0x188] sm:$0xff]
    %v311 = vld [vmem:[%s2 + $0x190] sm:$0xff]
    %v312 = vld [vmem:[%s2 + $0x198] sm:$0xff]
    %v313 = vld [vmem:[%s2 + $0x1a0] sm:$0xff]
    %v314 = vld [vmem:[%s2 + $0x1a8] sm:$0xff]
    %v315 = vld [vmem:[%s2 + $0x1b0] sm:$0xff]
    %v316 = vld [vmem:[%s2 + $0x1b8] sm:$0xff]
    %v317 = vld [vmem:[%s2 + $0x1c0] sm:$0xff]
    %v318 = vld [vmem:[%s2 + $0x1c8] sm:$0xff]
    %v319 = vld [vmem:[%s2 + $0x1d0] sm:$0xff]
    %v320 = vld [vmem:[%s2 + $0x1d8] sm:$0xff]
    %v321 = vld [vmem:[%s2 + $0x1e0] sm:$0xff]
    %v322 = vld [vmem:[%s2 + $0x1e8] sm:$0xff]
    %v323 = vld [vmem:[%s2 + $0x1f0] sm:$0xff]
    %v324 = vld [vmem:[%s2 + $0x1f8] sm:$0xff]
    %v325 = vld [vmem:[%s2 + $0x200] sm:$0xff]
    %v326 = vld [vmem:[%s2 + $0x208] sm:$0xff]
    %v327 = vld [vmem:[%s2 + $0x210] sm:$0xff]
    %v328 = vld [vmem:[%s2 + $0x218] sm:$0xff]
    %v329 = vld [vmem:[%s2 + $0x220] sm:$0xff]
    %v330 = vld [vmem:[%s2 + $0x228] sm:$0xff]
    %v331 = vld [vmem:[%s2 + $0x230] sm:$0xff]
    %v332 = vld [vmem:[%s2 + $0x238] sm:$0xff]
    %v333 = vld [vmem:[%s2 + $0x240] sm:$0xff]
    %v334 = vld [vmem:[%s2 + $0x248] sm:$0xff]
    %v335 = vld [vmem:[%s2 + $0x250] sm:$0xff]
    %v336 = vld [vmem:[%s2 + $0x258] sm:$0xff]
    %v337 = vld [vmem:[%s2 + $0x260] sm:$0xff]
    %v338 = vld [vmem:[%s2 + $0x268] sm:$0xff]
    %v339 = vld [vmem:[%s2 + $0x270] sm:$0xff]
    %v340 = vld [vmem:[%s2 + $0x278] sm:$0xff]
    %v421 = vunpack.c.l.b16 %v261
    %v422 = vunpack.c.h.b16 %v261
    %v423 = vunpack.c.l.b16 %v262
    %v424 = vunpack.c.h.b16 %v262
    %v425 = vunpack.c.l.b16 %v263
    %v426 = vunpack.c.h.b16 %v263
    %v427 = vunpack.c.l.b16 %v264
    %v428 = vunpack.c.h.b16 %v264
    %v429 = vunpack.c.l.b16 %v265
    %v430 = vunpack.c.h.b16 %v265
    %v431 = vunpack.c.l.b16 %v266
    %v432 = vunpack.c.h.b16 %v266
    %v433 = vunpack.c.l.b16 %v267
    %v434 = vunpack.c.h.b16 %v267
    %v435 = vunpack.c.l.b16 %v268
    %v436 = vunpack.c.h.b16 %v268
    %v437 = vunpack.c.l.b16 %v269
    %v438 = vunpack.c.h.b16 %v269
    %v439 = vunpack.c.l.b16 %v270
    %v440 = vunpack.c.h.b16 %v270
    %v441 = vunpack.c.l.b16 %v271
    %v442 = vunpack.c.h.b16 %v271
    %v443 = vunpack.c.l.b16 %v272
    %v444 = vunpack.c.h.b16 %v272
    %v445 = vunpack.c.l.b16 %v273
    %v446 = vunpack.c.h.b16 %v273
    %v447 = vunpack.c.l.b16 %v274
    %v448 = vunpack.c.h.b16 %v274
    %v449 = vunpack.c.l.b16 %v275
    %v450 = vunpack.c.h.b16 %v275
    %v451 = vunpack.c.l.b16 %v276
    %v452 = vunpack.c.h.b16 %v276
    %v453 = vunpack.c.l.b16 %v277
    %v454 = vunpack.c.h.b16 %v277
    %v455 = vunpack.c.l.b16 %v278
    %v456 = vunpack.c.h.b16 %v278
    %v457 = vunpack.c.l.b16 %v279
    %v458 = vunpack.c.h.b16 %v279
    %v459 = vunpack.c.l.b16 %v280
    %v460 = vunpack.c.h.b16 %v280
    %v461 = vunpack.c.l.b16 %v281
    %v462 = vunpack.c.h.b16 %v281
    %v463 = vunpack.c.l.b16 %v282
    %v464 = vunpack.c.h.b16 %v282
    %v465 = vunpack.c.l.b16 %v283
    %v466 = vunpack.c.h.b16 %v283
    %v467 = vunpack.c.l.b16 %v284
    %v468 = vunpack.c.h.b16 %v284
    %v469 = vunpack.c.l.b16 %v285
    %v470 = vunpack.c.h.b16 %v285
    %v471 = vunpack.c.l.b16 %v286
    %v472 = vunpack.c.h.b16 %v286
    %v473 = vunpack.c.l.b16 %v287
    %v474 = vunpack.c.h.b16 %v287
    %v475 = vunpack.c.l.b16 %v288
    %v476 = vunpack.c.h.b16 %v288
    %v477 = vunpack.c.l.b16 %v289
    %v478 = vunpack.c.h.b16 %v289
    %v479 = vunpack.c.l.b16 %v290
    %v480 = vunpack.c.h.b16 %v290
    %v481 = vunpack.c.l.b16 %v291
    %v482 = vunpack.c.h.b16 %v291
    %v483 = vunpack.c.l.b16 %v292
    %v484 = vunpack.c.h.b16 %v292
    %v485 = vunpack.c.l.b16 %v293
    %v486 = vunpack.c.h.b16 %v293
    %v487 = vunpack.c.l.b16 %v294
    %v488 = vunpack.c.h.b16 %v294
    %v489 = vunpack.c.l.b16 %v295
    %v490 = vunpack.c.h.b16 %v295
    %v491 = vunpack.c.l.b16 %v296
    %v492 = vunpack.c.h.b16 %v296
    %v493 = vunpack.c.l.b16 %v297
    %v494 = vunpack.c.h.b16 %v297
    %v495 = vunpack.c.l.b16 %v298
    %v496 = vunpack.c.h.b16 %v298
    %v497 = vunpack.c.l.b16 %v299
    %v498 = vunpack.c.h.b16 %v299
    %v499 = vunpack.c.l.b16 %v300
    %v500 = vunpack.c.h.b16 %v300
    %v501 = vunpack.c.l.b16 %v301
    %v502 = vunpack.c.h.b16 %v301
    %v503 = vunpack.c.l.b16 %v302
    %v504 = vunpack.c.h.b16 %v302
    %v505 = vunpack.c.l.b16 %v303
    %v506 = vunpack.c.h.b16 %v303
    %v507 = vunpack.c.l.b16 %v304
    %v508 = vunpack.c.h.b16 %v304
    %v509 = vunpack.c.l.b16 %v305
    %v510 = vunpack.c.h.b16 %v305
    %v511 = vunpack.c.l.b16 %v306
    %v512 = vunpack.c.h.b16 %v306
    %v513 = vunpack.c.l.b16 %v307
    %v514 = vunpack.c.h.b16 %v307
    %v515 = vunpack.c.l.b16 %v308
    %v516 = vunpack.c.h.b16 %v308
    %v517 = vunpack.c.l.b16 %v309
    %v518 = vunpack.c.h.b16 %v309
    %v519 = vunpack.c.l.b16 %v310
    %v520 = vunpack.c.h.b16 %v310
    %v521 = vunpack.c.l.b16 %v311
    %v522 = vunpack.c.h.b16 %v311
    %v523 = vunpack.c.l.b16 %v312
    %v524 = vunpack.c.h.b16 %v312
    %v525 = vunpack.c.l.b16 %v313
    %v526 = vunpack.c.h.b16 %v313
    %v527 = vunpack.c.l.b16 %v314
    %v528 = vunpack.c.h.b16 %v314
    %v529 = vunpack.c.l.b16 %v315
    %v530 = vunpack.c.h.b16 %v315
    %v531 = vunpack.c.l.b16 %v316
    %v532 = vunpack.c.h.b16 %v316
    %v533 = vunpack.c.l.b16 %v317
    %v534 = vunpack.c.h.b16 %v317
    %v535 = vunpack.c.l.b16 %v318
    %v536 = vunpack.c.h.b16 %v318
    %v537 = vunpack.c.l.b16 %v319
    %v538 = vunpack.c.h.b16 %v319
    %v539 = vunpack.c.l.b16 %v320
    %v540 = vunpack.c.h.b16 %v320
    %v541 = vunpack.c.l.b16 %v321
    %v542 = vunpack.c.h.b16 %v321
    %v543 = vunpack.c.l.b16 %v322
    %v544 = vunpack.c.h.b16 %v322
    %v545 = vunpack.c.l.b16 %v323
    %v546 = vunpack.c.h.b16 %v323
    %v547 = vunpack.c.l.b16 %v324
    %v548 = vunpack.c.h.b16 %v324
    %v549 = vunpack.c.l.b16 %v325
    %v550 = vunpack.c.h.b16 %v325
    %v551 = vunpack.c.l.b16 %v326
    %v552 = vunpack.c.h.b16 %v326
    %v553 = vunpack.c.l.b16 %v327
    %v554 = vunpack.c.h.b16 %v327
    %v555 = vunpack.c.l.b16 %v328
    %v556 = vunpack.c.h.b16 %v328
    %v557 = vunpack.c.l.b16 %v329
    %v558 = vunpack.c.h.b16 %v329
    %v559 = vunpack.c.l.b16 %v330
    %v560 = vunpack.c.h.b16 %v330
    %v561 = vunpack.c.l.b16 %v331
    %v562 = vunpack.c.h.b16 %v331
    %v563 = vunpack.c.l.b16 %v332
    %v564 = vunpack.c.h.b16 %v332
    %v565 = vunpack.c.l.b16 %v333
    %v566 = vunpack.c.h.b16 %v333
    %v567 = vunpack.c.l.b16 %v334
    %v568 = vunpack.c.h.b16 %v334
    %v569 = vunpack.c.l.b16 %v335
    %v570 = vunpack.c.h.b16 %v335
    %v571 = vunpack.c.l.b16 %v336
    %v572 = vunpack.c.h.b16 %v336
    %v573 = vunpack.c.l.b16 %v337
    %v574 = vunpack.c.h.b16 %v337
    %v575 = vunpack.c.l.b16 %v338
    %v576 = vunpack.c.h.b16 %v338
    %v577 = vunpack.c.l.b16 %v339
    %v578 = vunpack.c.h.b16 %v339
    %v579 = vunpack.c.l.b16 %v340
    %v580 = vunpack.c.h.b16 %v340
    %v581 = vpack.c.b16 %v423, %v421
    %v582 = vpack.c.b16 %v424, %v422
    %v583 = vpack.c.b16 %v427, %v425
    %v584 = vpack.c.b16 %v428, %v426
    %v585 = vpack.c.b16 %v431, %v429
    %v586 = vpack.c.b16 %v432, %v430
    %v587 = vpack.c.b16 %v435, %v433
    %v588 = vpack.c.b16 %v436, %v434
    %v589 = vpack.c.b16 %v439, %v437
    %v590 = vpack.c.b16 %v440, %v438
    %v591 = vpack.c.b16 %v443, %v441
    %v592 = vpack.c.b16 %v444, %v442
    %v593 = vpack.c.b16 %v447, %v445
    %v594 = vpack.c.b16 %v448, %v446
    %v595 = vpack.c.b16 %v451, %v449
    %v596 = vpack.c.b16 %v452, %v450
    %v597 = vpack.c.b16 %v455, %v453
    %v598 = vpack.c.b16 %v456, %v454
    %v599 = vpack.c.b16 %v459, %v457
    %v600 = vpack.c.b16 %v460, %v458
    %v601 = vpack.c.b16 %v463, %v461
    %v602 = vpack.c.b16 %v464, %v462
    %v603 = vpack.c.b16 %v467, %v465
    %v604 = vpack.c.b16 %v468, %v466
    %v605 = vpack.c.b16 %v471, %v469
    %v606 = vpack.c.b16 %v472, %v470
    %v607 = vpack.c.b16 %v475, %v473
    %v608 = vpack.c.b16 %v476, %v474
    %v609 = vpack.c.b16 %v479, %v477
    %v610 = vpack.c.b16 %v480, %v478
    %v611 = vpack.c.b16 %v483, %v481
    %v612 = vpack.c.b16 %v484, %v482
    %v613 = vpack.c.b16 %v487, %v485
    %v614 = vpack.c.b16 %v488, %v486
    %v615 = vpack.c.b16 %v491, %v489
    %v616 = vpack.c.b16 %v492, %v490
    %v617 = vpack.c.b16 %v495, %v493
    %v618 = vpack.c.b16 %v496, %v494
    %v619 = vpack.c.b16 %v499, %v497
    %v620 = vpack.c.b16 %v500, %v498
    %v621 = vpack.c.b16 %v503, %v501
    %v622 = vpack.c.b16 %v504, %v502
    %v623 = vpack.c.b16 %v507, %v505
    %v624 = vpack.c.b16 %v508, %v506
    %v625 = vpack.c.b16 %v511, %v509
    %v626 = vpack.c.b16 %v512, %v510
    %v627 = vpack.c.b16 %v515, %v513
    %v628 = vpack.c.b16 %v516, %v514
    %v629 = vpack.c.b16 %v519, %v517
    %v630 = vpack.c.b16 %v520, %v518
    %v631 = vpack.c.b16 %v523, %v521
    %v632 = vpack.c.b16 %v524, %v522
    %v633 = vpack.c.b16 %v527, %v525
    %v634 = vpack.c.b16 %v528, %v526
    %v635 = vpack.c.b16 %v531, %v529
    %v636 = vpack.c.b16 %v532, %v530
    %v637 = vpack.c.b16 %v535, %v533
    %v638 = vpack.c.b16 %v536, %v534
    %v639 = vpack.c.b16 %v539, %v537
    %v640 = vpack.c.b16 %v540, %v538
    %v641 = vpack.c.b16 %v543, %v541
    %v642 = vpack.c.b16 %v544, %v542
    %v643 = vpack.c.b16 %v547, %v545
    %v644 = vpack.c.b16 %v548, %v546
    %v645 = vpack.c.b16 %v551, %v549
    %v646 = vpack.c.b16 %v552, %v550
    %v647 = vpack.c.b16 %v555, %v553
    %v648 = vpack.c.b16 %v556, %v554
    %v649 = vpack.c.b16 %v559, %v557
    %v650 = vpack.c.b16 %v560, %v558
    %v651 = vpack.c.b16 %v563, %v561
    %v652 = vpack.c.b16 %v564, %v562
    %v653 = vpack.c.b16 %v567, %v565
    %v654 = vpack.c.b16 %v568, %v566
    %v655 = vpack.c.b16 %v571, %v569
    %v656 = vpack.c.b16 %v572, %v570
    %v657 = vpack.c.b16 %v575, %v573
    %v658 = vpack.c.b16 %v576, %v574
    %v659 = vpack.c.b16 %v579, %v577
    %v660 = vpack.c.b16 %v580, %v578
    %741 = vmatprep.subr.bf16.mxu0 %v596
    %742 = vmatpush1.bf16.msra.mxu0 %v595
    %743 = vmatprep.subr.bf16.mxu0 %v594
    %744 = vmatpush1.bf16.msra.mxu0 %v593
    %745 = vmatprep.subr.bf16.mxu0 %v592
    %746 = vmatpush1.bf16.msra.mxu0 %v591
    %747 = vmatprep.subr.bf16.mxu0 %v590
    %748 = vmatpush1.bf16.msra.mxu0 %v589
    %749 = vmatprep.subr.bf16.mxu0 %v588
    %750 = vmatpush1.bf16.msra.mxu0 %v587
    %751 = vmatprep.subr.bf16.mxu0 %v586
    %752 = vmatpush1.bf16.msra.mxu0 %v585
    %753 = vmatprep.subr.bf16.mxu0 %v584
    %754 = vmatpush1.bf16.msra.mxu0 %v583
    %755 = vmatprep.subr.bf16.mxu0 %v582
    %756 = vmatpush1.bf16.msra.mxu0 %v581
    %757 = vmatprep.subr.bf16.mxu0 %v612
    %758 = vmatpush2.bf16.msra.mxu0 %v611
    %759 = vmatprep.subr.bf16.mxu0 %v610
    %760 = vmatpush2.bf16.msra.mxu0 %v609
    %761 = vmatprep.subr.bf16.mxu0 %v608
    %762 = vmatpush2.bf16.msra.mxu0 %v607
    %763 = vmatprep.subr.bf16.mxu0 %v606
    %764 = vmatpush2.bf16.msra.mxu0 %v605
    %765 = vmatprep.subr.bf16.mxu0 %v604
    %766 = vmatpush2.bf16.msra.mxu0 %v603
    %767 = vmatprep.subr.bf16.mxu0 %v602
    %768 = vmatpush2.bf16.msra.mxu0 %v601
    %769 = vmatprep.subr.bf16.mxu0 %v600
    %770 = vmatpush2.bf16.msra.mxu0 %v599
    %771 = vmatprep.subr.bf16.mxu0 %v598
    %772 = vmatpush2.bf16.msra.mxu0 %v597
    %773 = vmatprep.mubr.bf16.mxu0 %v252
    %774 = vmatmul.mubr.bf16.gmra.mxu0 %v251
    %v775 = vpop.f32.mrf.mxu0
    %v776 = vadd.f32 0.0, %v775
    %v777 = vpop.f32.mrf.mxu0
    %v778 = vadd.f32 0.0, %v777
    %v779 = vpop.f32.mrf.mxu0
    %v780 = vadd.f32 0.0, %v779
    %v781 = vpop.f32.mrf.mxu0
    %v782 = vadd.f32 0.0, %v781
    %783 = vmatprep.mubr.bf16.mxu0 %v257
    %784 = vmatmul.mubr.bf16.gmra.mxu0 %v256
    %v785 = vpop.f32.mrf.mxu0
    %v786 = vadd.f32 0.0, %v785
    %v787 = vpop.f32.mrf.mxu0
    %v788 = vadd.f32 0.0, %v787
    %v789 = vpop.f32.mrf.mxu0
    %v790 = vadd.f32 0.0, %v789
    %v791 = vpop.f32.mrf.mxu0
    %v792 = vadd.f32 0.0, %v791
    %793 = vdwg.mxu0
    %794 = vmatprep.subr.bf16.mxu0 %v628
    %795 = vmatpush1.bf16.msra.mxu0 %v627
    %796 = vmatprep.subr.bf16.mxu0 %v626
    %797 = vmatpush1.bf16.msra.mxu0 %v625
    %798 = vmatprep.subr.bf16.mxu0 %v624
    %799 = vmatpush1.bf16.msra.mxu0 %v623
    %800 = vmatprep.subr.bf16.mxu0 %v622
    %801 = vmatpush1.bf16.msra.mxu0 %v621
    %802 = vmatprep.subr.bf16.mxu0 %v620
    %803 = vmatpush1.bf16.msra.mxu0 %v619
    %804 = vmatprep.subr.bf16.mxu0 %v618
    %805 = vmatpush1.bf16.msra.mxu0 %v617
    %806 = vmatprep.subr.bf16.mxu0 %v616
    %807 = vmatpush1.bf16.msra.mxu0 %v615
    %808 = vmatprep.subr.bf16.mxu0 %v614
    %809 = vmatpush1.bf16.msra.mxu0 %v613
    %810 = vmatprep.subr.bf16.mxu0 %v644
    %811 = vmatpush2.bf16.msra.mxu0 %v643
    %812 = vmatprep.subr.bf16.mxu0 %v642
    %813 = vmatpush2.bf16.msra.mxu0 %v641
    %814 = vmatprep.subr.bf16.mxu0 %v640
    %815 = vmatpush2.bf16.msra.mxu0 %v639
    %816 = vmatprep.subr.bf16.mxu0 %v638
    %817 = vmatpush2.bf16.msra.mxu0 %v637
    %818 = vmatprep.subr.bf16.mxu0 %v636
    %819 = vmatpush2.bf16.msra.mxu0 %v635
    %820 = vmatprep.subr.bf16.mxu0 %v634
    %821 = vmatpush2.bf16.msra.mxu0 %v633
    %822 = vmatprep.subr.bf16.mxu0 %v632
    %823 = vmatpush2.bf16.msra.mxu0 %v631
    %824 = vmatprep.subr.bf16.mxu0 %v630
    %825 = vmatpush2.bf16.msra.mxu0 %v629
    %826 = vmatprep.mubr.bf16.mxu0 %v254
    %827 = vmatmul.mubr.bf16.gmra.mxu0 %v253
    %v828 = vpop.f32.mrf.mxu0
    %v829 = vadd.f32 %v776, %v828
    %v830 = vpop.f32.mrf.mxu0
    %v831 = vadd.f32 %v778, %v830
    %v832 = vpop.f32.mrf.mxu0
    %v833 = vadd.f32 %v780, %v832
    %v834 = vpop.f32.mrf.mxu0
    %v835 = vadd.f32 %v782, %v834
    %836 = vmatprep.mubr.bf16.mxu0 %v259
    %837 = vmatmul.mubr.bf16.gmra.mxu0 %v258
    %v838 = vpop.f32.mrf.mxu0
    %v839 = vadd.f32 %v786, %v838
    %v840 = vpop.f32.mrf.mxu0
    %v841 = vadd.f32 %v788, %v840
    %v842 = vpop.f32.mrf.mxu0
    %v843 = vadd.f32 %v790, %v842
    %v844 = vpop.f32.mrf.mxu0
    %v845 = vadd.f32 %v792, %v844
    %846 = vdwg.mxu0
    %847 = vmatprep.subr.bf16.mxu0 %v660
    %848 = vmatpush1.bf16.msra.mxu0 %v659
    %849 = vmatprep.subr.bf16.mxu0 %v658
    %850 = vmatpush1.bf16.msra.mxu0 %v657
    %851 = vmatprep.subr.bf16.mxu0 %v656
    %852 = vmatpush1.bf16.msra.mxu0 %v655
    %853 = vmatprep.subr.bf16.mxu0 %v654
    %854 = vmatpush1.bf16.msra.mxu0 %v653
    %855 = vmatprep.subr.bf16.mxu0 %v652
    %856 = vmatpush1.bf16.msra.mxu0 %v651
    %857 = vmatprep.subr.bf16.mxu0 %v650
    %858 = vmatpush1.bf16.msra.mxu0 %v649
    %859 = vmatprep.subr.bf16.mxu0 %v648
    %860 = vmatpush1.bf16.msra.mxu0 %v647
    %861 = vmatprep.subr.bf16.mxu0 %v646
    %862 = vmatpush1.bf16.msra.mxu0 %v645
    %863 = vmatprep.subr.bf16.mxu0 0
    %864 = vmatpush2.bf16.msra.mxu0 0
    %865 = vmatprep.subr.bf16.mxu0 0
    %866 = vmatpush2.bf16.msra.mxu0 0
    %867 = vmatprep.subr.bf16.mxu0 0
    %868 = vmatpush2.bf16.msra.mxu0 0
    %869 = vmatprep.subr.bf16.mxu0 0
    %870 = vmatpush2.bf16.msra.mxu0 0
    %871 = vmatprep.subr.bf16.mxu0 0
    %872 = vmatpush2.bf16.msra.mxu0 0
    %873 = vmatprep.subr.bf16.mxu0 0
    %874 = vmatpush2.bf16.msra.mxu0 0
    %875 = vmatprep.subr.bf16.mxu0 0
    %876 = vmatpush2.bf16.msra.mxu0 0
    %877 = vmatprep.subr.bf16.mxu0 0
    %878 = vmatpush2.bf16.msra.mxu0 0
    %879 = vmatprep.mubr.bf16.mxu0 0
    %880 = vmatmul.mubr.bf16.gmra.mxu0 %v255
    %v881 = vpop.f32.mrf.mxu0
    %v882 = vadd.f32 %v829, %v881
    %v883 = vpop.f32.mrf.mxu0
    %v884 = vadd.f32 %v831, %v883
    %v885 = vpop.f32.mrf.mxu0
    %v886 = vadd.f32 %v833, %v885
    %v887 = vpop.f32.mrf.mxu0
    %v888 = vadd.f32 %v835, %v887
    %889 = vmatprep.mubr.bf16.mxu0 0
    %890 = vmatmul.mubr.bf16.gmra.mxu0 %v260
    %v891 = vpop.f32.mrf.mxu0
    %v892 = vadd.f32 %v839, %v891
    %v893 = vpop.f32.mrf.mxu0
    %v894 = vadd.f32 %v841, %v893
    %v895 = vpop.f32.mrf.mxu0
    %v896 = vadd.f32 %v843, %v895
    %v897 = vpop.f32.mrf.mxu0
    %v898 = vadd.f32 %v845, %v897
    %899 = vdwg.mxu0
    %v900 = vadd.f32 %v882, %v886
    %v901 = vadd.f32 %v900, %v892
    %v902 = vadd.f32 %v901, %v896
    %v903 = vrot.slane %v902, 4
    %v904 = vadd.f32 %v902, %v903
    %v905 = vrot.slane %v904, 2
    %v906 = vadd.f32 %v904, %v905
    %v907 = vrot.slane %v906, 1
    %v908 = vadd.f32 %v906, %v907
    %v909 = vadd.f32 %v884, %v888
    %v910 = vadd.f32 %v909, %v894
    %v911 = vadd.f32 %v910, %v898
    %v912 = vrot.slane %v911, 4
    %v913 = vadd.f32 %v911, %v912
    %v914 = vrot.slane %v913, 2
    %v915 = vadd.f32 %v913, %v914
    %v916 = vrot.slane %v915, 1
    %v917 = vadd.f32 %v915, %v916
    %v918 = vmul.f32 %v882, %v882
    %v919 = vmul.f32 %v884, %v884
    %v920 = vmul.f32 %v886, %v886
    %v921 = vmul.f32 %v888, %v888
    %v922 = vmul.f32 %v892, %v892
    %v923 = vmul.f32 %v894, %v894
    %v924 = vmul.f32 %v896, %v896
    %v925 = vmul.f32 %v898, %v898
    %v926 = vadd.f32 %v918, %v920
    %v927 = vadd.f32 %v926, %v922
    %v928 = vadd.f32 %v927, %v924
    %v929 = vrot.slane %v928, 4
    %v930 = vadd.f32 %v928, %v929
    %v931 = vrot.slane %v930, 2
    %v932 = vadd.f32 %v930, %v931
    %v933 = vrot.slane %v932, 1
    %v934 = vadd.f32 %v932, %v933
    %v935 = vadd.f32 %v919, %v921
    %v936 = vadd.f32 %v935, %v923
    %v937 = vadd.f32 %v936, %v925
    %v938 = vrot.slane %v937, 4
    %v939 = vadd.f32 %v937, %v938
    %v940 = vrot.slane %v939, 2
    %v941 = vadd.f32 %v939, %v940
    %v942 = vrot.slane %v941, 1
    %v943 = vadd.f32 %v941, %v942
    %vm944 = vcmask 1040384
    %v945 = vsel %vm944, %v908, %v934
    %v946 = vsel %vm944, %v917, %v943
    %v947 = vld [vmem:[%s3] sm:$0xff]
    %v948 = vld [vmem:[%s3 + $0x8] sm:$0xff]
    %v949 = vld [vmem:[%s3 + $0x10] sm:$0xff]
    %v950 = vld [vmem:[%s3 + $0x18] sm:$0xff]
    %v951 = vld [vmem:[%s3 + $0x20] sm:$0xff]
    %v952 = vld [vmem:[%s3 + $0x28] sm:$0xff]
    %v953 = vld [vmem:[%s3 + $0x30] sm:$0xff]
    %v954 = vld [vmem:[%s3 + $0x38] sm:$0xff]
    %v955 = vld [vmem:[%s3 + $0x40] sm:$0xff]
    %v956 = vld [vmem:[%s3 + $0x48] sm:$0xff]
    %v957 = vld [vmem:[%s3 + $0x50] sm:$0xff]
    %v958 = vld [vmem:[%s3 + $0x58] sm:$0xff]
    %v959 = vld [vmem:[%s3 + $0x60] sm:$0xff]
    %v960 = vld [vmem:[%s3 + $0x68] sm:$0xff]
    %v961 = vld [vmem:[%s3 + $0x70] sm:$0xff]
    %v962 = vld [vmem:[%s3 + $0x78] sm:$0xff]
    %v963 = vld [vmem:[%s3 + $0x80] sm:$0xff]
    %v964 = vld [vmem:[%s3 + $0x88] sm:$0xff]
    %v965 = vld [vmem:[%s3 + $0x90] sm:$0xff]
    %v966 = vld [vmem:[%s3 + $0x98] sm:$0xff]
    %v967 = vld [vmem:[%s3 + $0xa0] sm:$0xff]
    %v968 = vld [vmem:[%s3 + $0xa8] sm:$0xff]
    %v969 = vld [vmem:[%s3 + $0xb0] sm:$0xff]
    %v970 = vld [vmem:[%s3 + $0xb8] sm:$0xff]
    %v971 = vld [vmem:[%s3 + $0xc0] sm:$0xff]
    %v972 = vld [vmem:[%s3 + $0xc8] sm:$0xff]
    %v973 = vld [vmem:[%s3 + $0xd0] sm:$0xff]
    %v974 = vld [vmem:[%s3 + $0xd8] sm:$0xff]
    %v975 = vld [vmem:[%s3 + $0xe0] sm:$0xff]
    %v976 = vld [vmem:[%s3 + $0xe8] sm:$0xff]
    %v977 = vld [vmem:[%s3 + $0xf0] sm:$0xff]
    %v978 = vld [vmem:[%s3 + $0xf8] sm:$0xff]
    %979 = vmatprep.subr.mxu0 0.0
    %980 = vmatpush1.msra.mxu0 %v962
    %981 = vmatprep.subr.mxu0 0.0
    %982 = vmatpush1.msra.mxu0 %v961
    %983 = vmatprep.subr.mxu0 0.0
    %984 = vmatpush1.msra.mxu0 %v960
    %985 = vmatprep.subr.mxu0 0.0
    %986 = vmatpush1.msra.mxu0 %v959
    %987 = vmatprep.subr.mxu0 0.0
    %988 = vmatpush1.msra.mxu0 %v958
    %989 = vmatprep.subr.mxu0 0.0
    %990 = vmatpush1.msra.mxu0 %v957
    %991 = vmatprep.subr.mxu0 0.0
    %992 = vmatpush1.msra.mxu0 %v956
    %993 = vmatprep.subr.mxu0 0.0
    %994 = vmatpush1.msra.mxu0 %v955
    %995 = vmatprep.subr.mxu0 0.0
    %996 = vmatpush1.msra.mxu0 %v954
    %997 = vmatprep.subr.mxu0 0.0
    %998 = vmatpush1.msra.mxu0 %v953
    %999 = vmatprep.subr.mxu0 0.0
    %1000 = vmatpush1.msra.mxu0 %v952
    %1001 = vmatprep.subr.mxu0 0.0
    %1002 = vmatpush1.msra.mxu0 %v951
    %1003 = vmatprep.subr.mxu0 0.0
    %1004 = vmatpush1.msra.mxu0 %v950
    %1005 = vmatprep.subr.mxu0 0.0
    %1006 = vmatpush1.msra.mxu0 %v949
    %1007 = vmatprep.subr.mxu0 0.0
    %1008 = vmatpush1.msra.mxu0 %v948
    %1009 = vmatprep.subr.mxu0 0.0
    %1010 = vmatpush1.msra.mxu0 %v947
    %1011 = vmatprep.subr.mxu0 0.0
    %1012 = vmatpush2.msra.mxu0 %v978
    %1013 = vmatprep.subr.mxu0 0.0
    %1014 = vmatpush2.msra.mxu0 %v977
    %1015 = vmatprep.subr.mxu0 0.0
    %1016 = vmatpush2.msra.mxu0 %v976
    %1017 = vmatprep.subr.mxu0 0.0
    %1018 = vmatpush2.msra.mxu0 %v975
    %1019 = vmatprep.subr.mxu0 0.0
    %1020 = vmatpush2.msra.mxu0 %v974
    %1021 = vmatprep.subr.mxu0 0.0
    %1022 = vmatpush2.msra.mxu0 %v973
    %1023 = vmatprep.subr.mxu0 0.0
    %1024 = vmatpush2.msra.mxu0 %v972
    %1025 = vmatprep.subr.mxu0 0.0
    %1026 = vmatpush2.msra.mxu0 %v971
    %1027 = vmatprep.subr.mxu0 0.0
    %1028 = vmatpush2.msra.mxu0 %v970
    %1029 = vmatprep.subr.mxu0 0.0
    %1030 = vmatpush2.msra.mxu0 %v969
    %1031 = vmatprep.subr.mxu0 0.0
    %1032 = vmatpush2.msra.mxu0 %v968
    %1033 = vmatprep.subr.mxu0 0.0
    %1034 = vmatpush2.msra.mxu0 %v967
    %1035 = vmatprep.subr.mxu0 0.0
    %1036 = vmatpush2.msra.mxu0 %v966
    %1037 = vmatprep.subr.mxu0 0.0
    %1038 = vmatpush2.msra.mxu0 %v965
    %1039 = vmatprep.subr.mxu0 0.0
    %1040 = vmatpush2.msra.mxu0 %v964
    %1041 = vmatprep.subr.mxu0 0.0
    %1042 = vmatpush2.msra.mxu0 %v963
    %1043 = vmatprep.mubr.f32.mxu0 %v946
    %1044 = vmatmul.mubr.f32.gmra.mxu0 %v945
    %v1045 = vpop.f32.mrf.mxu0
    %v1046 = vadd.f32 0.0, %v1045
    %v1047 = vpop.f32.mrf.mxu0
    %1048 = vdwg.mxu0
    %v1049 = vmul.f32 %v1046, 0.0025510204
    %v1050 = vmul.f32 %v1049, %v1049
    %v1052 = vrot.slane %v1050, 7
    %v1054 = vsub.f32 %v1049, %v1052
    %v1055 = vmax.f32 %v1054, 0.0
    %v1056 = vld [vmem:[%s5] sm:$0x1]
    %v1057 = vld [vmem:[%s5 + $0x1] sm:$0x1]
    %v1058 = vadd.f32 %v1055, 1e-05
    %v1059 = vrsqrt.pop %v1058
    %v1061 = vrot.slane %v1059, 1
    %v1063 = vmul.f32 %v1056, %v1061
    %v1064 = vmul.f32 %v1049, %v1063
    %v1065 = vsub.f32 %v1057, %v1064
    %v1067 = vrot.slane %v1065, 7
    %v1069 = vsel %vm944, %v1063, %v1067
    %v1070 = vld [vmem:[%s4] sm:$0xff]
    %v1071 = vld [vmem:[%s4 + $0x8] sm:$0xff]
    %v1072 = vld [vmem:[%s4 + $0x10] sm:$0xff]
    %v1073 = vld [vmem:[%s4 + $0x18] sm:$0xff]
    %v1074 = vld [vmem:[%s4 + $0x20] sm:$0xff]
    %v1075 = vld [vmem:[%s4 + $0x28] sm:$0xff]
    %v1076 = vld [vmem:[%s4 + $0x30] sm:$0xff]
    %v1077 = vld [vmem:[%s4 + $0x38] sm:$0xff]
    %vm1078 = vcmask 261120
    %v1080 = vsel %vm1078, %v1069, 0
    %1082 = vmatprep.subr.mxu0 0.0
    %1083 = vmatpush1.msra.mxu0 0.0
    %1084 = vmatprep.subr.mxu0 0.0
    %1085 = vmatpush1.msra.mxu0 0.0
    %1086 = vmatprep.subr.mxu0 0.0
    %1087 = vmatpush1.msra.mxu0 0.0
    %1088 = vmatprep.subr.mxu0 0.0
    %1089 = vmatpush1.msra.mxu0 0.0
    %1090 = vmatprep.subr.mxu0 0.0
    %1091 = vmatpush1.msra.mxu0 0.0
    %1092 = vmatprep.subr.mxu0 0.0
    %1093 = vmatpush1.msra.mxu0 0.0
    %1094 = vmatprep.subr.mxu0 0.0
    %1095 = vmatpush1.msra.mxu0 0.0
    %1096 = vmatprep.subr.mxu0 0.0
    %1097 = vmatpush1.msra.mxu0 0.0
    %1098 = vmatprep.subr.mxu0 0.0
    %1099 = vmatpush1.msra.mxu0 0.0
    %1100 = vmatprep.subr.mxu0 0.0
    %1101 = vmatpush1.msra.mxu0 0.0
    %1102 = vmatprep.subr.mxu0 0.0
    %1103 = vmatpush1.msra.mxu0 0.0
    %1104 = vmatprep.subr.mxu0 0.0
    %1105 = vmatpush1.msra.mxu0 0.0
    %1106 = vmatprep.subr.mxu0 %v1077
    %1107 = vmatpush1.msra.mxu0 %v1076
    %1108 = vmatprep.subr.mxu0 %v1075
    %1109 = vmatpush1.msra.mxu0 %v1074
    %1110 = vmatprep.subr.mxu0 %v1073
    %1111 = vmatpush1.msra.mxu0 %v1072
    %1112 = vmatprep.subr.mxu0 %v1071
    %1113 = vmatpush1.msra.mxu0 %v1070
    %1114 = vmatprep.subr.mxu0 0.0
    %1115 = vmatpush2.msra.mxu0 0.0
    %1116 = vmatprep.subr.mxu0 0.0
    %1117 = vmatpush2.msra.mxu0 0.0
    %1118 = vmatprep.subr.mxu0 0.0
    %1119 = vmatpush2.msra.mxu0 0.0
    %1120 = vmatprep.subr.mxu0 0.0
    %1121 = vmatpush2.msra.mxu0 0.0
    %1122 = vmatprep.subr.mxu0 0.0
    %1123 = vmatpush2.msra.mxu0 0.0
    %1124 = vmatprep.subr.mxu0 0.0
    %1125 = vmatpush2.msra.mxu0 0.0
    %1126 = vmatprep.subr.mxu0 0.0
    %1127 = vmatpush2.msra.mxu0 0.0
    %1128 = vmatprep.subr.mxu0 0.0
    %1129 = vmatpush2.msra.mxu0 0.0
    %1130 = vmatprep.subr.mxu0 0.0
    %1131 = vmatpush2.msra.mxu0 0.0
    %1132 = vmatprep.subr.mxu0 0.0
    %1133 = vmatpush2.msra.mxu0 0.0
    %1134 = vmatprep.subr.mxu0 0.0
    %1135 = vmatpush2.msra.mxu0 0.0
    %1136 = vmatprep.subr.mxu0 0.0
    %1137 = vmatpush2.msra.mxu0 0.0
    %1138 = vmatprep.subr.mxu0 0.0
    %1139 = vmatpush2.msra.mxu0 0.0
    %1140 = vmatprep.subr.mxu0 0.0
    %1141 = vmatpush2.msra.mxu0 0.0
    %1142 = vmatprep.subr.mxu0 0.0
    %1143 = vmatpush2.msra.mxu0 0.0
    %1144 = vmatprep.subr.mxu0 0.0
    %1145 = vmatpush2.msra.mxu0 0.0
    %1146 = vmatprep.mubr.f32.mxu0 0.0
    %1147 = vmatmul.mubr.f32.gmra.mxu0 %v1080
    %v1148 = vpop.f32.mrf.mxu0
    %v1149 = vadd.f32 0.0, %v1148
    %v1150 = vpop.f32.mrf.mxu0
    %v1151 = vadd.f32 0.0, %v1150
    %1152 = vdwg.mxu0
    %v1153 = vlaneseq
    %v1154 = vshrl.u32 %v1153, 7
    %v1155 = vsub.s32 0, %v1154
    %v1156 = vrot.slane %v1149, %v1155
    %v1157 = vlaneseq
    %v1158 = vshrl.u32 %v1157, 7
    %v1159 = vsub.s32 0, %v1158
    %v1160 = vrot.slane %v1151, %v1159
    %v1161 = vmul.f32 %v882, %v1156
    %v1162 = vmul.f32 %v884, %v1160
    %v1163 = vmul.f32 %v886, %v1156
    %v1164 = vmul.f32 %v888, %v1160
    %v1165 = vmul.f32 %v892, %v1156
    %v1166 = vmul.f32 %v894, %v1160
    %v1167 = vmul.f32 %v896, %v1156
    %v1168 = vmul.f32 %v898, %v1160
    %v1169 = vlaneseq
    %v1170 = vshrl.u32 %v1169, 7
    %v1171 = vsub.s32 1, %v1170
    %v1172 = vrot.slane %v1149, %v1171
    %v1173 = vlaneseq
    %v1174 = vshrl.u32 %v1173, 7
    %v1175 = vsub.s32 1, %v1174
    %v1176 = vrot.slane %v1151, %v1175
    %v1177 = vadd.f32 %v1161, %v1172
    %v1178 = vadd.f32 %v1162, %v1176
    %v1179 = vadd.f32 %v1163, %v1172
    %v1180 = vadd.f32 %v1164, %v1176
    %v1181 = vadd.f32 %v1165, %v1172
    %v1182 = vadd.f32 %v1166, %v1176
    %v1183 = vadd.f32 %v1167, %v1172
    %v1184 = vadd.f32 %v1168, %v1176
    %v1185 = vmax.f32 %v1177, 0.0
    %v1186 = vmax.f32 %v1178, 0.0
    %v1187 = vmax.f32 %v1179, 0.0
    %v1188 = vmax.f32 %v1180, 0.0
    %v1189 = vmax.f32 %v1181, 0.0
    %v1190 = vmax.f32 %v1182, 0.0
    %v1191 = vmax.f32 %v1183, 0.0
    %v1192 = vmax.f32 %v1184, 0.0
    %v1193 = vpack.c.bf16 %v1187, %v1185
    %v1194 = vpack.c.bf16 %v1188, %v1186
    %v1195 = vpack.c.bf16 %v1191, %v1189
    %v1196 = vpack.c.bf16 %v1192, %v1190
    %v1197 = vld [vmem:[%s1 + $0x50] sm:$0xf]
    %v1198 = vld [vmem:[%s1 + $0x54] sm:$0xf]
    %v1199 = vld [vmem:[%s1 + $0x58] sm:$0xf]
    %v1200 = vld [vmem:[%s1 + $0x5c] sm:$0xf]
    %v1201 = vld [vmem:[%s1 + $0x60] sm:$0xf]
    %v1202 = vld [vmem:[%s1 + $0x64] sm:$0xf]
    %v1203 = vld [vmem:[%s1 + $0x68] sm:$0xf]
    %v1204 = vld [vmem:[%s1 + $0x6c] sm:$0xf]
    %v1205 = vld [vmem:[%s1 + $0x70] sm:$0xf]
    %v1206 = vld [vmem:[%s1 + $0x74] sm:$0xf]
    %v1217 = vunpack.c.l.b16 %v1197
    %v1218 = vunpack.c.l.b16 %v1198
    %v1219 = vunpack.c.l.b16 %v1199
    %v1220 = vunpack.c.l.b16 %v1200
    %v1221 = vunpack.c.l.b16 %v1201
    %v1222 = vunpack.c.l.b16 %v1202
    %v1223 = vunpack.c.l.b16 %v1203
    %v1224 = vunpack.c.l.b16 %v1204
    %v1225 = vunpack.c.l.b16 %v1205
    %v1226 = vunpack.c.l.b16 %v1206
    %v1227 = vpack.c.b16 %v1218, %v1217
    %v1228 = vpack.c.b16 %v1220, %v1219
    %v1229 = vpack.c.b16 %v1222, %v1221
    %v1230 = vpack.c.b16 %v1224, %v1223
    %v1231 = vpack.c.b16 %v1226, %v1225
    %v1233 = vsel %vm1078, %v1227, 0
    %v1236 = vsel %vm1078, %v1228, 0
    %v1239 = vsel %vm1078, %v1229, 0
    %v1242 = vsel %vm1078, %v1230, 0
    %v1245 = vsel %vm1078, %v1231, 0
    %1247 = vmatprep.subr.bf16.mxu0 0
    %1248 = vmatpush1.bf16.msra.mxu0 0
    %1249 = vmatprep.subr.bf16.mxu0 0
    %1250 = vmatpush1.bf16.msra.mxu0 0
    %1251 = vmatprep.subr.bf16.mxu0 0
    %1252 = vmatpush1.bf16.msra.mxu0 0
    %1253 = vmatprep.subr.bf16.mxu0 0
    %1254 = vmatpush1.bf16.msra.mxu0 0
    %1255 = vmatprep.subr.bf16.mxu0 0
    %1256 = vmatpush1.bf16.msra.mxu0 0
    %1257 = vmatprep.subr.bf16.mxu0 0
    %1258 = vmatpush1.bf16.msra.mxu0 0
    %1259 = vmatprep.subr.bf16.mxu0 %v1196
    %1260 = vmatpush1.bf16.msra.mxu0 %v1195
    %1261 = vmatprep.subr.bf16.mxu0 %v1194
    %1262 = vmatpush1.bf16.msra.mxu0 %v1193
    %1263 = vmatprep.subr.bf16.mxu0 0
    %1264 = vmatpush2.bf16.msra.mxu0 0
    %1265 = vmatprep.subr.bf16.mxu0 0
    %1266 = vmatpush2.bf16.msra.mxu0 0
    %1267 = vmatprep.subr.bf16.mxu0 0
    %1268 = vmatpush2.bf16.msra.mxu0 0
    %1269 = vmatprep.subr.bf16.mxu0 0
    %1270 = vmatpush2.bf16.msra.mxu0 0
    %1271 = vmatprep.subr.bf16.mxu0 0
    %1272 = vmatpush2.bf16.msra.mxu0 0
    %1273 = vmatprep.subr.bf16.mxu0 0
    %1274 = vmatpush2.bf16.msra.mxu0 0
    %1275 = vmatprep.subr.bf16.mxu0 0
    %1276 = vmatpush2.bf16.msra.mxu0 0
    %1277 = vmatprep.subr.bf16.mxu0 0
    %1278 = vmatpush2.bf16.msra.mxu0 0
    %1279 = vmatprep.mubr.bf16.mxu0 0
    %1280 = vmatmul.mubr.bf16.gmra.mxu0 %v1233
    %v1281 = vpop.f32.mrf.mxu0
    %v1282 = vadd.f32 0.0, %v1281
    %v1283 = vpop.f32.mrf.mxu0
    %v1284 = vadd.f32 0.0, %v1283
    %v1285 = vpop.f32.mrf.mxu0
    %v1286 = vadd.f32 0.0, %v1285
    %v1287 = vpop.f32.mrf.mxu0
    %v1288 = vadd.f32 0.0, %v1287
    %1289 = vmatprep.mubr.bf16.mxu0 0
    %1290 = vmatmul.mubr.bf16.gmra.mxu0 %v1236
    %v1291 = vpop.f32.mrf.mxu0
    %v1292 = vadd.f32 0.0, %v1291
    %v1293 = vpop.f32.mrf.mxu0
    %v1294 = vadd.f32 0.0, %v1293
    %v1295 = vpop.f32.mrf.mxu0
    %v1296 = vadd.f32 0.0, %v1295
    %v1297 = vpop.f32.mrf.mxu0
    %v1298 = vadd.f32 0.0, %v1297
    %1299 = vmatprep.mubr.bf16.mxu0 0
    %1300 = vmatmul.mubr.bf16.gmra.mxu0 %v1239
    %v1301 = vpop.f32.mrf.mxu0
    %v1302 = vadd.f32 0.0, %v1301
    %v1303 = vpop.f32.mrf.mxu0
    %v1304 = vadd.f32 0.0, %v1303
    %v1305 = vpop.f32.mrf.mxu0
    %v1306 = vadd.f32 0.0, %v1305
    %v1307 = vpop.f32.mrf.mxu0
    %v1308 = vadd.f32 0.0, %v1307
    %1309 = vmatprep.mubr.bf16.mxu0 0
    %1310 = vmatmul.mubr.bf16.gmra.mxu0 %v1242
    %v1311 = vpop.f32.mrf.mxu0
    %v1312 = vadd.f32 0.0, %v1311
    %v1313 = vpop.f32.mrf.mxu0
    %v1314 = vadd.f32 0.0, %v1313
    %v1315 = vpop.f32.mrf.mxu0
    %v1316 = vadd.f32 0.0, %v1315
    %v1317 = vpop.f32.mrf.mxu0
    %v1318 = vadd.f32 0.0, %v1317
    %1319 = vmatprep.mubr.bf16.mxu0 0
    %1320 = vmatmul.mubr.bf16.gmra.mxu0 %v1245
    %v1321 = vpop.f32.mrf.mxu0
    %v1322 = vadd.f32 0.0, %v1321
    %v1323 = vpop.f32.mrf.mxu0
    %v1324 = vadd.f32 0.0, %v1323
    %v1325 = vpop.f32.mrf.mxu0
    %v1326 = vadd.f32 0.0, %v1325
    %v1327 = vpop.f32.mrf.mxu0
    %v1328 = vadd.f32 0.0, %v1327
    %1329 = vdwg.mxu0
    %v1330 = vpack.c.bf16 %v1286, %v1282
    %v1331 = vpack.c.bf16 %v1288, %v1284
    %v1332 = vpack.c.bf16 %v1296, %v1292
    %v1333 = vpack.c.bf16 %v1298, %v1294
    %v1334 = vpack.c.bf16 %v1306, %v1302
    %v1335 = vpack.c.bf16 %v1308, %v1304
    %v1336 = vpack.c.bf16 %v1316, %v1312
    %v1337 = vpack.c.bf16 %v1318, %v1314
    %v1338 = vpack.c.bf16 %v1326, %v1322
    %v1339 = vpack.c.bf16 %v1328, %v1324
    %v1340 = vld [vmem:[%s2 + $0x280] sm:$0xff]
    %v1341 = vld [vmem:[%s2 + $0x288] sm:$0xff]
    %v1342 = vld [vmem:[%s2 + $0x290] sm:$0xff]
    %v1343 = vld [vmem:[%s2 + $0x298] sm:$0xff]
    %v1344 = vld [vmem:[%s2 + $0x2a0] sm:$0xff]
    %v1345 = vld [vmem:[%s2 + $0x2a8] sm:$0xff]
    %v1346 = vld [vmem:[%s2 + $0x2b0] sm:$0xff]
    %v1347 = vld [vmem:[%s2 + $0x2b8] sm:$0xff]
    %v1348 = vld [vmem:[%s2 + $0x2c0] sm:$0xff]
    %v1349 = vld [vmem:[%s2 + $0x2c8] sm:$0xff]
    %v1350 = vld [vmem:[%s2 + $0x2d0] sm:$0xff]
    %v1351 = vld [vmem:[%s2 + $0x2d8] sm:$0xff]
    %v1352 = vld [vmem:[%s2 + $0x2e0] sm:$0xff]
    %v1353 = vld [vmem:[%s2 + $0x2e8] sm:$0xff]
    %v1354 = vld [vmem:[%s2 + $0x2f0] sm:$0xff]
    %v1355 = vld [vmem:[%s2 + $0x2f8] sm:$0xff]
    %v1356 = vld [vmem:[%s2 + $0x300] sm:$0xff]
    %v1357 = vld [vmem:[%s2 + $0x308] sm:$0xff]
    %v1358 = vld [vmem:[%s2 + $0x310] sm:$0xff]
    %v1359 = vld [vmem:[%s2 + $0x318] sm:$0xff]
    %v1360 = vld [vmem:[%s2 + $0x320] sm:$0xff]
    %v1361 = vld [vmem:[%s2 + $0x328] sm:$0xff]
    %v1362 = vld [vmem:[%s2 + $0x330] sm:$0xff]
    %v1363 = vld [vmem:[%s2 + $0x338] sm:$0xff]
    %v1364 = vld [vmem:[%s2 + $0x340] sm:$0xff]
    %v1365 = vld [vmem:[%s2 + $0x348] sm:$0xff]
    %v1366 = vld [vmem:[%s2 + $0x350] sm:$0xff]
    %v1367 = vld [vmem:[%s2 + $0x358] sm:$0xff]
    %v1368 = vld [vmem:[%s2 + $0x360] sm:$0xff]
    %v1369 = vld [vmem:[%s2 + $0x368] sm:$0xff]
    %v1370 = vld [vmem:[%s2 + $0x370] sm:$0xff]
    %v1371 = vld [vmem:[%s2 + $0x378] sm:$0xff]
    %v1372 = vld [vmem:[%s2 + $0x380] sm:$0xff]
    %v1373 = vld [vmem:[%s2 + $0x388] sm:$0xff]
    %v1374 = vld [vmem:[%s2 + $0x390] sm:$0xff]
    %v1375 = vld [vmem:[%s2 + $0x398] sm:$0xff]
    %v1376 = vld [vmem:[%s2 + $0x3a0] sm:$0xff]
    %v1377 = vld [vmem:[%s2 + $0x3a8] sm:$0xff]
    %v1378 = vld [vmem:[%s2 + $0x3b0] sm:$0xff]
    %v1379 = vld [vmem:[%s2 + $0x3b8] sm:$0xff]
    %v1380 = vld [vmem:[%s2 + $0x3c0] sm:$0xff]
    %v1381 = vld [vmem:[%s2 + $0x3c8] sm:$0xff]
    %v1382 = vld [vmem:[%s2 + $0x3d0] sm:$0xff]
    %v1383 = vld [vmem:[%s2 + $0x3d8] sm:$0xff]
    %v1384 = vld [vmem:[%s2 + $0x3e0] sm:$0xff]
    %v1385 = vld [vmem:[%s2 + $0x3e8] sm:$0xff]
    %v1386 = vld [vmem:[%s2 + $0x3f0] sm:$0xff]
    %v1387 = vld [vmem:[%s2 + $0x3f8] sm:$0xff]
    %v1388 = vld [vmem:[%s2 + $0x400] sm:$0xff]
    %v1389 = vld [vmem:[%s2 + $0x408] sm:$0xff]
    %v1390 = vld [vmem:[%s2 + $0x410] sm:$0xff]
    %v1391 = vld [vmem:[%s2 + $0x418] sm:$0xff]
    %v1392 = vld [vmem:[%s2 + $0x420] sm:$0xff]
    %v1393 = vld [vmem:[%s2 + $0x428] sm:$0xff]
    %v1394 = vld [vmem:[%s2 + $0x430] sm:$0xff]
    %v1395 = vld [vmem:[%s2 + $0x438] sm:$0xff]
    %v1396 = vld [vmem:[%s2 + $0x440] sm:$0xff]
    %v1397 = vld [vmem:[%s2 + $0x448] sm:$0xff]
    %v1398 = vld [vmem:[%s2 + $0x450] sm:$0xff]
    %v1399 = vld [vmem:[%s2 + $0x458] sm:$0xff]
    %v1400 = vld [vmem:[%s2 + $0x460] sm:$0xff]
    %v1401 = vld [vmem:[%s2 + $0x468] sm:$0xff]
    %v1402 = vld [vmem:[%s2 + $0x470] sm:$0xff]
    %v1403 = vld [vmem:[%s2 + $0x478] sm:$0xff]
    %v1404 = vld [vmem:[%s2 + $0x480] sm:$0xff]
    %v1405 = vld [vmem:[%s2 + $0x488] sm:$0xff]
    %v1406 = vld [vmem:[%s2 + $0x490] sm:$0xff]
    %v1407 = vld [vmem:[%s2 + $0x498] sm:$0xff]
    %v1408 = vld [vmem:[%s2 + $0x4a0] sm:$0xff]
    %v1409 = vld [vmem:[%s2 + $0x4a8] sm:$0xff]
    %v1410 = vld [vmem:[%s2 + $0x4b0] sm:$0xff]
    %v1411 = vld [vmem:[%s2 + $0x4b8] sm:$0xff]
    %v1412 = vld [vmem:[%s2 + $0x4c0] sm:$0xff]
    %v1413 = vld [vmem:[%s2 + $0x4c8] sm:$0xff]
    %v1414 = vld [vmem:[%s2 + $0x4d0] sm:$0xff]
    %v1415 = vld [vmem:[%s2 + $0x4d8] sm:$0xff]
    %v1416 = vld [vmem:[%s2 + $0x4e0] sm:$0xff]
    %v1417 = vld [vmem:[%s2 + $0x4e8] sm:$0xff]
    %v1418 = vld [vmem:[%s2 + $0x4f0] sm:$0xff]
    %v1419 = vld [vmem:[%s2 + $0x4f8] sm:$0xff]
    %v1420 = vld [vmem:[%s2 + $0x500] sm:$0xff]
    %v1421 = vld [vmem:[%s2 + $0x508] sm:$0xff]
    %v1422 = vld [vmem:[%s2 + $0x510] sm:$0xff]
    %v1423 = vld [vmem:[%s2 + $0x518] sm:$0xff]
    %v1424 = vld [vmem:[%s2 + $0x520] sm:$0xff]
    %v1425 = vld [vmem:[%s2 + $0x528] sm:$0xff]
    %v1426 = vld [vmem:[%s2 + $0x530] sm:$0xff]
    %v1427 = vld [vmem:[%s2 + $0x538] sm:$0xff]
    %v1428 = vld [vmem:[%s2 + $0x540] sm:$0xff]
    %v1429 = vld [vmem:[%s2 + $0x548] sm:$0xff]
    %v1430 = vld [vmem:[%s2 + $0x550] sm:$0xff]
    %v1431 = vld [vmem:[%s2 + $0x558] sm:$0xff]
    %v1432 = vld [vmem:[%s2 + $0x560] sm:$0xff]
    %v1433 = vld [vmem:[%s2 + $0x568] sm:$0xff]
    %v1434 = vld [vmem:[%s2 + $0x570] sm:$0xff]
    %v1435 = vld [vmem:[%s2 + $0x578] sm:$0xff]
    %v1436 = vld [vmem:[%s2 + $0x580] sm:$0xff]
    %v1437 = vld [vmem:[%s2 + $0x588] sm:$0xff]
    %v1438 = vld [vmem:[%s2 + $0x590] sm:$0xff]
    %v1439 = vld [vmem:[%s2 + $0x598] sm:$0xff]
    %v1440 = vld [vmem:[%s2 + $0x5a0] sm:$0xff]
    %v1441 = vld [vmem:[%s2 + $0x5a8] sm:$0xff]
    %v1442 = vld [vmem:[%s2 + $0x5b0] sm:$0xff]
    %v1443 = vld [vmem:[%s2 + $0x5b8] sm:$0xff]
    %v1444 = vld [vmem:[%s2 + $0x5c0] sm:$0xff]
    %v1445 = vld [vmem:[%s2 + $0x5c8] sm:$0xff]
    %v1446 = vld [vmem:[%s2 + $0x5d0] sm:$0xff]
    %v1447 = vld [vmem:[%s2 + $0x5d8] sm:$0xff]
    %v1448 = vld [vmem:[%s2 + $0x5e0] sm:$0xff]
    %v1449 = vld [vmem:[%s2 + $0x5e8] sm:$0xff]
    %v1450 = vld [vmem:[%s2 + $0x5f0] sm:$0xff]
    %v1451 = vld [vmem:[%s2 + $0x5f8] sm:$0xff]
    %v1452 = vld [vmem:[%s2 + $0x600] sm:$0xff]
    %v1453 = vld [vmem:[%s2 + $0x608] sm:$0xff]
    %v1454 = vld [vmem:[%s2 + $0x610] sm:$0xff]
    %v1455 = vld [vmem:[%s2 + $0x618] sm:$0xff]
    %v1456 = vld [vmem:[%s2 + $0x620] sm:$0xff]
    %v1457 = vld [vmem:[%s2 + $0x628] sm:$0xff]
    %v1458 = vld [vmem:[%s2 + $0x630] sm:$0xff]
    %v1459 = vld [vmem:[%s2 + $0x638] sm:$0xff]
    %v1460 = vld [vmem:[%s2 + $0x640] sm:$0xff]
    %v1461 = vld [vmem:[%s2 + $0x648] sm:$0xff]
    %v1462 = vld [vmem:[%s2 + $0x650] sm:$0xff]
    %v1463 = vld [vmem:[%s2 + $0x658] sm:$0xff]
    %v1464 = vld [vmem:[%s2 + $0x660] sm:$0xff]
    %v1465 = vld [vmem:[%s2 + $0x668] sm:$0xff]
    %v1466 = vld [vmem:[%s2 + $0x670] sm:$0xff]
    %v1467 = vld [vmem:[%s2 + $0x678] sm:$0xff]
    %v1468 = vld [vmem:[%s2 + $0x680] sm:$0xff]
    %v1469 = vld [vmem:[%s2 + $0x688] sm:$0xff]
    %v1470 = vld [vmem:[%s2 + $0x690] sm:$0xff]
    %v1471 = vld [vmem:[%s2 + $0x698] sm:$0xff]
    %v1472 = vld [vmem:[%s2 + $0x6a0] sm:$0xff]
    %v1473 = vld [vmem:[%s2 + $0x6a8] sm:$0xff]
    %v1474 = vld [vmem:[%s2 + $0x6b0] sm:$0xff]
    %v1475 = vld [vmem:[%s2 + $0x6b8] sm:$0xff]
    %v1476 = vld [vmem:[%s2 + $0x6c0] sm:$0xff]
    %v1477 = vld [vmem:[%s2 + $0x6c8] sm:$0xff]
    %v1478 = vld [vmem:[%s2 + $0x6d0] sm:$0xff]
    %v1479 = vld [vmem:[%s2 + $0x6d8] sm:$0xff]
    %v1480 = vld [vmem:[%s2 + $0x6e0] sm:$0xff]
    %v1481 = vld [vmem:[%s2 + $0x6e8] sm:$0xff]
    %v1482 = vld [vmem:[%s2 + $0x6f0] sm:$0xff]
    %v1483 = vld [vmem:[%s2 + $0x6f8] sm:$0xff]
    %v1484 = vld [vmem:[%s2 + $0x700] sm:$0xff]
    %v1485 = vld [vmem:[%s2 + $0x708] sm:$0xff]
    %v1486 = vld [vmem:[%s2 + $0x710] sm:$0xff]
    %v1487 = vld [vmem:[%s2 + $0x718] sm:$0xff]
    %v1488 = vld [vmem:[%s2 + $0x720] sm:$0xff]
    %v1489 = vld [vmem:[%s2 + $0x728] sm:$0xff]
    %v1490 = vld [vmem:[%s2 + $0x730] sm:$0xff]
    %v1491 = vld [vmem:[%s2 + $0x738] sm:$0xff]
    %v1492 = vld [vmem:[%s2 + $0x740] sm:$0xff]
    %v1493 = vld [vmem:[%s2 + $0x748] sm:$0xff]
    %v1494 = vld [vmem:[%s2 + $0x750] sm:$0xff]
    %v1495 = vld [vmem:[%s2 + $0x758] sm:$0xff]
    %v1496 = vld [vmem:[%s2 + $0x760] sm:$0xff]
    %v1497 = vld [vmem:[%s2 + $0x768] sm:$0xff]
    %v1498 = vld [vmem:[%s2 + $0x770] sm:$0xff]
    %v1499 = vld [vmem:[%s2 + $0x778] sm:$0xff]
    %v1660 = vunpack.c.l.b16 %v1340
    %v1661 = vunpack.c.h.b16 %v1340
    %v1662 = vunpack.c.l.b16 %v1341
    %v1663 = vunpack.c.h.b16 %v1341
    %v1664 = vunpack.c.l.b16 %v1342
    %v1665 = vunpack.c.h.b16 %v1342
    %v1666 = vunpack.c.l.b16 %v1343
    %v1667 = vunpack.c.h.b16 %v1343
    %v1668 = vunpack.c.l.b16 %v1344
    %v1669 = vunpack.c.h.b16 %v1344
    %v1670 = vunpack.c.l.b16 %v1345
    %v1671 = vunpack.c.h.b16 %v1345
    %v1672 = vunpack.c.l.b16 %v1346
    %v1673 = vunpack.c.h.b16 %v1346
    %v1674 = vunpack.c.l.b16 %v1347
    %v1675 = vunpack.c.h.b16 %v1347
    %v1676 = vunpack.c.l.b16 %v1348
    %v1677 = vunpack.c.h.b16 %v1348
    %v1678 = vunpack.c.l.b16 %v1349
    %v1679 = vunpack.c.h.b16 %v1349
    %v1680 = vunpack.c.l.b16 %v1350
    %v1681 = vunpack.c.h.b16 %v1350
    %v1682 = vunpack.c.l.b16 %v1351
    %v1683 = vunpack.c.h.b16 %v1351
    %v1684 = vunpack.c.l.b16 %v1352
    %v1685 = vunpack.c.h.b16 %v1352
    %v1686 = vunpack.c.l.b16 %v1353
    %v1687 = vunpack.c.h.b16 %v1353
    %v1688 = vunpack.c.l.b16 %v1354
    %v1689 = vunpack.c.h.b16 %v1354
    %v1690 = vunpack.c.l.b16 %v1355
    %v1691 = vunpack.c.h.b16 %v1355
    %v1692 = vunpack.c.l.b16 %v1356
    %v1693 = vunpack.c.h.b16 %v1356
    %v1694 = vunpack.c.l.b16 %v1357
    %v1695 = vunpack.c.h.b16 %v1357
    %v1696 = vunpack.c.l.b16 %v1358
    %v1697 = vunpack.c.h.b16 %v1358
    %v1698 = vunpack.c.l.b16 %v1359
    %v1699 = vunpack.c.h.b16 %v1359
    %v1700 = vunpack.c.l.b16 %v1360
    %v1701 = vunpack.c.h.b16 %v1360
    %v1702 = vunpack.c.l.b16 %v1361
    %v1703 = vunpack.c.h.b16 %v1361
    %v1704 = vunpack.c.l.b16 %v1362
    %v1705 = vunpack.c.h.b16 %v1362
    %v1706 = vunpack.c.l.b16 %v1363
    %v1707 = vunpack.c.h.b16 %v1363
    %v1708 = vunpack.c.l.b16 %v1364
    %v1709 = vunpack.c.h.b16 %v1364
    %v1710 = vunpack.c.l.b16 %v1365
    %v1711 = vunpack.c.h.b16 %v1365
    %v1712 = vunpack.c.l.b16 %v1366
    %v1713 = vunpack.c.h.b16 %v1366
    %v1714 = vunpack.c.l.b16 %v1367
    %v1715 = vunpack.c.h.b16 %v1367
    %v1716 = vunpack.c.l.b16 %v1368
    %v1717 = vunpack.c.h.b16 %v1368
    %v1718 = vunpack.c.l.b16 %v1369
    %v1719 = vunpack.c.h.b16 %v1369
    %v1720 = vunpack.c.l.b16 %v1370
    %v1721 = vunpack.c.h.b16 %v1370
    %v1722 = vunpack.c.l.b16 %v1371
    %v1723 = vunpack.c.h.b16 %v1371
    %v1724 = vunpack.c.l.b16 %v1372
    %v1725 = vunpack.c.h.b16 %v1372
    %v1726 = vunpack.c.l.b16 %v1373
    %v1727 = vunpack.c.h.b16 %v1373
    %v1728 = vunpack.c.l.b16 %v1374
    %v1729 = vunpack.c.h.b16 %v1374
    %v1730 = vunpack.c.l.b16 %v1375
    %v1731 = vunpack.c.h.b16 %v1375
    %v1732 = vunpack.c.l.b16 %v1376
    %v1733 = vunpack.c.h.b16 %v1376
    %v1734 = vunpack.c.l.b16 %v1377
    %v1735 = vunpack.c.h.b16 %v1377
    %v1736 = vunpack.c.l.b16 %v1378
    %v1737 = vunpack.c.h.b16 %v1378
    %v1738 = vunpack.c.l.b16 %v1379
    %v1739 = vunpack.c.h.b16 %v1379
    %v1740 = vunpack.c.l.b16 %v1380
    %v1741 = vunpack.c.h.b16 %v1380
    %v1742 = vunpack.c.l.b16 %v1381
    %v1743 = vunpack.c.h.b16 %v1381
    %v1744 = vunpack.c.l.b16 %v1382
    %v1745 = vunpack.c.h.b16 %v1382
    %v1746 = vunpack.c.l.b16 %v1383
    %v1747 = vunpack.c.h.b16 %v1383
    %v1748 = vunpack.c.l.b16 %v1384
    %v1749 = vunpack.c.h.b16 %v1384
    %v1750 = vunpack.c.l.b16 %v1385
    %v1751 = vunpack.c.h.b16 %v1385
    %v1752 = vunpack.c.l.b16 %v1386
    %v1753 = vunpack.c.h.b16 %v1386
    %v1754 = vunpack.c.l.b16 %v1387
    %v1755 = vunpack.c.h.b16 %v1387
    %v1756 = vunpack.c.l.b16 %v1388
    %v1757 = vunpack.c.h.b16 %v1388
    %v1758 = vunpack.c.l.b16 %v1389
    %v1759 = vunpack.c.h.b16 %v1389
    %v1760 = vunpack.c.l.b16 %v1390
    %v1761 = vunpack.c.h.b16 %v1390
    %v1762 = vunpack.c.l.b16 %v1391
    %v1763 = vunpack.c.h.b16 %v1391
    %v1764 = vunpack.c.l.b16 %v1392
    %v1765 = vunpack.c.h.b16 %v1392
    %v1766 = vunpack.c.l.b16 %v1393
    %v1767 = vunpack.c.h.b16 %v1393
    %v1768 = vunpack.c.l.b16 %v1394
    %v1769 = vunpack.c.h.b16 %v1394
    %v1770 = vunpack.c.l.b16 %v1395
    %v1771 = vunpack.c.h.b16 %v1395
    %v1772 = vunpack.c.l.b16 %v1396
    %v1773 = vunpack.c.h.b16 %v1396
    %v1774 = vunpack.c.l.b16 %v1397
    %v1775 = vunpack.c.h.b16 %v1397
    %v1776 = vunpack.c.l.b16 %v1398
    %v1777 = vunpack.c.h.b16 %v1398
    %v1778 = vunpack.c.l.b16 %v1399
    %v1779 = vunpack.c.h.b16 %v1399
    %v1780 = vunpack.c.l.b16 %v1400
    %v1781 = vunpack.c.h.b16 %v1400
    %v1782 = vunpack.c.l.b16 %v1401
    %v1783 = vunpack.c.h.b16 %v1401
    %v1784 = vunpack.c.l.b16 %v1402
    %v1785 = vunpack.c.h.b16 %v1402
    %v1786 = vunpack.c.l.b16 %v1403
    %v1787 = vunpack.c.h.b16 %v1403
    %v1788 = vunpack.c.l.b16 %v1404
    %v1789 = vunpack.c.h.b16 %v1404
    %v1790 = vunpack.c.l.b16 %v1405
    %v1791 = vunpack.c.h.b16 %v1405
    %v1792 = vunpack.c.l.b16 %v1406
    %v1793 = vunpack.c.h.b16 %v1406
    %v1794 = vunpack.c.l.b16 %v1407
    %v1795 = vunpack.c.h.b16 %v1407
    %v1796 = vunpack.c.l.b16 %v1408
    %v1797 = vunpack.c.h.b16 %v1408
    %v1798 = vunpack.c.l.b16 %v1409
    %v1799 = vunpack.c.h.b16 %v1409
    %v1800 = vunpack.c.l.b16 %v1410
    %v1801 = vunpack.c.h.b16 %v1410
    %v1802 = vunpack.c.l.b16 %v1411
    %v1803 = vunpack.c.h.b16 %v1411
    %v1804 = vunpack.c.l.b16 %v1412
    %v1805 = vunpack.c.h.b16 %v1412
    %v1806 = vunpack.c.l.b16 %v1413
    %v1807 = vunpack.c.h.b16 %v1413
    %v1808 = vunpack.c.l.b16 %v1414
    %v1809 = vunpack.c.h.b16 %v1414
    %v1810 = vunpack.c.l.b16 %v1415
    %v1811 = vunpack.c.h.b16 %v1415
    %v1812 = vunpack.c.l.b16 %v1416
    %v1813 = vunpack.c.h.b16 %v1416
    %v1814 = vunpack.c.l.b16 %v1417
    %v1815 = vunpack.c.h.b16 %v1417
    %v1816 = vunpack.c.l.b16 %v1418
    %v1817 = vunpack.c.h.b16 %v1418
    %v1818 = vunpack.c.l.b16 %v1419
    %v1819 = vunpack.c.h.b16 %v1419
    %v1820 = vunpack.c.l.b16 %v1420
    %v1821 = vunpack.c.h.b16 %v1420
    %v1822 = vunpack.c.l.b16 %v1421
    %v1823 = vunpack.c.h.b16 %v1421
    %v1824 = vunpack.c.l.b16 %v1422
    %v1825 = vunpack.c.h.b16 %v1422
    %v1826 = vunpack.c.l.b16 %v1423
    %v1827 = vunpack.c.h.b16 %v1423
    %v1828 = vunpack.c.l.b16 %v1424
    %v1829 = vunpack.c.h.b16 %v1424
    %v1830 = vunpack.c.l.b16 %v1425
    %v1831 = vunpack.c.h.b16 %v1425
    %v1832 = vunpack.c.l.b16 %v1426
    %v1833 = vunpack.c.h.b16 %v1426
    %v1834 = vunpack.c.l.b16 %v1427
    %v1835 = vunpack.c.h.b16 %v1427
    %v1836 = vunpack.c.l.b16 %v1428
    %v1837 = vunpack.c.h.b16 %v1428
    %v1838 = vunpack.c.l.b16 %v1429
    %v1839 = vunpack.c.h.b16 %v1429
    %v1840 = vunpack.c.l.b16 %v1430
    %v1841 = vunpack.c.h.b16 %v1430
    %v1842 = vunpack.c.l.b16 %v1431
    %v1843 = vunpack.c.h.b16 %v1431
    %v1844 = vunpack.c.l.b16 %v1432
    %v1845 = vunpack.c.h.b16 %v1432
    %v1846 = vunpack.c.l.b16 %v1433
    %v1847 = vunpack.c.h.b16 %v1433
    %v1848 = vunpack.c.l.b16 %v1434
    %v1849 = vunpack.c.h.b16 %v1434
    %v1850 = vunpack.c.l.b16 %v1435
    %v1851 = vunpack.c.h.b16 %v1435
    %v1852 = vunpack.c.l.b16 %v1436
    %v1853 = vunpack.c.h.b16 %v1436
    %v1854 = vunpack.c.l.b16 %v1437
    %v1855 = vunpack.c.h.b16 %v1437
    %v1856 = vunpack.c.l.b16 %v1438
    %v1857 = vunpack.c.h.b16 %v1438
    %v1858 = vunpack.c.l.b16 %v1439
    %v1859 = vunpack.c.h.b16 %v1439
    %v1860 = vunpack.c.l.b16 %v1440
    %v1861 = vunpack.c.h.b16 %v1440
    %v1862 = vunpack.c.l.b16 %v1441
    %v1863 = vunpack.c.h.b16 %v1441
    %v1864 = vunpack.c.l.b16 %v1442
    %v1865 = vunpack.c.h.b16 %v1442
    %v1866 = vunpack.c.l.b16 %v1443
    %v1867 = vunpack.c.h.b16 %v1443
    %v1868 = vunpack.c.l.b16 %v1444
    %v1869 = vunpack.c.h.b16 %v1444
    %v1870 = vunpack.c.l.b16 %v1445
    %v1871 = vunpack.c.h.b16 %v1445
    %v1872 = vunpack.c.l.b16 %v1446
    %v1873 = vunpack.c.h.b16 %v1446
    %v1874 = vunpack.c.l.b16 %v1447
    %v1875 = vunpack.c.h.b16 %v1447
    %v1876 = vunpack.c.l.b16 %v1448
    %v1877 = vunpack.c.h.b16 %v1448
    %v1878 = vunpack.c.l.b16 %v1449
    %v1879 = vunpack.c.h.b16 %v1449
    %v1880 = vunpack.c.l.b16 %v1450
    %v1881 = vunpack.c.h.b16 %v1450
    %v1882 = vunpack.c.l.b16 %v1451
    %v1883 = vunpack.c.h.b16 %v1451
    %v1884 = vunpack.c.l.b16 %v1452
    %v1885 = vunpack.c.h.b16 %v1452
    %v1886 = vunpack.c.l.b16 %v1453
    %v1887 = vunpack.c.h.b16 %v1453
    %v1888 = vunpack.c.l.b16 %v1454
    %v1889 = vunpack.c.h.b16 %v1454
    %v1890 = vunpack.c.l.b16 %v1455
    %v1891 = vunpack.c.h.b16 %v1455
    %v1892 = vunpack.c.l.b16 %v1456
    %v1893 = vunpack.c.h.b16 %v1456
    %v1894 = vunpack.c.l.b16 %v1457
    %v1895 = vunpack.c.h.b16 %v1457
    %v1896 = vunpack.c.l.b16 %v1458
    %v1897 = vunpack.c.h.b16 %v1458
    %v1898 = vunpack.c.l.b16 %v1459
    %v1899 = vunpack.c.h.b16 %v1459
    %v1900 = vunpack.c.l.b16 %v1460
    %v1901 = vunpack.c.h.b16 %v1460
    %v1902 = vunpack.c.l.b16 %v1461
    %v1903 = vunpack.c.h.b16 %v1461
    %v1904 = vunpack.c.l.b16 %v1462
    %v1905 = vunpack.c.h.b16 %v1462
    %v1906 = vunpack.c.l.b16 %v1463
    %v1907 = vunpack.c.h.b16 %v1463
    %v1908 = vunpack.c.l.b16 %v1464
    %v1909 = vunpack.c.h.b16 %v1464
    %v1910 = vunpack.c.l.b16 %v1465
    %v1911 = vunpack.c.h.b16 %v1465
    %v1912 = vunpack.c.l.b16 %v1466
    %v1913 = vunpack.c.h.b16 %v1466
    %v1914 = vunpack.c.l.b16 %v1467
    %v1915 = vunpack.c.h.b16 %v1467
    %v1916 = vunpack.c.l.b16 %v1468
    %v1917 = vunpack.c.h.b16 %v1468
    %v1918 = vunpack.c.l.b16 %v1469
    %v1919 = vunpack.c.h.b16 %v1469
    %v1920 = vunpack.c.l.b16 %v1470
    %v1921 = vunpack.c.h.b16 %v1470
    %v1922 = vunpack.c.l.b16 %v1471
    %v1923 = vunpack.c.h.b16 %v1471
    %v1924 = vunpack.c.l.b16 %v1472
    %v1925 = vunpack.c.h.b16 %v1472
    %v1926 = vunpack.c.l.b16 %v1473
    %v1927 = vunpack.c.h.b16 %v1473
    %v1928 = vunpack.c.l.b16 %v1474
    %v1929 = vunpack.c.h.b16 %v1474
    %v1930 = vunpack.c.l.b16 %v1475
    %v1931 = vunpack.c.h.b16 %v1475
    %v1932 = vunpack.c.l.b16 %v1476
    %v1933 = vunpack.c.h.b16 %v1476
    %v1934 = vunpack.c.l.b16 %v1477
    %v1935 = vunpack.c.h.b16 %v1477
    %v1936 = vunpack.c.l.b16 %v1478
    %v1937 = vunpack.c.h.b16 %v1478
    %v1938 = vunpack.c.l.b16 %v1479
    %v1939 = vunpack.c.h.b16 %v1479
    %v1940 = vunpack.c.l.b16 %v1480
    %v1941 = vunpack.c.h.b16 %v1480
    %v1942 = vunpack.c.l.b16 %v1481
    %v1943 = vunpack.c.h.b16 %v1481
    %v1944 = vunpack.c.l.b16 %v1482
    %v1945 = vunpack.c.h.b16 %v1482
    %v1946 = vunpack.c.l.b16 %v1483
    %v1947 = vunpack.c.h.b16 %v1483
    %v1948 = vunpack.c.l.b16 %v1484
    %v1949 = vunpack.c.h.b16 %v1484
    %v1950 = vunpack.c.l.b16 %v1485
    %v1951 = vunpack.c.h.b16 %v1485
    %v1952 = vunpack.c.l.b16 %v1486
    %v1953 = vunpack.c.h.b16 %v1486
    %v1954 = vunpack.c.l.b16 %v1487
    %v1955 = vunpack.c.h.b16 %v1487
    %v1956 = vunpack.c.l.b16 %v1488
    %v1957 = vunpack.c.h.b16 %v1488
    %v1958 = vunpack.c.l.b16 %v1489
    %v1959 = vunpack.c.h.b16 %v1489
    %v1960 = vunpack.c.l.b16 %v1490
    %v1961 = vunpack.c.h.b16 %v1490
    %v1962 = vunpack.c.l.b16 %v1491
    %v1963 = vunpack.c.h.b16 %v1491
    %v1964 = vunpack.c.l.b16 %v1492
    %v1965 = vunpack.c.h.b16 %v1492
    %v1966 = vunpack.c.l.b16 %v1493
    %v1967 = vunpack.c.h.b16 %v1493
    %v1968 = vunpack.c.l.b16 %v1494
    %v1969 = vunpack.c.h.b16 %v1494
    %v1970 = vunpack.c.l.b16 %v1495
    %v1971 = vunpack.c.h.b16 %v1495
    %v1972 = vunpack.c.l.b16 %v1496
    %v1973 = vunpack.c.h.b16 %v1496
    %v1974 = vunpack.c.l.b16 %v1497
    %v1975 = vunpack.c.h.b16 %v1497
    %v1976 = vunpack.c.l.b16 %v1498
    %v1977 = vunpack.c.h.b16 %v1498
    %v1978 = vunpack.c.l.b16 %v1499
    %v1979 = vunpack.c.h.b16 %v1499
    %v1980 = vpack.c.b16 %v1662, %v1660
    %v1981 = vpack.c.b16 %v1663, %v1661
    %v1982 = vpack.c.b16 %v1666, %v1664
    %v1983 = vpack.c.b16 %v1667, %v1665
    %v1984 = vpack.c.b16 %v1670, %v1668
    %v1985 = vpack.c.b16 %v1671, %v1669
    %v1986 = vpack.c.b16 %v1674, %v1672
    %v1987 = vpack.c.b16 %v1675, %v1673
    %v1988 = vpack.c.b16 %v1678, %v1676
    %v1989 = vpack.c.b16 %v1679, %v1677
    %v1990 = vpack.c.b16 %v1682, %v1680
    %v1991 = vpack.c.b16 %v1683, %v1681
    %v1992 = vpack.c.b16 %v1686, %v1684
    %v1993 = vpack.c.b16 %v1687, %v1685
    %v1994 = vpack.c.b16 %v1690, %v1688
    %v1995 = vpack.c.b16 %v1691, %v1689
    %v1996 = vpack.c.b16 %v1694, %v1692
    %v1997 = vpack.c.b16 %v1695, %v1693
    %v1998 = vpack.c.b16 %v1698, %v1696
    %v1999 = vpack.c.b16 %v1699, %v1697
    %v2000 = vpack.c.b16 %v1702, %v1700
    %v2001 = vpack.c.b16 %v1703, %v1701
    %v2002 = vpack.c.b16 %v1706, %v1704
    %v2003 = vpack.c.b16 %v1707, %v1705
    %v2004 = vpack.c.b16 %v1710, %v1708
    %v2005 = vpack.c.b16 %v1711, %v1709
    %v2006 = vpack.c.b16 %v1714, %v1712
    %v2007 = vpack.c.b16 %v1715, %v1713
    %v2008 = vpack.c.b16 %v1718, %v1716
    %v2009 = vpack.c.b16 %v1719, %v1717
    %v2010 = vpack.c.b16 %v1722, %v1720
    %v2011 = vpack.c.b16 %v1723, %v1721
    %v2012 = vpack.c.b16 %v1726, %v1724
    %v2013 = vpack.c.b16 %v1727, %v1725
    %v2014 = vpack.c.b16 %v1730, %v1728
    %v2015 = vpack.c.b16 %v1731, %v1729
    %v2016 = vpack.c.b16 %v1734, %v1732
    %v2017 = vpack.c.b16 %v1735, %v1733
    %v2018 = vpack.c.b16 %v1738, %v1736
    %v2019 = vpack.c.b16 %v1739, %v1737
    %v2020 = vpack.c.b16 %v1742, %v1740
    %v2021 = vpack.c.b16 %v1743, %v1741
    %v2022 = vpack.c.b16 %v1746, %v1744
    %v2023 = vpack.c.b16 %v1747, %v1745
    %v2024 = vpack.c.b16 %v1750, %v1748
    %v2025 = vpack.c.b16 %v1751, %v1749
    %v2026 = vpack.c.b16 %v1754, %v1752
    %v2027 = vpack.c.b16 %v1755, %v1753
    %v2028 = vpack.c.b16 %v1758, %v1756
    %v2029 = vpack.c.b16 %v1759, %v1757
    %v2030 = vpack.c.b16 %v1762, %v1760
    %v2031 = vpack.c.b16 %v1763, %v1761
    %v2032 = vpack.c.b16 %v1766, %v1764
    %v2033 = vpack.c.b16 %v1767, %v1765
    %v2034 = vpack.c.b16 %v1770, %v1768
    %v2035 = vpack.c.b16 %v1771, %v1769
    %v2036 = vpack.c.b16 %v1774, %v1772
    %v2037 = vpack.c.b16 %v1775, %v1773
    %v2038 = vpack.c.b16 %v1778, %v1776
    %v2039 = vpack.c.b16 %v1779, %v1777
    %v2040 = vpack.c.b16 %v1782, %v1780
    %v2041 = vpack.c.b16 %v1783, %v1781
    %v2042 = vpack.c.b16 %v1786, %v1784
    %v2043 = vpack.c.b16 %v1787, %v1785
    %v2044 = vpack.c.b16 %v1790, %v1788
    %v2045 = vpack.c.b16 %v1791, %v1789
    %v2046 = vpack.c.b16 %v1794, %v1792
    %v2047 = vpack.c.b16 %v1795, %v1793
    %v2048 = vpack.c.b16 %v1798, %v1796
    %v2049 = vpack.c.b16 %v1799, %v1797
    %v2050 = vpack.c.b16 %v1802, %v1800
    %v2051 = vpack.c.b16 %v1803, %v1801
    %v2052 = vpack.c.b16 %v1806, %v1804
    %v2053 = vpack.c.b16 %v1807, %v1805
    %v2054 = vpack.c.b16 %v1810, %v1808
    %v2055 = vpack.c.b16 %v1811, %v1809
    %v2056 = vpack.c.b16 %v1814, %v1812
    %v2057 = vpack.c.b16 %v1815, %v1813
    %v2058 = vpack.c.b16 %v1818, %v1816
    %v2059 = vpack.c.b16 %v1819, %v1817
    %v2060 = vpack.c.b16 %v1822, %v1820
    %v2061 = vpack.c.b16 %v1823, %v1821
    %v2062 = vpack.c.b16 %v1826, %v1824
    %v2063 = vpack.c.b16 %v1827, %v1825
    %v2064 = vpack.c.b16 %v1830, %v1828
    %v2065 = vpack.c.b16 %v1831, %v1829
    %v2066 = vpack.c.b16 %v1834, %v1832
    %v2067 = vpack.c.b16 %v1835, %v1833
    %v2068 = vpack.c.b16 %v1838, %v1836
    %v2069 = vpack.c.b16 %v1839, %v1837
    %v2070 = vpack.c.b16 %v1842, %v1840
    %v2071 = vpack.c.b16 %v1843, %v1841
    %v2072 = vpack.c.b16 %v1846, %v1844
    %v2073 = vpack.c.b16 %v1847, %v1845
    %v2074 = vpack.c.b16 %v1850, %v1848
    %v2075 = vpack.c.b16 %v1851, %v1849
    %v2076 = vpack.c.b16 %v1854, %v1852
    %v2077 = vpack.c.b16 %v1855, %v1853
    %v2078 = vpack.c.b16 %v1858, %v1856
    %v2079 = vpack.c.b16 %v1859, %v1857
    %v2080 = vpack.c.b16 %v1862, %v1860
    %v2081 = vpack.c.b16 %v1863, %v1861
    %v2082 = vpack.c.b16 %v1866, %v1864
    %v2083 = vpack.c.b16 %v1867, %v1865
    %v2084 = vpack.c.b16 %v1870, %v1868
    %v2085 = vpack.c.b16 %v1871, %v1869
    %v2086 = vpack.c.b16 %v1874, %v1872
    %v2087 = vpack.c.b16 %v1875, %v1873
    %v2088 = vpack.c.b16 %v1878, %v1876
    %v2089 = vpack.c.b16 %v1879, %v1877
    %v2090 = vpack.c.b16 %v1882, %v1880
    %v2091 = vpack.c.b16 %v1883, %v1881
    %v2092 = vpack.c.b16 %v1886, %v1884
    %v2093 = vpack.c.b16 %v1887, %v1885
    %v2094 = vpack.c.b16 %v1890, %v1888
    %v2095 = vpack.c.b16 %v1891, %v1889
    %v2096 = vpack.c.b16 %v1894, %v1892
    %v2097 = vpack.c.b16 %v1895, %v1893
    %v2098 = vpack.c.b16 %v1898, %v1896
    %v2099 = vpack.c.b16 %v1899, %v1897
    %v2100 = vpack.c.b16 %v1902, %v1900
    %v2101 = vpack.c.b16 %v1903, %v1901
    %v2102 = vpack.c.b16 %v1906, %v1904
    %v2103 = vpack.c.b16 %v1907, %v1905
    %v2104 = vpack.c.b16 %v1910, %v1908
    %v2105 = vpack.c.b16 %v1911, %v1909
    %v2106 = vpack.c.b16 %v1914, %v1912
    %v2107 = vpack.c.b16 %v1915, %v1913
    %v2108 = vpack.c.b16 %v1918, %v1916
    %v2109 = vpack.c.b16 %v1919, %v1917
    %v2110 = vpack.c.b16 %v1922, %v1920
    %v2111 = vpack.c.b16 %v1923, %v1921
    %v2112 = vpack.c.b16 %v1926, %v1924
    %v2113 = vpack.c.b16 %v1927, %v1925
    %v2114 = vpack.c.b16 %v1930, %v1928
    %v2115 = vpack.c.b16 %v1931, %v1929
    %v2116 = vpack.c.b16 %v1934, %v1932
    %v2117 = vpack.c.b16 %v1935, %v1933
    %v2118 = vpack.c.b16 %v1938, %v1936
    %v2119 = vpack.c.b16 %v1939, %v1937
    %v2120 = vpack.c.b16 %v1942, %v1940
    %v2121 = vpack.c.b16 %v1943, %v1941
    %v2122 = vpack.c.b16 %v1946, %v1944
    %v2123 = vpack.c.b16 %v1947, %v1945
    %v2124 = vpack.c.b16 %v1950, %v1948
    %v2125 = vpack.c.b16 %v1951, %v1949
    %v2126 = vpack.c.b16 %v1954, %v1952
    %v2127 = vpack.c.b16 %v1955, %v1953
    %v2128 = vpack.c.b16 %v1958, %v1956
    %v2129 = vpack.c.b16 %v1959, %v1957
    %v2130 = vpack.c.b16 %v1962, %v1960
    %v2131 = vpack.c.b16 %v1963, %v1961
    %v2132 = vpack.c.b16 %v1966, %v1964
    %v2133 = vpack.c.b16 %v1967, %v1965
    %v2134 = vpack.c.b16 %v1970, %v1968
    %v2135 = vpack.c.b16 %v1971, %v1969
    %v2136 = vpack.c.b16 %v1974, %v1972
    %v2137 = vpack.c.b16 %v1975, %v1973
    %v2138 = vpack.c.b16 %v1978, %v1976
    %v2139 = vpack.c.b16 %v1979, %v1977
    %2300 = vmatprep.subr.bf16.mxu0 %v1995
    %2301 = vmatpush1.bf16.msra.mxu0 %v1994
    %2302 = vmatprep.subr.bf16.mxu0 %v1993
    %2303 = vmatpush1.bf16.msra.mxu0 %v1992
    %2304 = vmatprep.subr.bf16.mxu0 %v1991
    %2305 = vmatpush1.bf16.msra.mxu0 %v1990
    %2306 = vmatprep.subr.bf16.mxu0 %v1989
    %2307 = vmatpush1.bf16.msra.mxu0 %v1988
    %2308 = vmatprep.subr.bf16.mxu0 %v1987
    %2309 = vmatpush1.bf16.msra.mxu0 %v1986
    %2310 = vmatprep.subr.bf16.mxu0 %v1985
    %2311 = vmatpush1.bf16.msra.mxu0 %v1984
    %2312 = vmatprep.subr.bf16.mxu0 %v1983
    %2313 = vmatpush1.bf16.msra.mxu0 %v1982
    %2314 = vmatprep.subr.bf16.mxu0 %v1981
    %2315 = vmatpush1.bf16.msra.mxu0 %v1980
    %2316 = vmatprep.subr.bf16.mxu0 %v2011
    %2317 = vmatpush2.bf16.msra.mxu0 %v2010
    %2318 = vmatprep.subr.bf16.mxu0 %v2009
    %2319 = vmatpush2.bf16.msra.mxu0 %v2008
    %2320 = vmatprep.subr.bf16.mxu0 %v2007
    %2321 = vmatpush2.bf16.msra.mxu0 %v2006
    %2322 = vmatprep.subr.bf16.mxu0 %v2005
    %2323 = vmatpush2.bf16.msra.mxu0 %v2004
    %2324 = vmatprep.subr.bf16.mxu0 %v2003
    %2325 = vmatpush2.bf16.msra.mxu0 %v2002
    %2326 = vmatprep.subr.bf16.mxu0 %v2001
    %2327 = vmatpush2.bf16.msra.mxu0 %v2000
    %2328 = vmatprep.subr.bf16.mxu0 %v1999
    %2329 = vmatpush2.bf16.msra.mxu0 %v1998
    %2330 = vmatprep.subr.bf16.mxu0 %v1997
    %2331 = vmatpush2.bf16.msra.mxu0 %v1996
    %2332 = vmatprep.mubr.bf16.mxu0 %v1331
    %2333 = vmatmul.mubr.bf16.gmra.mxu0 %v1330
    %v2334 = vpop.f32.mrf.mxu0
    %v2335 = vadd.f32 0.0, %v2334
    %v2336 = vpop.f32.mrf.mxu0
    %v2337 = vadd.f32 0.0, %v2336
    %v2338 = vpop.f32.mrf.mxu0
    %v2339 = vadd.f32 0.0, %v2338
    %v2340 = vpop.f32.mrf.mxu0
    %v2341 = vadd.f32 0.0, %v2340
    %2342 = vdwg.mxu0
    %2343 = vmatprep.subr.bf16.mxu0 %v2027
    %2344 = vmatpush1.bf16.msra.mxu0 %v2026
    %2345 = vmatprep.subr.bf16.mxu0 %v2025
    %2346 = vmatpush1.bf16.msra.mxu0 %v2024
    %2347 = vmatprep.subr.bf16.mxu0 %v2023
    %2348 = vmatpush1.bf16.msra.mxu0 %v2022
    %2349 = vmatprep.subr.bf16.mxu0 %v2021
    %2350 = vmatpush1.bf16.msra.mxu0 %v2020
    %2351 = vmatprep.subr.bf16.mxu0 %v2019
    %2352 = vmatpush1.bf16.msra.mxu0 %v2018
    %2353 = vmatprep.subr.bf16.mxu0 %v2017
    %2354 = vmatpush1.bf16.msra.mxu0 %v2016
    %2355 = vmatprep.subr.bf16.mxu0 %v2015
    %2356 = vmatpush1.bf16.msra.mxu0 %v2014
    %2357 = vmatprep.subr.bf16.mxu0 %v2013
    %2358 = vmatpush1.bf16.msra.mxu0 %v2012
    %2359 = vmatprep.subr.bf16.mxu0 %v2043
    %2360 = vmatpush2.bf16.msra.mxu0 %v2042
    %2361 = vmatprep.subr.bf16.mxu0 %v2041
    %2362 = vmatpush2.bf16.msra.mxu0 %v2040
    %2363 = vmatprep.subr.bf16.mxu0 %v2039
    %2364 = vmatpush2.bf16.msra.mxu0 %v2038
    %2365 = vmatprep.subr.bf16.mxu0 %v2037
    %2366 = vmatpush2.bf16.msra.mxu0 %v2036
    %2367 = vmatprep.subr.bf16.mxu0 %v2035
    %2368 = vmatpush2.bf16.msra.mxu0 %v2034
    %2369 = vmatprep.subr.bf16.mxu0 %v2033
    %2370 = vmatpush2.bf16.msra.mxu0 %v2032
    %2371 = vmatprep.subr.bf16.mxu0 %v2031
    %2372 = vmatpush2.bf16.msra.mxu0 %v2030
    %2373 = vmatprep.subr.bf16.mxu0 %v2029
    %2374 = vmatpush2.bf16.msra.mxu0 %v2028
    %2375 = vmatprep.mubr.bf16.mxu0 %v1333
    %2376 = vmatmul.mubr.bf16.gmra.mxu0 %v1332
    %v2377 = vpop.f32.mrf.mxu0
    %v2378 = vadd.f32 %v2335, %v2377
    %v2379 = vpop.f32.mrf.mxu0
    %v2380 = vadd.f32 %v2337, %v2379
    %v2381 = vpop.f32.mrf.mxu0
    %v2382 = vadd.f32 %v2339, %v2381
    %v2383 = vpop.f32.mrf.mxu0
    %v2384 = vadd.f32 %v2341, %v2383
    %2385 = vdwg.mxu0
    %2386 = vmatprep.subr.bf16.mxu0 %v2059
    %2387 = vmatpush1.bf16.msra.mxu0 %v2058
    %2388 = vmatprep.subr.bf16.mxu0 %v2057
    %2389 = vmatpush1.bf16.msra.mxu0 %v2056
    %2390 = vmatprep.subr.bf16.mxu0 %v2055
    %2391 = vmatpush1.bf16.msra.mxu0 %v2054
    %2392 = vmatprep.subr.bf16.mxu0 %v2053
    %2393 = vmatpush1.bf16.msra.mxu0 %v2052
    %2394 = vmatprep.subr.bf16.mxu0 %v2051
    %2395 = vmatpush1.bf16.msra.mxu0 %v2050
    %2396 = vmatprep.subr.bf16.mxu0 %v2049
    %2397 = vmatpush1.bf16.msra.mxu0 %v2048
    %2398 = vmatprep.subr.bf16.mxu0 %v2047
    %2399 = vmatpush1.bf16.msra.mxu0 %v2046
    %2400 = vmatprep.subr.bf16.mxu0 %v2045
    %2401 = vmatpush1.bf16.msra.mxu0 %v2044
    %2402 = vmatprep.subr.bf16.mxu0 %v2075
    %2403 = vmatpush2.bf16.msra.mxu0 %v2074
    %2404 = vmatprep.subr.bf16.mxu0 %v2073
    %2405 = vmatpush2.bf16.msra.mxu0 %v2072
    %2406 = vmatprep.subr.bf16.mxu0 %v2071
    %2407 = vmatpush2.bf16.msra.mxu0 %v2070
    %2408 = vmatprep.subr.bf16.mxu0 %v2069
    %2409 = vmatpush2.bf16.msra.mxu0 %v2068
    %2410 = vmatprep.subr.bf16.mxu0 %v2067
    %2411 = vmatpush2.bf16.msra.mxu0 %v2066
    %2412 = vmatprep.subr.bf16.mxu0 %v2065
    %2413 = vmatpush2.bf16.msra.mxu0 %v2064
    %2414 = vmatprep.subr.bf16.mxu0 %v2063
    %2415 = vmatpush2.bf16.msra.mxu0 %v2062
    %2416 = vmatprep.subr.bf16.mxu0 %v2061
    %2417 = vmatpush2.bf16.msra.mxu0 %v2060
    %2418 = vmatprep.mubr.bf16.mxu0 %v1335
    %2419 = vmatmul.mubr.bf16.gmra.mxu0 %v1334
    %v2420 = vpop.f32.mrf.mxu0
    %v2421 = vadd.f32 %v2378, %v2420
    %v2422 = vpop.f32.mrf.mxu0
    %v2423 = vadd.f32 %v2380, %v2422
    %v2424 = vpop.f32.mrf.mxu0
    %v2425 = vadd.f32 %v2382, %v2424
    %v2426 = vpop.f32.mrf.mxu0
    %v2427 = vadd.f32 %v2384, %v2426
    %2428 = vdwg.mxu0
    %2429 = vmatprep.subr.bf16.mxu0 %v2091
    %2430 = vmatpush1.bf16.msra.mxu0 %v2090
    %2431 = vmatprep.subr.bf16.mxu0 %v2089
    %2432 = vmatpush1.bf16.msra.mxu0 %v2088
    %2433 = vmatprep.subr.bf16.mxu0 %v2087
    %2434 = vmatpush1.bf16.msra.mxu0 %v2086
    %2435 = vmatprep.subr.bf16.mxu0 %v2085
    %2436 = vmatpush1.bf16.msra.mxu0 %v2084
    %2437 = vmatprep.subr.bf16.mxu0 %v2083
    %2438 = vmatpush1.bf16.msra.mxu0 %v2082
    %2439 = vmatprep.subr.bf16.mxu0 %v2081
    %2440 = vmatpush1.bf16.msra.mxu0 %v2080
    %2441 = vmatprep.subr.bf16.mxu0 %v2079
    %2442 = vmatpush1.bf16.msra.mxu0 %v2078
    %2443 = vmatprep.subr.bf16.mxu0 %v2077
    %2444 = vmatpush1.bf16.msra.mxu0 %v2076
    %2445 = vmatprep.subr.bf16.mxu0 %v2107
    %2446 = vmatpush2.bf16.msra.mxu0 %v2106
    %2447 = vmatprep.subr.bf16.mxu0 %v2105
    %2448 = vmatpush2.bf16.msra.mxu0 %v2104
    %2449 = vmatprep.subr.bf16.mxu0 %v2103
    %2450 = vmatpush2.bf16.msra.mxu0 %v2102
    %2451 = vmatprep.subr.bf16.mxu0 %v2101
    %2452 = vmatpush2.bf16.msra.mxu0 %v2100
    %2453 = vmatprep.subr.bf16.mxu0 %v2099
    %2454 = vmatpush2.bf16.msra.mxu0 %v2098
    %2455 = vmatprep.subr.bf16.mxu0 %v2097
    %2456 = vmatpush2.bf16.msra.mxu0 %v2096
    %2457 = vmatprep.subr.bf16.mxu0 %v2095
    %2458 = vmatpush2.bf16.msra.mxu0 %v2094
    %2459 = vmatprep.subr.bf16.mxu0 %v2093
    %2460 = vmatpush2.bf16.msra.mxu0 %v2092
    %2461 = vmatprep.mubr.bf16.mxu0 %v1337
    %2462 = vmatmul.mubr.bf16.gmra.mxu0 %v1336
    %v2463 = vpop.f32.mrf.mxu0
    %v2464 = vadd.f32 %v2421, %v2463
    %v2465 = vpop.f32.mrf.mxu0
    %v2466 = vadd.f32 %v2423, %v2465
    %v2467 = vpop.f32.mrf.mxu0
    %v2468 = vadd.f32 %v2425, %v2467
    %v2469 = vpop.f32.mrf.mxu0
    %v2470 = vadd.f32 %v2427, %v2469
    %2471 = vdwg.mxu0
    %2472 = vmatprep.subr.bf16.mxu0 %v2123
    %2473 = vmatpush1.bf16.msra.mxu0 %v2122
    %2474 = vmatprep.subr.bf16.mxu0 %v2121
    %2475 = vmatpush1.bf16.msra.mxu0 %v2120
    %2476 = vmatprep.subr.bf16.mxu0 %v2119
    %2477 = vmatpush1.bf16.msra.mxu0 %v2118
    %2478 = vmatprep.subr.bf16.mxu0 %v2117
    %2479 = vmatpush1.bf16.msra.mxu0 %v2116
    %2480 = vmatprep.subr.bf16.mxu0 %v2115
    %2481 = vmatpush1.bf16.msra.mxu0 %v2114
    %2482 = vmatprep.subr.bf16.mxu0 %v2113
    %2483 = vmatpush1.bf16.msra.mxu0 %v2112
    %2484 = vmatprep.subr.bf16.mxu0 %v2111
    %2485 = vmatpush1.bf16.msra.mxu0 %v2110
    %2486 = vmatprep.subr.bf16.mxu0 %v2109
    %2487 = vmatpush1.bf16.msra.mxu0 %v2108
    %2488 = vmatprep.subr.bf16.mxu0 %v2139
    %2489 = vmatpush2.bf16.msra.mxu0 %v2138
    %2490 = vmatprep.subr.bf16.mxu0 %v2137
    %2491 = vmatpush2.bf16.msra.mxu0 %v2136
    %2492 = vmatprep.subr.bf16.mxu0 %v2135
    %2493 = vmatpush2.bf16.msra.mxu0 %v2134
    %2494 = vmatprep.subr.bf16.mxu0 %v2133
    %2495 = vmatpush2.bf16.msra.mxu0 %v2132
    %2496 = vmatprep.subr.bf16.mxu0 %v2131
    %2497 = vmatpush2.bf16.msra.mxu0 %v2130
    %2498 = vmatprep.subr.bf16.mxu0 %v2129
    %2499 = vmatpush2.bf16.msra.mxu0 %v2128
    %2500 = vmatprep.subr.bf16.mxu0 %v2127
    %2501 = vmatpush2.bf16.msra.mxu0 %v2126
    %2502 = vmatprep.subr.bf16.mxu0 %v2125
    %2503 = vmatpush2.bf16.msra.mxu0 %v2124
    %2504 = vmatprep.mubr.bf16.mxu0 %v1339
    %2505 = vmatmul.mubr.bf16.gmra.mxu0 %v1338
    %v2506 = vpop.f32.mrf.mxu0
    %v2507 = vadd.f32 %v2464, %v2506
    %v2508 = vpop.f32.mrf.mxu0
    %v2509 = vadd.f32 %v2466, %v2508
    %v2510 = vpop.f32.mrf.mxu0
    %v2511 = vadd.f32 %v2468, %v2510
    %v2512 = vpop.f32.mrf.mxu0
    %v2513 = vadd.f32 %v2470, %v2512
    %2514 = vdwg.mxu0
    %v2515 = vadd.f32 %v2507, %v2511
    %v2516 = vrot.slane %v2515, 4
    %v2517 = vadd.f32 %v2515, %v2516
    %v2518 = vrot.slane %v2517, 2
    %v2519 = vadd.f32 %v2517, %v2518
    %v2520 = vrot.slane %v2519, 1
    %v2521 = vadd.f32 %v2519, %v2520
    %v2522 = vadd.f32 %v2509, %v2513
    %v2523 = vrot.slane %v2522, 4
    %v2524 = vadd.f32 %v2522, %v2523
    %v2525 = vrot.slane %v2524, 2
    %v2526 = vadd.f32 %v2524, %v2525
    %v2527 = vrot.slane %v2526, 1
    %v2528 = vadd.f32 %v2526, %v2527
    %v2529 = vmul.f32 %v2507, %v2507
    %v2530 = vmul.f32 %v2509, %v2509
    %v2531 = vmul.f32 %v2511, %v2511
    %v2532 = vmul.f32 %v2513, %v2513
    %v2533 = vadd.f32 %v2529, %v2531
    %v2534 = vrot.slane %v2533, 4
    %v2535 = vadd.f32 %v2533, %v2534
    %v2536 = vrot.slane %v2535, 2
    %v2537 = vadd.f32 %v2535, %v2536
    %v2538 = vrot.slane %v2537, 1
    %v2539 = vadd.f32 %v2537, %v2538
    %v2540 = vadd.f32 %v2530, %v2532
    %v2541 = vrot.slane %v2540, 4
    %v2542 = vadd.f32 %v2540, %v2541
    %v2543 = vrot.slane %v2542, 2
    %v2544 = vadd.f32 %v2542, %v2543
    %v2545 = vrot.slane %v2544, 1
    %v2546 = vadd.f32 %v2544, %v2545
    %v2547 = vsel %vm944, %v2521, %v2539
    %v2548 = vsel %vm944, %v2528, %v2546
    %v2549 = vld [vmem:[%s3 + $0x100] sm:$0xff]
    %v2550 = vld [vmem:[%s3 + $0x108] sm:$0xff]
    %v2551 = vld [vmem:[%s3 + $0x110] sm:$0xff]
    %v2552 = vld [vmem:[%s3 + $0x118] sm:$0xff]
    %v2553 = vld [vmem:[%s3 + $0x120] sm:$0xff]
    %v2554 = vld [vmem:[%s3 + $0x128] sm:$0xff]
    %v2555 = vld [vmem:[%s3 + $0x130] sm:$0xff]
    %v2556 = vld [vmem:[%s3 + $0x138] sm:$0xff]
    %v2557 = vld [vmem:[%s3 + $0x140] sm:$0xff]
    %v2558 = vld [vmem:[%s3 + $0x148] sm:$0xff]
    %v2559 = vld [vmem:[%s3 + $0x150] sm:$0xff]
    %v2560 = vld [vmem:[%s3 + $0x158] sm:$0xff]
    %v2561 = vld [vmem:[%s3 + $0x160] sm:$0xff]
    %v2562 = vld [vmem:[%s3 + $0x168] sm:$0xff]
    %v2563 = vld [vmem:[%s3 + $0x170] sm:$0xff]
    %v2564 = vld [vmem:[%s3 + $0x178] sm:$0xff]
    %v2565 = vld [vmem:[%s3 + $0x180] sm:$0xff]
    %v2566 = vld [vmem:[%s3 + $0x188] sm:$0xff]
    %v2567 = vld [vmem:[%s3 + $0x190] sm:$0xff]
    %v2568 = vld [vmem:[%s3 + $0x198] sm:$0xff]
    %v2569 = vld [vmem:[%s3 + $0x1a0] sm:$0xff]
    %v2570 = vld [vmem:[%s3 + $0x1a8] sm:$0xff]
    %v2571 = vld [vmem:[%s3 + $0x1b0] sm:$0xff]
    %v2572 = vld [vmem:[%s3 + $0x1b8] sm:$0xff]
    %v2573 = vld [vmem:[%s3 + $0x1c0] sm:$0xff]
    %v2574 = vld [vmem:[%s3 + $0x1c8] sm:$0xff]
    %v2575 = vld [vmem:[%s3 + $0x1d0] sm:$0xff]
    %v2576 = vld [vmem:[%s3 + $0x1d8] sm:$0xff]
    %v2577 = vld [vmem:[%s3 + $0x1e0] sm:$0xff]
    %v2578 = vld [vmem:[%s3 + $0x1e8] sm:$0xff]
    %v2579 = vld [vmem:[%s3 + $0x1f0] sm:$0xff]
    %v2580 = vld [vmem:[%s3 + $0x1f8] sm:$0xff]
    %2581 = vmatprep.subr.mxu0 0.0
    %2582 = vmatpush1.msra.mxu0 %v2564
    %2583 = vmatprep.subr.mxu0 0.0
    %2584 = vmatpush1.msra.mxu0 %v2563
    %2585 = vmatprep.subr.mxu0 0.0
    %2586 = vmatpush1.msra.mxu0 %v2562
    %2587 = vmatprep.subr.mxu0 0.0
    %2588 = vmatpush1.msra.mxu0 %v2561
    %2589 = vmatprep.subr.mxu0 0.0
    %2590 = vmatpush1.msra.mxu0 %v2560
    %2591 = vmatprep.subr.mxu0 0.0
    %2592 = vmatpush1.msra.mxu0 %v2559
    %2593 = vmatprep.subr.mxu0 0.0
    %2594 = vmatpush1.msra.mxu0 %v2558
    %2595 = vmatprep.subr.mxu0 0.0
    %2596 = vmatpush1.msra.mxu0 %v2557
    %2597 = vmatprep.subr.mxu0 0.0
    %2598 = vmatpush1.msra.mxu0 %v2556
    %2599 = vmatprep.subr.mxu0 0.0
    %2600 = vmatpush1.msra.mxu0 %v2555
    %2601 = vmatprep.subr.mxu0 0.0
    %2602 = vmatpush1.msra.mxu0 %v2554
    %2603 = vmatprep.subr.mxu0 0.0
    %2604 = vmatpush1.msra.mxu0 %v2553
    %2605 = vmatprep.subr.mxu0 0.0
    %2606 = vmatpush1.msra.mxu0 %v2552
    %2607 = vmatprep.subr.mxu0 0.0
    %2608 = vmatpush1.msra.mxu0 %v2551
    %2609 = vmatprep.subr.mxu0 0.0
    %2610 = vmatpush1.msra.mxu0 %v2550
    %2611 = vmatprep.subr.mxu0 0.0
    %2612 = vmatpush1.msra.mxu0 %v2549
    %2613 = vmatprep.subr.mxu0 0.0
    %2614 = vmatpush2.msra.mxu0 %v2580
    %2615 = vmatprep.subr.mxu0 0.0
    %2616 = vmatpush2.msra.mxu0 %v2579
    %2617 = vmatprep.subr.mxu0 0.0
    %2618 = vmatpush2.msra.mxu0 %v2578
    %2619 = vmatprep.subr.mxu0 0.0
    %2620 = vmatpush2.msra.mxu0 %v2577
    %2621 = vmatprep.subr.mxu0 0.0
    %2622 = vmatpush2.msra.mxu0 %v2576
    %2623 = vmatprep.subr.mxu0 0.0
    %2624 = vmatpush2.msra.mxu0 %v2575
    %2625 = vmatprep.subr.mxu0 0.0
    %2626 = vmatpush2.msra.mxu0 %v2574
    %2627 = vmatprep.subr.mxu0 0.0
    %2628 = vmatpush2.msra.mxu0 %v2573
    %2629 = vmatprep.subr.mxu0 0.0
    %2630 = vmatpush2.msra.mxu0 %v2572
    %2631 = vmatprep.subr.mxu0 0.0
    %2632 = vmatpush2.msra.mxu0 %v2571
    %2633 = vmatprep.subr.mxu0 0.0
    %2634 = vmatpush2.msra.mxu0 %v2570
    %2635 = vmatprep.subr.mxu0 0.0
    %2636 = vmatpush2.msra.mxu0 %v2569
    %2637 = vmatprep.subr.mxu0 0.0
    %2638 = vmatpush2.msra.mxu0 %v2568
    %2639 = vmatprep.subr.mxu0 0.0
    %2640 = vmatpush2.msra.mxu0 %v2567
    %2641 = vmatprep.subr.mxu0 0.0
    %2642 = vmatpush2.msra.mxu0 %v2566
    %2643 = vmatprep.subr.mxu0 0.0
    %2644 = vmatpush2.msra.mxu0 %v2565
    %2645 = vmatprep.mubr.f32.mxu0 %v2548
    %2646 = vmatmul.mubr.f32.gmra.mxu0 %v2547
    %v2647 = vpop.f32.mrf.mxu0
    %v2648 = vadd.f32 0.0, %v2647
    %v2649 = vpop.f32.mrf.mxu0
    %2650 = vdwg.mxu0
    %v2651 = vmul.f32 %v2648, 0.02
    %v2652 = vmul.f32 %v2651, %v2651
    %v2654 = vrot.slane %v2652, 7
    %v2656 = vsub.f32 %v2651, %v2654
    %v2657 = vmax.f32 %v2656, 0.0
    %v2658 = vadd.f32 %v2657, 1e-05
    %v2659 = vrsqrt.pop %v2658
    %v2661 = vrot.slane %v2659, 1
    %2662 = vrot.lane.b32.xlu0 %v2661, 32
    %v2663 = vpop.permute.xlu0 %2662
    %v2665 = vmul.f32 %v1056, %v2663
    %2667 = vrot.lane.b32.xlu0 %v2665, 96
    %v2668 = vpop.permute.xlu0 %2667
    %v2670 = vmul.f32 %v2651, %v2668
    %2672 = vrot.lane.b32.xlu0 %v2670, 32
    %v2673 = vpop.permute.xlu0 %2672
    %v2675 = vsub.f32 %v1057, %v2673
    %v2677 = vrot.slane %v2675, 7
    %v2679 = vsel %vm944, %v2665, %v2677
    %v2680 = vld [vmem:[%s4 + $0x40] sm:$0xff]
    %v2681 = vld [vmem:[%s4 + $0x48] sm:$0xff]
    %v2682 = vld [vmem:[%s4 + $0x50] sm:$0xff]
    %v2683 = vld [vmem:[%s4 + $0x58] sm:$0xff]
    %v2684 = vld [vmem:[%s4 + $0x60] sm:$0xff]
    %v2685 = vld [vmem:[%s4 + $0x68] sm:$0xff]
    %v2686 = vld [vmem:[%s4 + $0x70] sm:$0xff]
    %v2687 = vld [vmem:[%s4 + $0x78] sm:$0xff]
    %2689 = vrot.lane.b32.xlu0 %v2679, 96
    %v2690 = vpop.permute.xlu0 %2689
    %v2691 = vsel %vm1078, %v2690, 0
    %2693 = vmatprep.subr.mxu0 0.0
    %2694 = vmatpush1.msra.mxu0 0.0
    %2695 = vmatprep.subr.mxu0 0.0
    %2696 = vmatpush1.msra.mxu0 0.0
    %2697 = vmatprep.subr.mxu0 0.0
    %2698 = vmatpush1.msra.mxu0 0.0
    %2699 = vmatprep.subr.mxu0 0.0
    %2700 = vmatpush1.msra.mxu0 0.0
    %2701 = vmatprep.subr.mxu0 0.0
    %2702 = vmatpush1.msra.mxu0 0.0
    %2703 = vmatprep.subr.mxu0 0.0
    %2704 = vmatpush1.msra.mxu0 0.0
    %2705 = vmatprep.subr.mxu0 0.0
    %2706 = vmatpush1.msra.mxu0 0.0
    %2707 = vmatprep.subr.mxu0 0.0
    %2708 = vmatpush1.msra.mxu0 0.0
    %2709 = vmatprep.subr.mxu0 0.0
    %2710 = vmatpush1.msra.mxu0 0.0
    %2711 = vmatprep.subr.mxu0 0.0
    %2712 = vmatpush1.msra.mxu0 0.0
    %2713 = vmatprep.subr.mxu0 0.0
    %2714 = vmatpush1.msra.mxu0 0.0
    %2715 = vmatprep.subr.mxu0 0.0
    %2716 = vmatpush1.msra.mxu0 0.0
    %2717 = vmatprep.subr.mxu0 %v2687
    %2718 = vmatpush1.msra.mxu0 %v2686
    %2719 = vmatprep.subr.mxu0 %v2685
    %2720 = vmatpush1.msra.mxu0 %v2684
    %2721 = vmatprep.subr.mxu0 %v2683
    %2722 = vmatpush1.msra.mxu0 %v2682
    %2723 = vmatprep.subr.mxu0 %v2681
    %2724 = vmatpush1.msra.mxu0 %v2680
    %2725 = vmatprep.subr.mxu0 0.0
    %2726 = vmatpush2.msra.mxu0 0.0
    %2727 = vmatprep.subr.mxu0 0.0
    %2728 = vmatpush2.msra.mxu0 0.0
    %2729 = vmatprep.subr.mxu0 0.0
    %2730 = vmatpush2.msra.mxu0 0.0
    %2731 = vmatprep.subr.mxu0 0.0
    %2732 = vmatpush2.msra.mxu0 0.0
    %2733 = vmatprep.subr.mxu0 0.0
    %2734 = vmatpush2.msra.mxu0 0.0
    %2735 = vmatprep.subr.mxu0 0.0
    %2736 = vmatpush2.msra.mxu0 0.0
    %2737 = vmatprep.subr.mxu0 0.0
    %2738 = vmatpush2.msra.mxu0 0.0
    %2739 = vmatprep.subr.mxu0 0.0
    %2740 = vmatpush2.msra.mxu0 0.0
    %2741 = vmatprep.subr.mxu0 0.0
    %2742 = vmatpush2.msra.mxu0 0.0
    %2743 = vmatprep.subr.mxu0 0.0
    %2744 = vmatpush2.msra.mxu0 0.0
    %2745 = vmatprep.subr.mxu0 0.0
    %2746 = vmatpush2.msra.mxu0 0.0
    %2747 = vmatprep.subr.mxu0 0.0
    %2748 = vmatpush2.msra.mxu0 0.0
    %2749 = vmatprep.subr.mxu0 0.0
    %2750 = vmatpush2.msra.mxu0 0.0
    %2751 = vmatprep.subr.mxu0 0.0
    %2752 = vmatpush2.msra.mxu0 0.0
    %2753 = vmatprep.subr.mxu0 0.0
    %2754 = vmatpush2.msra.mxu0 0.0
    %2755 = vmatprep.subr.mxu0 0.0
    %2756 = vmatpush2.msra.mxu0 0.0
    %2757 = vmatprep.mubr.f32.mxu0 0.0
    %2758 = vmatmul.mubr.f32.gmra.mxu0 %v2691
    %v2759 = vpop.f32.mrf.mxu0
    %v2760 = vadd.f32 0.0, %v2759
    %v2761 = vpop.f32.mrf.mxu0
    %v2762 = vadd.f32 0.0, %v2761
    %2763 = vdwg.mxu0
    %v2764 = vlaneseq
    %v2765 = vshrl.u32 %v2764, 7
    %v2766 = vsub.s32 0, %v2765
    %v2767 = vrot.slane %v2760, %v2766
    %v2768 = vlaneseq
    %v2769 = vshrl.u32 %v2768, 7
    %v2770 = vsub.s32 0, %v2769
    %v2771 = vrot.slane %v2762, %v2770
    %v2772 = vmul.f32 %v2507, %v2767
    %v2773 = vmul.f32 %v2509, %v2771
    %v2774 = vmul.f32 %v2511, %v2767
    %v2775 = vmul.f32 %v2513, %v2771
    %v2776 = vlaneseq
    %v2777 = vshrl.u32 %v2776, 7
    %v2778 = vsub.s32 1, %v2777
    %v2779 = vrot.slane %v2760, %v2778
    %v2780 = vlaneseq
    %v2781 = vshrl.u32 %v2780, 7
    %v2782 = vsub.s32 1, %v2781
    %v2783 = vrot.slane %v2762, %v2782
    %v2784 = vadd.f32 %v2772, %v2779
    %v2785 = vadd.f32 %v2773, %v2783
    %v2786 = vadd.f32 %v2774, %v2779
    %v2787 = vadd.f32 %v2775, %v2783
    %v2788 = vmax.f32 %v2784, 0.0
    %v2789 = vmax.f32 %v2785, 0.0
    %v2790 = vmax.f32 %v2786, 0.0
    %v2791 = vmax.f32 %v2787, 0.0
    %v2792 = vpack.c.bf16 %v2790, %v2788
    %v2793 = vpack.c.bf16 %v2791, %v2789
    %v2794 = vld [vmem:[%s1 + $0x78] sm:$0xf]
    %v2795 = vld [vmem:[%s1 + $0x7c] sm:$0xf]
    %v2796 = vld [vmem:[%s1 + $0x80] sm:$0xf]
    %v2797 = vld [vmem:[%s1 + $0x84] sm:$0xf]
    %v2798 = vld [vmem:[%s1 + $0x88] sm:$0xf]
    %v2804 = vunpack.c.l.b16 %v2794
    %v2805 = vunpack.c.l.b16 %v2795
    %v2806 = vunpack.c.l.b16 %v2796
    %v2807 = vunpack.c.l.b16 %v2797
    %v2808 = vunpack.c.l.b16 %v2798
    %v2809 = vpack.c.b16 %v2805, %v2804
    %v2810 = vpack.c.b16 %v2807, %v2806
    %v2811 = vpack.c.b16 %v2808, %v2808
    %vm2812 = vcmask 130048
    %v2814 = vsel %vm2812, %v2809, 0
    %v2817 = vsel %vm2812, %v2810, 0
    %v2820 = vsel %vm2812, %v2811, 0
    %2822 = vmatprep.subr.bf16.mxu0 0
    %2823 = vmatpush1.bf16.msra.mxu0 0
    %2824 = vmatprep.subr.bf16.mxu0 0
    %2825 = vmatpush1.bf16.msra.mxu0 0
    %2826 = vmatprep.subr.bf16.mxu0 0
    %2827 = vmatpush1.bf16.msra.mxu0 0
    %2828 = vmatprep.subr.bf16.mxu0 0
    %2829 = vmatpush1.bf16.msra.mxu0 0
    %2830 = vmatprep.subr.bf16.mxu0 0
    %2831 = vmatpush1.bf16.msra.mxu0 0
    %2832 = vmatprep.subr.bf16.mxu0 0
    %2833 = vmatpush1.bf16.msra.mxu0 0
    %2834 = vmatprep.subr.bf16.mxu0 0
    %2835 = vmatpush1.bf16.msra.mxu0 0
    %2836 = vmatprep.subr.bf16.mxu0 %v2793
    %2837 = vmatpush1.bf16.msra.mxu0 %v2792
    %2838 = vmatprep.subr.bf16.mxu0 0
    %2839 = vmatpush2.bf16.msra.mxu0 0
    %2840 = vmatprep.subr.bf16.mxu0 0
    %2841 = vmatpush2.bf16.msra.mxu0 0
    %2842 = vmatprep.subr.bf16.mxu0 0
    %2843 = vmatpush2.bf16.msra.mxu0 0
    %2844 = vmatprep.subr.bf16.mxu0 0
    %2845 = vmatpush2.bf16.msra.mxu0 0
    %2846 = vmatprep.subr.bf16.mxu0 0
    %2847 = vmatpush2.bf16.msra.mxu0 0
    %2848 = vmatprep.subr.bf16.mxu0 0
    %2849 = vmatpush2.bf16.msra.mxu0 0
    %2850 = vmatprep.subr.bf16.mxu0 0
    %2851 = vmatpush2.bf16.msra.mxu0 0
    %2852 = vmatprep.subr.bf16.mxu0 0
    %2853 = vmatpush2.bf16.msra.mxu0 0
    %2854 = vmatprep.mubr.bf16.mxu0 0
    %2855 = vmatmul.mubr.bf16.gmra.mxu0 %v2814
    %v2856 = vpop.f32.mrf.mxu0
    %v2857 = vadd.f32 0.0, %v2856
    %v2858 = vpop.f32.mrf.mxu0
    %v2859 = vadd.f32 0.0, %v2858
    %v2860 = vpop.f32.mrf.mxu0
    %v2861 = vadd.f32 0.0, %v2860
    %v2862 = vpop.f32.mrf.mxu0
    %v2863 = vadd.f32 0.0, %v2862
    %2864 = vmatprep.mubr.bf16.mxu0 0
    %2865 = vmatmul.mubr.bf16.gmra.mxu0 %v2817
    %v2866 = vpop.f32.mrf.mxu0
    %v2867 = vadd.f32 0.0, %v2866
    %v2868 = vpop.f32.mrf.mxu0
    %v2869 = vadd.f32 0.0, %v2868
    %v2870 = vpop.f32.mrf.mxu0
    %v2871 = vadd.f32 0.0, %v2870
    %v2872 = vpop.f32.mrf.mxu0
    %v2873 = vadd.f32 0.0, %v2872
    %2874 = vmatprep.mubr.bf16.mxu0 0
    %2875 = vmatmul.mubr.bf16.gmra.mxu0 %v2820
    %v2876 = vpop.f32.mrf.mxu0
    %v2877 = vadd.f32 0.0, %v2876
    %v2878 = vpop.f32.mrf.mxu0
    %v2879 = vadd.f32 0.0, %v2878
    %v2880 = vpop.f32.mrf.mxu0
    %v2881 = vpop.f32.mrf.mxu0
    %2882 = vdwg.mxu0
    %v2883 = vpack.c.bf16 %v2857, %v2857
    %v2884 = vpack.c.bf16 %v2859, %v2859
    %v2885 = vpack.c.bf16 %v2861, %v2861
    %v2886 = vpack.c.bf16 %v2863, %v2863
    %v2887 = vpack.c.bf16 %v2867, %v2867
    %v2888 = vpack.c.bf16 %v2869, %v2869
    %v2889 = vpack.c.bf16 %v2871, %v2871
    %v2890 = vpack.c.bf16 %v2873, %v2873
    %v2891 = vpack.c.bf16 %v2877, %v2877
    %v2892 = vpack.c.bf16 %v2879, %v2879
    %v2893 = vld [vmem:[%s2 + $0x780] sm:$0xf]
    %v2894 = vld [vmem:[%s2 + $0x788] sm:$0xf]
    %v2895 = vld [vmem:[%s2 + $0x790] sm:$0xf]
    %v2896 = vld [vmem:[%s2 + $0x798] sm:$0xf]
    %v2897 = vld [vmem:[%s2 + $0x7a0] sm:$0xf]
    %v2898 = vld [vmem:[%s2 + $0x7a8] sm:$0xf]
    %v2899 = vld [vmem:[%s2 + $0x7b0] sm:$0xf]
    %v2900 = vld [vmem:[%s2 + $0x7b8] sm:$0xf]
    %v2901 = vld [vmem:[%s2 + $0x7c0] sm:$0xf]
    %v2902 = vld [vmem:[%s2 + $0x7c8] sm:$0xf]
    %v2903 = vld [vmem:[%s2 + $0x7d0] sm:$0xf]
    %v2904 = vld [vmem:[%s2 + $0x7d8] sm:$0xf]
    %v2905 = vld [vmem:[%s2 + $0x7e0] sm:$0xf]
    %v2906 = vld [vmem:[%s2 + $0x7e8] sm:$0xf]
    %v2907 = vld [vmem:[%s2 + $0x7f0] sm:$0xf]
    %v2908 = vld [vmem:[%s2 + $0x7f8] sm:$0xf]
    %v2909 = vld [vmem:[%s2 + $0x800] sm:$0xf]
    %v2910 = vld [vmem:[%s2 + $0x808] sm:$0xf]
    %v2911 = vld [vmem:[%s2 + $0x810] sm:$0xf]
    %v2912 = vld [vmem:[%s2 + $0x818] sm:$0xf]
    %v2913 = vld [vmem:[%s2 + $0x820] sm:$0xf]
    %v2914 = vld [vmem:[%s2 + $0x828] sm:$0xf]
    %v2915 = vld [vmem:[%s2 + $0x830] sm:$0xf]
    %v2916 = vld [vmem:[%s2 + $0x838] sm:$0xf]
    %v2917 = vld [vmem:[%s2 + $0x840] sm:$0xf]
    %v2918 = vld [vmem:[%s2 + $0x848] sm:$0xf]
    %v2919 = vld [vmem:[%s2 + $0x850] sm:$0xf]
    %v2920 = vld [vmem:[%s2 + $0x858] sm:$0xf]
    %v2921 = vld [vmem:[%s2 + $0x860] sm:$0xf]
    %v2922 = vld [vmem:[%s2 + $0x868] sm:$0xf]
    %v2923 = vld [vmem:[%s2 + $0x870] sm:$0xf]
    %v2924 = vld [vmem:[%s2 + $0x878] sm:$0xf]
    %v2925 = vld [vmem:[%s2 + $0x880] sm:$0xf]
    %v2926 = vld [vmem:[%s2 + $0x888] sm:$0xf]
    %v2927 = vld [vmem:[%s2 + $0x890] sm:$0xf]
    %v2928 = vld [vmem:[%s2 + $0x898] sm:$0xf]
    %v2929 = vld [vmem:[%s2 + $0x8a0] sm:$0xf]
    %v2930 = vld [vmem:[%s2 + $0x8a8] sm:$0xf]
    %v2931 = vld [vmem:[%s2 + $0x8b0] sm:$0xf]
    %v2932 = vld [vmem:[%s2 + $0x8b8] sm:$0xf]
    %v2933 = vld [vmem:[%s2 + $0x8c0] sm:$0xf]
    %v2934 = vld [vmem:[%s2 + $0x8c8] sm:$0xf]
    %v2935 = vld [vmem:[%s2 + $0x8d0] sm:$0xf]
    %v2936 = vld [vmem:[%s2 + $0x8d8] sm:$0xf]
    %v2937 = vld [vmem:[%s2 + $0x8e0] sm:$0xf]
    %v2938 = vld [vmem:[%s2 + $0x8e8] sm:$0xf]
    %v2939 = vld [vmem:[%s2 + $0x8f0] sm:$0xf]
    %v2940 = vld [vmem:[%s2 + $0x8f8] sm:$0xf]
    %v2941 = vld [vmem:[%s2 + $0x900] sm:$0xf]
    %v2942 = vld [vmem:[%s2 + $0x908] sm:$0xf]
    %v2943 = vld [vmem:[%s2 + $0x910] sm:$0xf]
    %v2944 = vld [vmem:[%s2 + $0x918] sm:$0xf]
    %v2945 = vld [vmem:[%s2 + $0x920] sm:$0xf]
    %v2946 = vld [vmem:[%s2 + $0x928] sm:$0xf]
    %v2947 = vld [vmem:[%s2 + $0x930] sm:$0xf]
    %v2948 = vld [vmem:[%s2 + $0x938] sm:$0xf]
    %v2949 = vld [vmem:[%s2 + $0x940] sm:$0xf]
    %v2950 = vld [vmem:[%s2 + $0x948] sm:$0xf]
    %v2951 = vld [vmem:[%s2 + $0x950] sm:$0xf]
    %v2952 = vld [vmem:[%s2 + $0x958] sm:$0xf]
    %v2953 = vld [vmem:[%s2 + $0x960] sm:$0xf]
    %v2954 = vld [vmem:[%s2 + $0x968] sm:$0xf]
    %v2955 = vld [vmem:[%s2 + $0x970] sm:$0xf]
    %v2956 = vld [vmem:[%s2 + $0x978] sm:$0xf]
    %v2957 = vld [vmem:[%s2 + $0x980] sm:$0xf]
    %v2958 = vld [vmem:[%s2 + $0x988] sm:$0xf]
    %v2959 = vld [vmem:[%s2 + $0x990] sm:$0xf]
    %v2960 = vld [vmem:[%s2 + $0x998] sm:$0xf]
    %v2961 = vld [vmem:[%s2 + $0x9a0] sm:$0xf]
    %v2962 = vld [vmem:[%s2 + $0x9a8] sm:$0xf]
    %v2963 = vld [vmem:[%s2 + $0x9b0] sm:$0xf]
    %v2964 = vld [vmem:[%s2 + $0x9b8] sm:$0xf]
    %v2965 = vld [vmem:[%s2 + $0x9c0] sm:$0xf]
    %v2966 = vld [vmem:[%s2 + $0x9c8] sm:$0xf]
    %v2967 = vld [vmem:[%s2 + $0x9d0] sm:$0xf]
    %v2968 = vld [vmem:[%s2 + $0x9d8] sm:$0xf]
    %v2969 = vld [vmem:[%s2 + $0x9e0] sm:$0xf]
    %v2970 = vld [vmem:[%s2 + $0x9e8] sm:$0xf]
    %v2971 = vld [vmem:[%s2 + $0x9f0] sm:$0xf]
    %v2972 = vld [vmem:[%s2 + $0x9f8] sm:$0xf]
    %v2973 = vld [vmem:[%s2 + $0xa00] sm:$0xf]
    %v2974 = vld [vmem:[%s2 + $0xa08] sm:$0xf]
    %v2975 = vld [vmem:[%s2 + $0xa10] sm:$0xf]
    %v2976 = vld [vmem:[%s2 + $0xa18] sm:$0xf]
    %v2977 = vld [vmem:[%s2 + $0xa20] sm:$0xf]
    %v2978 = vld [vmem:[%s2 + $0xa28] sm:$0xf]
    %v2979 = vld [vmem:[%s2 + $0xa30] sm:$0xf]
    %v2980 = vld [vmem:[%s2 + $0xa38] sm:$0xf]
    %v2981 = vld [vmem:[%s2 + $0xa40] sm:$0xf]
    %v2982 = vld [vmem:[%s2 + $0xa48] sm:$0xf]
    %v2983 = vld [vmem:[%s2 + $0xa50] sm:$0xf]
    %v2984 = vld [vmem:[%s2 + $0xa58] sm:$0xf]
    %v2985 = vld [vmem:[%s2 + $0xa60] sm:$0xf]
    %v2986 = vld [vmem:[%s2 + $0xa68] sm:$0xf]
    %v2987 = vld [vmem:[%s2 + $0xa70] sm:$0xf]
    %v2988 = vld [vmem:[%s2 + $0xa78] sm:$0xf]
    %v2989 = vld [vmem:[%s2 + $0xa80] sm:$0xf]
    %v2990 = vld [vmem:[%s2 + $0xa88] sm:$0xf]
    %v2991 = vld [vmem:[%s2 + $0xa90] sm:$0xf]
    %v2992 = vld [vmem:[%s2 + $0xa98] sm:$0xf]
    %v2993 = vld [vmem:[%s2 + $0xaa0] sm:$0xf]
    %v2994 = vld [vmem:[%s2 + $0xaa8] sm:$0xf]
    %v2995 = vld [vmem:[%s2 + $0xab0] sm:$0xf]
    %v2996 = vld [vmem:[%s2 + $0xab8] sm:$0xf]
    %v2997 = vld [vmem:[%s2 + $0xac0] sm:$0xf]
    %v2998 = vld [vmem:[%s2 + $0xac8] sm:$0xf]
    %v2999 = vld [vmem:[%s2 + $0xad0] sm:$0xf]
    %v3000 = vld [vmem:[%s2 + $0xad8] sm:$0xf]
    %v3001 = vld [vmem:[%s2 + $0xae0] sm:$0xf]
    %v3002 = vld [vmem:[%s2 + $0xae8] sm:$0xf]
    %v3003 = vld [vmem:[%s2 + $0xaf0] sm:$0xf]
    %v3004 = vld [vmem:[%s2 + $0xaf8] sm:$0xf]
    %v3005 = vld [vmem:[%s2 + $0xb00] sm:$0xf]
    %v3006 = vld [vmem:[%s2 + $0xb08] sm:$0xf]
    %v3007 = vld [vmem:[%s2 + $0xb10] sm:$0xf]
    %v3008 = vld [vmem:[%s2 + $0xb18] sm:$0xf]
    %v3009 = vld [vmem:[%s2 + $0xb20] sm:$0xf]
    %v3010 = vld [vmem:[%s2 + $0xb28] sm:$0xf]
    %v3011 = vld [vmem:[%s2 + $0xb30] sm:$0xf]
    %v3012 = vld [vmem:[%s2 + $0xb38] sm:$0xf]
    %v3013 = vld [vmem:[%s2 + $0xb40] sm:$0xf]
    %v3014 = vld [vmem:[%s2 + $0xb48] sm:$0xf]
    %v3015 = vld [vmem:[%s2 + $0xb50] sm:$0xf]
    %v3016 = vld [vmem:[%s2 + $0xb58] sm:$0xf]
    %v3017 = vld [vmem:[%s2 + $0xb60] sm:$0xf]
    %v3018 = vld [vmem:[%s2 + $0xb68] sm:$0xf]
    %v3019 = vld [vmem:[%s2 + $0xb70] sm:$0xf]
    %v3020 = vld [vmem:[%s2 + $0xb78] sm:$0xf]
    %v3021 = vld [vmem:[%s2 + $0xb80] sm:$0xf]
    %v3022 = vld [vmem:[%s2 + $0xb88] sm:$0xf]
    %v3023 = vld [vmem:[%s2 + $0xb90] sm:$0xf]
    %v3024 = vld [vmem:[%s2 + $0xb98] sm:$0xf]
    %v3025 = vld [vmem:[%s2 + $0xba0] sm:$0xf]
    %v3026 = vld [vmem:[%s2 + $0xba8] sm:$0xf]
    %v3027 = vld [vmem:[%s2 + $0xbb0] sm:$0xf]
    %v3028 = vld [vmem:[%s2 + $0xbb8] sm:$0xf]
    %v3029 = vld [vmem:[%s2 + $0xbc0] sm:$0xf]
    %v3030 = vld [vmem:[%s2 + $0xbc8] sm:$0xf]
    %v3031 = vld [vmem:[%s2 + $0xbd0] sm:$0xf]
    %v3032 = vld [vmem:[%s2 + $0xbd8] sm:$0xf]
    %v3033 = vld [vmem:[%s2 + $0xbe0] sm:$0xf]
    %v3034 = vld [vmem:[%s2 + $0xbe8] sm:$0xf]
    %v3035 = vld [vmem:[%s2 + $0xbf0] sm:$0xf]
    %v3036 = vld [vmem:[%s2 + $0xbf8] sm:$0xf]
    %v3037 = vld [vmem:[%s2 + $0xc00] sm:$0xf]
    %v3038 = vld [vmem:[%s2 + $0xc08] sm:$0xf]
    %v3039 = vld [vmem:[%s2 + $0xc10] sm:$0xf]
    %v3040 = vld [vmem:[%s2 + $0xc18] sm:$0xf]
    %v3041 = vld [vmem:[%s2 + $0xc20] sm:$0xf]
    %v3042 = vld [vmem:[%s2 + $0xc28] sm:$0xf]
    %v3043 = vld [vmem:[%s2 + $0xc30] sm:$0xf]
    %v3044 = vld [vmem:[%s2 + $0xc38] sm:$0xf]
    %v3045 = vld [vmem:[%s2 + $0xc40] sm:$0xf]
    %v3046 = vld [vmem:[%s2 + $0xc48] sm:$0xf]
    %v3047 = vld [vmem:[%s2 + $0xc50] sm:$0xf]
    %v3048 = vld [vmem:[%s2 + $0xc58] sm:$0xf]
    %v3049 = vld [vmem:[%s2 + $0xc60] sm:$0xf]
    %v3050 = vld [vmem:[%s2 + $0xc68] sm:$0xf]
    %v3051 = vld [vmem:[%s2 + $0xc70] sm:$0xf]
    %v3052 = vld [vmem:[%s2 + $0xc78] sm:$0xf]
    %v3213 = vunpack.c.l.b16 %v2893
    %v3214 = vunpack.c.l.b16 %v2894
    %v3215 = vunpack.c.l.b16 %v2895
    %v3216 = vunpack.c.l.b16 %v2896
    %v3217 = vunpack.c.l.b16 %v2897
    %v3218 = vunpack.c.l.b16 %v2898
    %v3219 = vunpack.c.l.b16 %v2899
    %v3220 = vunpack.c.l.b16 %v2900
    %v3221 = vunpack.c.l.b16 %v2901
    %v3222 = vunpack.c.l.b16 %v2902
    %v3223 = vunpack.c.l.b16 %v2903
    %v3224 = vunpack.c.l.b16 %v2904
    %v3225 = vunpack.c.l.b16 %v2905
    %v3226 = vunpack.c.l.b16 %v2906
    %v3227 = vunpack.c.l.b16 %v2907
    %v3228 = vunpack.c.l.b16 %v2908
    %v3229 = vunpack.c.l.b16 %v2909
    %v3230 = vunpack.c.l.b16 %v2910
    %v3231 = vunpack.c.l.b16 %v2911
    %v3232 = vunpack.c.l.b16 %v2912
    %v3233 = vunpack.c.l.b16 %v2913
    %v3234 = vunpack.c.l.b16 %v2914
    %v3235 = vunpack.c.l.b16 %v2915
    %v3236 = vunpack.c.l.b16 %v2916
    %v3237 = vunpack.c.l.b16 %v2917
    %v3238 = vunpack.c.l.b16 %v2918
    %v3239 = vunpack.c.l.b16 %v2919
    %v3240 = vunpack.c.l.b16 %v2920
    %v3241 = vunpack.c.l.b16 %v2921
    %v3242 = vunpack.c.l.b16 %v2922
    %v3243 = vunpack.c.l.b16 %v2923
    %v3244 = vunpack.c.l.b16 %v2924
    %v3245 = vunpack.c.l.b16 %v2925
    %v3246 = vunpack.c.l.b16 %v2926
    %v3247 = vunpack.c.l.b16 %v2927
    %v3248 = vunpack.c.l.b16 %v2928
    %v3249 = vunpack.c.l.b16 %v2929
    %v3250 = vunpack.c.l.b16 %v2930
    %v3251 = vunpack.c.l.b16 %v2931
    %v3252 = vunpack.c.l.b16 %v2932
    %v3253 = vunpack.c.l.b16 %v2933
    %v3254 = vunpack.c.l.b16 %v2934
    %v3255 = vunpack.c.l.b16 %v2935
    %v3256 = vunpack.c.l.b16 %v2936
    %v3257 = vunpack.c.l.b16 %v2937
    %v3258 = vunpack.c.l.b16 %v2938
    %v3259 = vunpack.c.l.b16 %v2939
    %v3260 = vunpack.c.l.b16 %v2940
    %v3261 = vunpack.c.l.b16 %v2941
    %v3262 = vunpack.c.l.b16 %v2942
    %v3263 = vunpack.c.l.b16 %v2943
    %v3264 = vunpack.c.l.b16 %v2944
    %v3265 = vunpack.c.l.b16 %v2945
    %v3266 = vunpack.c.l.b16 %v2946
    %v3267 = vunpack.c.l.b16 %v2947
    %v3268 = vunpack.c.l.b16 %v2948
    %v3269 = vunpack.c.l.b16 %v2949
    %v3270 = vunpack.c.l.b16 %v2950
    %v3271 = vunpack.c.l.b16 %v2951
    %v3272 = vunpack.c.l.b16 %v2952
    %v3273 = vunpack.c.l.b16 %v2953
    %v3274 = vunpack.c.l.b16 %v2954
    %v3275 = vunpack.c.l.b16 %v2955
    %v3276 = vunpack.c.l.b16 %v2956
    %v3277 = vunpack.c.l.b16 %v2957
    %v3278 = vunpack.c.l.b16 %v2958
    %v3279 = vunpack.c.l.b16 %v2959
    %v3280 = vunpack.c.l.b16 %v2960
    %v3281 = vunpack.c.l.b16 %v2961
    %v3282 = vunpack.c.l.b16 %v2962
    %v3283 = vunpack.c.l.b16 %v2963
    %v3284 = vunpack.c.l.b16 %v2964
    %v3285 = vunpack.c.l.b16 %v2965
    %v3286 = vunpack.c.l.b16 %v2966
    %v3287 = vunpack.c.l.b16 %v2967
    %v3288 = vunpack.c.l.b16 %v2968
    %v3289 = vunpack.c.l.b16 %v2969
    %v3290 = vunpack.c.l.b16 %v2970
    %v3291 = vunpack.c.l.b16 %v2971
    %v3292 = vunpack.c.l.b16 %v2972
    %v3293 = vunpack.c.l.b16 %v2973
    %v3294 = vunpack.c.l.b16 %v2974
    %v3295 = vunpack.c.l.b16 %v2975
    %v3296 = vunpack.c.l.b16 %v2976
    %v3297 = vunpack.c.l.b16 %v2977
    %v3298 = vunpack.c.l.b16 %v2978
    %v3299 = vunpack.c.l.b16 %v2979
    %v3300 = vunpack.c.l.b16 %v2980
    %v3301 = vunpack.c.l.b16 %v2981
    %v3302 = vunpack.c.l.b16 %v2982
    %v3303 = vunpack.c.l.b16 %v2983
    %v3304 = vunpack.c.l.b16 %v2984
    %v3305 = vunpack.c.l.b16 %v2985
    %v3306 = vunpack.c.l.b16 %v2986
    %v3307 = vunpack.c.l.b16 %v2987
    %v3308 = vunpack.c.l.b16 %v2988
    %v3309 = vunpack.c.l.b16 %v2989
    %v3310 = vunpack.c.l.b16 %v2990
    %v3311 = vunpack.c.l.b16 %v2991
    %v3312 = vunpack.c.l.b16 %v2992
    %v3313 = vunpack.c.l.b16 %v2993
    %v3314 = vunpack.c.l.b16 %v2994
    %v3315 = vunpack.c.l.b16 %v2995
    %v3316 = vunpack.c.l.b16 %v2996
    %v3317 = vunpack.c.l.b16 %v2997
    %v3318 = vunpack.c.l.b16 %v2998
    %v3319 = vunpack.c.l.b16 %v2999
    %v3320 = vunpack.c.l.b16 %v3000
    %v3321 = vunpack.c.l.b16 %v3001
    %v3322 = vunpack.c.l.b16 %v3002
    %v3323 = vunpack.c.l.b16 %v3003
    %v3324 = vunpack.c.l.b16 %v3004
    %v3325 = vunpack.c.l.b16 %v3005
    %v3326 = vunpack.c.l.b16 %v3006
    %v3327 = vunpack.c.l.b16 %v3007
    %v3328 = vunpack.c.l.b16 %v3008
    %v3329 = vunpack.c.l.b16 %v3009
    %v3330 = vunpack.c.l.b16 %v3010
    %v3331 = vunpack.c.l.b16 %v3011
    %v3332 = vunpack.c.l.b16 %v3012
    %v3333 = vunpack.c.l.b16 %v3013
    %v3334 = vunpack.c.l.b16 %v3014
    %v3335 = vunpack.c.l.b16 %v3015
    %v3336 = vunpack.c.l.b16 %v3016
    %v3337 = vunpack.c.l.b16 %v3017
    %v3338 = vunpack.c.l.b16 %v3018
    %v3339 = vunpack.c.l.b16 %v3019
    %v3340 = vunpack.c.l.b16 %v3020
    %v3341 = vunpack.c.l.b16 %v3021
    %v3342 = vunpack.c.l.b16 %v3022
    %v3343 = vunpack.c.l.b16 %v3023
    %v3344 = vunpack.c.l.b16 %v3024
    %v3345 = vunpack.c.l.b16 %v3025
    %v3346 = vunpack.c.l.b16 %v3026
    %v3347 = vunpack.c.l.b16 %v3027
    %v3348 = vunpack.c.l.b16 %v3028
    %v3349 = vunpack.c.l.b16 %v3029
    %v3350 = vunpack.c.l.b16 %v3030
    %v3351 = vunpack.c.l.b16 %v3031
    %v3352 = vunpack.c.l.b16 %v3032
    %v3353 = vunpack.c.l.b16 %v3033
    %v3354 = vunpack.c.l.b16 %v3034
    %v3355 = vunpack.c.l.b16 %v3035
    %v3356 = vunpack.c.l.b16 %v3036
    %v3357 = vunpack.c.l.b16 %v3037
    %v3358 = vunpack.c.l.b16 %v3038
    %v3359 = vunpack.c.l.b16 %v3039
    %v3360 = vunpack.c.l.b16 %v3040
    %v3361 = vunpack.c.l.b16 %v3041
    %v3362 = vunpack.c.l.b16 %v3042
    %v3363 = vunpack.c.l.b16 %v3043
    %v3364 = vunpack.c.l.b16 %v3044
    %v3365 = vunpack.c.l.b16 %v3045
    %v3366 = vunpack.c.l.b16 %v3046
    %v3367 = vunpack.c.l.b16 %v3047
    %v3368 = vunpack.c.l.b16 %v3048
    %v3369 = vunpack.c.l.b16 %v3049
    %v3370 = vunpack.c.l.b16 %v3050
    %v3371 = vunpack.c.l.b16 %v3051
    %v3372 = vunpack.c.l.b16 %v3052
    %v3373 = vpack.c.b16 %v3214, %v3213
    %v3374 = vpack.c.b16 %v3216, %v3215
    %v3375 = vpack.c.b16 %v3218, %v3217
    %v3376 = vpack.c.b16 %v3220, %v3219
    %v3377 = vpack.c.b16 %v3222, %v3221
    %v3378 = vpack.c.b16 %v3224, %v3223
    %v3379 = vpack.c.b16 %v3226, %v3225
    %v3380 = vpack.c.b16 %v3228, %v3227
    %v3381 = vpack.c.b16 %v3230, %v3229
    %v3382 = vpack.c.b16 %v3232, %v3231
    %v3383 = vpack.c.b16 %v3234, %v3233
    %v3384 = vpack.c.b16 %v3236, %v3235
    %v3385 = vpack.c.b16 %v3238, %v3237
    %v3386 = vpack.c.b16 %v3240, %v3239
    %v3387 = vpack.c.b16 %v3242, %v3241
    %v3388 = vpack.c.b16 %v3244, %v3243
    %v3389 = vpack.c.b16 %v3246, %v3245
    %v3390 = vpack.c.b16 %v3248, %v3247
    %v3391 = vpack.c.b16 %v3250, %v3249
    %v3392 = vpack.c.b16 %v3252, %v3251
    %v3393 = vpack.c.b16 %v3254, %v3253
    %v3394 = vpack.c.b16 %v3256, %v3255
    %v3395 = vpack.c.b16 %v3258, %v3257
    %v3396 = vpack.c.b16 %v3260, %v3259
    %v3397 = vpack.c.b16 %v3262, %v3261
    %v3398 = vpack.c.b16 %v3264, %v3263
    %v3399 = vpack.c.b16 %v3266, %v3265
    %v3400 = vpack.c.b16 %v3268, %v3267
    %v3401 = vpack.c.b16 %v3270, %v3269
    %v3402 = vpack.c.b16 %v3272, %v3271
    %v3403 = vpack.c.b16 %v3274, %v3273
    %v3404 = vpack.c.b16 %v3276, %v3275
    %v3405 = vpack.c.b16 %v3278, %v3277
    %v3406 = vpack.c.b16 %v3280, %v3279
    %v3407 = vpack.c.b16 %v3282, %v3281
    %v3408 = vpack.c.b16 %v3284, %v3283
    %v3409 = vpack.c.b16 %v3286, %v3285
    %v3410 = vpack.c.b16 %v3288, %v3287
    %v3411 = vpack.c.b16 %v3290, %v3289
    %v3412 = vpack.c.b16 %v3292, %v3291
    %v3413 = vpack.c.b16 %v3294, %v3293
    %v3414 = vpack.c.b16 %v3296, %v3295
    %v3415 = vpack.c.b16 %v3298, %v3297
    %v3416 = vpack.c.b16 %v3300, %v3299
    %v3417 = vpack.c.b16 %v3302, %v3301
    %v3418 = vpack.c.b16 %v3304, %v3303
    %v3419 = vpack.c.b16 %v3306, %v3305
    %v3420 = vpack.c.b16 %v3308, %v3307
    %v3421 = vpack.c.b16 %v3310, %v3309
    %v3422 = vpack.c.b16 %v3312, %v3311
    %v3423 = vpack.c.b16 %v3314, %v3313
    %v3424 = vpack.c.b16 %v3316, %v3315
    %v3425 = vpack.c.b16 %v3318, %v3317
    %v3426 = vpack.c.b16 %v3320, %v3319
    %v3427 = vpack.c.b16 %v3322, %v3321
    %v3428 = vpack.c.b16 %v3324, %v3323
    %v3429 = vpack.c.b16 %v3326, %v3325
    %v3430 = vpack.c.b16 %v3328, %v3327
    %v3431 = vpack.c.b16 %v3330, %v3329
    %v3432 = vpack.c.b16 %v3332, %v3331
    %v3433 = vpack.c.b16 %v3334, %v3333
    %v3434 = vpack.c.b16 %v3336, %v3335
    %v3435 = vpack.c.b16 %v3338, %v3337
    %v3436 = vpack.c.b16 %v3340, %v3339
    %v3437 = vpack.c.b16 %v3342, %v3341
    %v3438 = vpack.c.b16 %v3344, %v3343
    %v3439 = vpack.c.b16 %v3346, %v3345
    %v3440 = vpack.c.b16 %v3348, %v3347
    %v3441 = vpack.c.b16 %v3350, %v3349
    %v3442 = vpack.c.b16 %v3352, %v3351
    %v3443 = vpack.c.b16 %v3354, %v3353
    %v3444 = vpack.c.b16 %v3356, %v3355
    %v3445 = vpack.c.b16 %v3358, %v3357
    %v3446 = vpack.c.b16 %v3360, %v3359
    %v3447 = vpack.c.b16 %v3362, %v3361
    %v3448 = vpack.c.b16 %v3364, %v3363
    %v3449 = vpack.c.b16 %v3366, %v3365
    %v3450 = vpack.c.b16 %v3368, %v3367
    %v3451 = vpack.c.b16 %v3370, %v3369
    %v3452 = vpack.c.b16 %v3372, %v3371
    %3533 = vmatprep.subr.bf16.mxu0 0
    %3534 = vmatpush1.bf16.msra.mxu0 %v3380
    %3535 = vmatprep.subr.bf16.mxu0 0
    %3536 = vmatpush1.bf16.msra.mxu0 %v3379
    %3537 = vmatprep.subr.bf16.mxu0 0
    %3538 = vmatpush1.bf16.msra.mxu0 %v3378
    %3539 = vmatprep.subr.bf16.mxu0 0
    %3540 = vmatpush1.bf16.msra.mxu0 %v3377
    %3541 = vmatprep.subr.bf16.mxu0 0
    %3542 = vmatpush1.bf16.msra.mxu0 %v3376
    %3543 = vmatprep.subr.bf16.mxu0 0
    %3544 = vmatpush1.bf16.msra.mxu0 %v3375
    %3545 = vmatprep.subr.bf16.mxu0 0
    %3546 = vmatpush1.bf16.msra.mxu0 %v3374
    %3547 = vmatprep.subr.bf16.mxu0 0
    %3548 = vmatpush1.bf16.msra.mxu0 %v3373
    %3549 = vmatprep.subr.bf16.mxu0 0
    %3550 = vmatpush2.bf16.msra.mxu0 %v3388
    %3551 = vmatprep.subr.bf16.mxu0 0
    %3552 = vmatpush2.bf16.msra.mxu0 %v3387
    %3553 = vmatprep.subr.bf16.mxu0 0
    %3554 = vmatpush2.bf16.msra.mxu0 %v3386
    %3555 = vmatprep.subr.bf16.mxu0 0
    %3556 = vmatpush2.bf16.msra.mxu0 %v3385
    %3557 = vmatprep.subr.bf16.mxu0 0
    %3558 = vmatpush2.bf16.msra.mxu0 %v3384
    %3559 = vmatprep.subr.bf16.mxu0 0
    %3560 = vmatpush2.bf16.msra.mxu0 %v3383
    %3561 = vmatprep.subr.bf16.mxu0 0
    %3562 = vmatpush2.bf16.msra.mxu0 %v3382
    %3563 = vmatprep.subr.bf16.mxu0 0
    %3564 = vmatpush2.bf16.msra.mxu0 %v3381
    %3565 = vmatprep.mubr.bf16.mxu0 %v2884
    %3566 = vmatmul.mubr.bf16.gmra.mxu0 %v2883
    %v3567 = vpop.f32.mrf.mxu0
    %v3568 = vadd.f32 0.0, %v3567
    %v3569 = vpop.f32.mrf.mxu0
    %v3570 = vpop.f32.mrf.mxu0
    %v3571 = vpop.f32.mrf.mxu0
    %3572 = vdwg.mxu0
    %3573 = vmatprep.subr.bf16.mxu0 0
    %3574 = vmatpush1.bf16.msra.mxu0 %v3396
    %3575 = vmatprep.subr.bf16.mxu0 0
    %3576 = vmatpush1.bf16.msra.mxu0 %v3395
    %3577 = vmatprep.subr.bf16.mxu0 0
    %3578 = vmatpush1.bf16.msra.mxu0 %v3394
    %3579 = vmatprep.subr.bf16.mxu0 0
    %3580 = vmatpush1.bf16.msra.mxu0 %v3393
    %3581 = vmatprep.subr.bf16.mxu0 0
    %3582 = vmatpush1.bf16.msra.mxu0 %v3392
    %3583 = vmatprep.subr.bf16.mxu0 0
    %3584 = vmatpush1.bf16.msra.mxu0 %v3391
    %3585 = vmatprep.subr.bf16.mxu0 0
    %3586 = vmatpush1.bf16.msra.mxu0 %v3390
    %3587 = vmatprep.subr.bf16.mxu0 0
    %3588 = vmatpush1.bf16.msra.mxu0 %v3389
    %3589 = vmatprep.subr.bf16.mxu0 0
    %3590 = vmatpush2.bf16.msra.mxu0 %v3404
    %3591 = vmatprep.subr.bf16.mxu0 0
    %3592 = vmatpush2.bf16.msra.mxu0 %v3403
    %3593 = vmatprep.subr.bf16.mxu0 0
    %3594 = vmatpush2.bf16.msra.mxu0 %v3402
    %3595 = vmatprep.subr.bf16.mxu0 0
    %3596 = vmatpush2.bf16.msra.mxu0 %v3401
    %3597 = vmatprep.subr.bf16.mxu0 0
    %3598 = vmatpush2.bf16.msra.mxu0 %v3400
    %3599 = vmatprep.subr.bf16.mxu0 0
    %3600 = vmatpush2.bf16.msra.mxu0 %v3399
    %3601 = vmatprep.subr.bf16.mxu0 0
    %3602 = vmatpush2.bf16.msra.mxu0 %v3398
    %3603 = vmatprep.subr.bf16.mxu0 0
    %3604 = vmatpush2.bf16.msra.mxu0 %v3397
    %3605 = vmatprep.mubr.bf16.mxu0 %v2886
    %3606 = vmatmul.mubr.bf16.gmra.mxu0 %v2885
    %v3607 = vpop.f32.mrf.mxu0
    %v3608 = vadd.f32 %v3568, %v3607
    %v3609 = vpop.f32.mrf.mxu0
    %v3610 = vpop.f32.mrf.mxu0
    %v3611 = vpop.f32.mrf.mxu0
    %3612 = vdwg.mxu0
    %3613 = vmatprep.subr.bf16.mxu0 0
    %3614 = vmatpush1.bf16.msra.mxu0 %v3412
    %3615 = vmatprep.subr.bf16.mxu0 0
    %3616 = vmatpush1.bf16.msra.mxu0 %v3411
    %3617 = vmatprep.subr.bf16.mxu0 0
    %3618 = vmatpush1.bf16.msra.mxu0 %v3410
    %3619 = vmatprep.subr.bf16.mxu0 0
    %3620 = vmatpush1.bf16.msra.mxu0 %v3409
    %3621 = vmatprep.subr.bf16.mxu0 0
    %3622 = vmatpush1.bf16.msra.mxu0 %v3408
    %3623 = vmatprep.subr.bf16.mxu0 0
    %3624 = vmatpush1.bf16.msra.mxu0 %v3407
    %3625 = vmatprep.subr.bf16.mxu0 0
    %3626 = vmatpush1.bf16.msra.mxu0 %v3406
    %3627 = vmatprep.subr.bf16.mxu0 0
    %3628 = vmatpush1.bf16.msra.mxu0 %v3405
    %3629 = vmatprep.subr.bf16.mxu0 0
    %3630 = vmatpush2.bf16.msra.mxu0 %v3420
    %3631 = vmatprep.subr.bf16.mxu0 0
    %3632 = vmatpush2.bf16.msra.mxu0 %v3419
    %3633 = vmatprep.subr.bf16.mxu0 0
    %3634 = vmatpush2.bf16.msra.mxu0 %v3418
    %3635 = vmatprep.subr.bf16.mxu0 0
    %3636 = vmatpush2.bf16.msra.mxu0 %v3417
    %3637 = vmatprep.subr.bf16.mxu0 0
    %3638 = vmatpush2.bf16.msra.mxu0 %v3416
    %3639 = vmatprep.subr.bf16.mxu0 0
    %3640 = vmatpush2.bf16.msra.mxu0 %v3415
    %3641 = vmatprep.subr.bf16.mxu0 0
    %3642 = vmatpush2.bf16.msra.mxu0 %v3414
    %3643 = vmatprep.subr.bf16.mxu0 0
    %3644 = vmatpush2.bf16.msra.mxu0 %v3413
    %3645 = vmatprep.mubr.bf16.mxu0 %v2888
    %3646 = vmatmul.mubr.bf16.gmra.mxu0 %v2887
    %v3647 = vpop.f32.mrf.mxu0
    %v3648 = vadd.f32 %v3608, %v3647
    %v3649 = vpop.f32.mrf.mxu0
    %v3650 = vpop.f32.mrf.mxu0
    %v3651 = vpop.f32.mrf.mxu0
    %3652 = vdwg.mxu0
    %3653 = vmatprep.subr.bf16.mxu0 0
    %3654 = vmatpush1.bf16.msra.mxu0 %v3428
    %3655 = vmatprep.subr.bf16.mxu0 0
    %3656 = vmatpush1.bf16.msra.mxu0 %v3427
    %3657 = vmatprep.subr.bf16.mxu0 0
    %3658 = vmatpush1.bf16.msra.mxu0 %v3426
    %3659 = vmatprep.subr.bf16.mxu0 0
    %3660 = vmatpush1.bf16.msra.mxu0 %v3425
    %3661 = vmatprep.subr.bf16.mxu0 0
    %3662 = vmatpush1.bf16.msra.mxu0 %v3424
    %3663 = vmatprep.subr.bf16.mxu0 0
    %3664 = vmatpush1.bf16.msra.mxu0 %v3423
    %3665 = vmatprep.subr.bf16.mxu0 0
    %3666 = vmatpush1.bf16.msra.mxu0 %v3422
    %3667 = vmatprep.subr.bf16.mxu0 0
    %3668 = vmatpush1.bf16.msra.mxu0 %v3421
    %3669 = vmatprep.subr.bf16.mxu0 0
    %3670 = vmatpush2.bf16.msra.mxu0 %v3436
    %3671 = vmatprep.subr.bf16.mxu0 0
    %3672 = vmatpush2.bf16.msra.mxu0 %v3435
    %3673 = vmatprep.subr.bf16.mxu0 0
    %3674 = vmatpush2.bf16.msra.mxu0 %v3434
    %3675 = vmatprep.subr.bf16.mxu0 0
    %3676 = vmatpush2.bf16.msra.mxu0 %v3433
    %3677 = vmatprep.subr.bf16.mxu0 0
    %3678 = vmatpush2.bf16.msra.mxu0 %v3432
    %3679 = vmatprep.subr.bf16.mxu0 0
    %3680 = vmatpush2.bf16.msra.mxu0 %v3431
    %3681 = vmatprep.subr.bf16.mxu0 0
    %3682 = vmatpush2.bf16.msra.mxu0 %v3430
    %3683 = vmatprep.subr.bf16.mxu0 0
    %3684 = vmatpush2.bf16.msra.mxu0 %v3429
    %3685 = vmatprep.mubr.bf16.mxu0 %v2890
    %3686 = vmatmul.mubr.bf16.gmra.mxu0 %v2889
    %v3687 = vpop.f32.mrf.mxu0
    %v3688 = vadd.f32 %v3648, %v3687
    %v3689 = vpop.f32.mrf.mxu0
    %v3690 = vpop.f32.mrf.mxu0
    %v3691 = vpop.f32.mrf.mxu0
    %3692 = vdwg.mxu0
    %3693 = vmatprep.subr.bf16.mxu0 0
    %3694 = vmatpush1.bf16.msra.mxu0 %v3444
    %3695 = vmatprep.subr.bf16.mxu0 0
    %3696 = vmatpush1.bf16.msra.mxu0 %v3443
    %3697 = vmatprep.subr.bf16.mxu0 0
    %3698 = vmatpush1.bf16.msra.mxu0 %v3442
    %3699 = vmatprep.subr.bf16.mxu0 0
    %3700 = vmatpush1.bf16.msra.mxu0 %v3441
    %3701 = vmatprep.subr.bf16.mxu0 0
    %3702 = vmatpush1.bf16.msra.mxu0 %v3440
    %3703 = vmatprep.subr.bf16.mxu0 0
    %3704 = vmatpush1.bf16.msra.mxu0 %v3439
    %3705 = vmatprep.subr.bf16.mxu0 0
    %3706 = vmatpush1.bf16.msra.mxu0 %v3438
    %3707 = vmatprep.subr.bf16.mxu0 0
    %3708 = vmatpush1.bf16.msra.mxu0 %v3437
    %3709 = vmatprep.subr.bf16.mxu0 0
    %3710 = vmatpush2.bf16.msra.mxu0 %v3452
    %3711 = vmatprep.subr.bf16.mxu0 0
    %3712 = vmatpush2.bf16.msra.mxu0 %v3451
    %3713 = vmatprep.subr.bf16.mxu0 0
    %3714 = vmatpush2.bf16.msra.mxu0 %v3450
    %3715 = vmatprep.subr.bf16.mxu0 0
    %3716 = vmatpush2.bf16.msra.mxu0 %v3449
    %3717 = vmatprep.subr.bf16.mxu0 0
    %3718 = vmatpush2.bf16.msra.mxu0 %v3448
    %3719 = vmatprep.subr.bf16.mxu0 0
    %3720 = vmatpush2.bf16.msra.mxu0 %v3447
    %3721 = vmatprep.subr.bf16.mxu0 0
    %3722 = vmatpush2.bf16.msra.mxu0 %v3446
    %3723 = vmatprep.subr.bf16.mxu0 0
    %3724 = vmatpush2.bf16.msra.mxu0 %v3445
    %3725 = vmatprep.mubr.bf16.mxu0 %v2892
    %3726 = vmatmul.mubr.bf16.gmra.mxu0 %v2891
    %v3727 = vpop.f32.mrf.mxu0
    %v3728 = vadd.f32 %v3688, %v3727
    %v3729 = vpop.f32.mrf.mxu0
    %v3730 = vpop.f32.mrf.mxu0
    %v3731 = vpop.f32.mrf.mxu0
    %3732 = vdwg.mxu0
    %v3733 = vsel %vm1078, %v3728, 0.0
    %v3734 = vrot.slane %v3733, 4
    %v3735 = vadd.f32 %v3733, %v3734
    %v3736 = vrot.slane %v3735, 2
    %v3737 = vadd.f32 %v3735, %v3736
    %v3738 = vrot.slane %v3737, 1
    %v3739 = vadd.f32 %v3737, %v3738
    %v3740 = vmul.f32 %v3728, %v3728
    %v3741 = vsel %vm1078, %v3740, 0.0
    %v3742 = vrot.slane %v3741, 4
    %v3743 = vadd.f32 %v3741, %v3742
    %v3744 = vrot.slane %v3743, 2
    %v3745 = vadd.f32 %v3743, %v3744
    %v3746 = vrot.slane %v3745, 1
    %v3747 = vadd.f32 %v3745, %v3746
    %v3748 = vsel %vm944, %v3739, %v3747
    %v3749 = vld [vmem:[%s3 + $0x200] sm:$0xff]
    %v3750 = vld [vmem:[%s3 + $0x208] sm:$0xff]
    %v3751 = vld [vmem:[%s3 + $0x210] sm:$0xff]
    %v3752 = vld [vmem:[%s3 + $0x218] sm:$0xff]
    %v3754 = vsel %vm1078, %v3748, 0
    %3756 = vmatprep.subr.mxu0 0.0
    %3757 = vmatpush1.msra.mxu0 0.0
    %3758 = vmatprep.subr.mxu0 0.0
    %3759 = vmatpush1.msra.mxu0 0.0
    %3760 = vmatprep.subr.mxu0 0.0
    %3761 = vmatpush1.msra.mxu0 0.0
    %3762 = vmatprep.subr.mxu0 0.0
    %3763 = vmatpush1.msra.mxu0 0.0
    %3764 = vmatprep.subr.mxu0 0.0
    %3765 = vmatpush1.msra.mxu0 0.0
    %3766 = vmatprep.subr.mxu0 0.0
    %3767 = vmatpush1.msra.mxu0 0.0
    %3768 = vmatprep.subr.mxu0 0.0
    %3769 = vmatpush1.msra.mxu0 0.0
    %3770 = vmatprep.subr.mxu0 0.0
    %3771 = vmatpush1.msra.mxu0 0.0
    %3772 = vmatprep.subr.mxu0 0.0
    %3773 = vmatpush1.msra.mxu0 0.0
    %3774 = vmatprep.subr.mxu0 0.0
    %3775 = vmatpush1.msra.mxu0 0.0
    %3776 = vmatprep.subr.mxu0 0.0
    %3777 = vmatpush1.msra.mxu0 0.0
    %3778 = vmatprep.subr.mxu0 0.0
    %3779 = vmatpush1.msra.mxu0 0.0
    %3780 = vmatprep.subr.mxu0 0.0
    %3781 = vmatpush1.msra.mxu0 %v3752
    %3782 = vmatprep.subr.mxu0 0.0
    %3783 = vmatpush1.msra.mxu0 %v3751
    %3784 = vmatprep.subr.mxu0 0.0
    %3785 = vmatpush1.msra.mxu0 %v3750
    %3786 = vmatprep.subr.mxu0 0.0
    %3787 = vmatpush1.msra.mxu0 %v3749
    %3788 = vmatprep.subr.mxu0 0.0
    %3789 = vmatpush2.msra.mxu0 0.0
    %3790 = vmatprep.subr.mxu0 0.0
    %3791 = vmatpush2.msra.mxu0 0.0
    %3792 = vmatprep.subr.mxu0 0.0
    %3793 = vmatpush2.msra.mxu0 0.0
    %3794 = vmatprep.subr.mxu0 0.0
    %3795 = vmatpush2.msra.mxu0 0.0
    %3796 = vmatprep.subr.mxu0 0.0
    %3797 = vmatpush2.msra.mxu0 0.0
    %3798 = vmatprep.subr.mxu0 0.0
    %3799 = vmatpush2.msra.mxu0 0.0
    %3800 = vmatprep.subr.mxu0 0.0
    %3801 = vmatpush2.msra.mxu0 0.0
    %3802 = vmatprep.subr.mxu0 0.0
    %3803 = vmatpush2.msra.mxu0 0.0
    %3804 = vmatprep.subr.mxu0 0.0
    %3805 = vmatpush2.msra.mxu0 0.0
    %3806 = vmatprep.subr.mxu0 0.0
    %3807 = vmatpush2.msra.mxu0 0.0
    %3808 = vmatprep.subr.mxu0 0.0
    %3809 = vmatpush2.msra.mxu0 0.0
    %3810 = vmatprep.subr.mxu0 0.0
    %3811 = vmatpush2.msra.mxu0 0.0
    %3812 = vmatprep.subr.mxu0 0.0
    %3813 = vmatpush2.msra.mxu0 0.0
    %3814 = vmatprep.subr.mxu0 0.0
    %3815 = vmatpush2.msra.mxu0 0.0
    %3816 = vmatprep.subr.mxu0 0.0
    %3817 = vmatpush2.msra.mxu0 0.0
    %3818 = vmatprep.subr.mxu0 0.0
    %3819 = vmatpush2.msra.mxu0 0.0
    %3820 = vmatprep.mubr.f32.mxu0 0.0
    %3821 = vmatmul.mubr.f32.gmra.mxu0 %v3754
    %v3822 = vpop.f32.mrf.mxu0
    %v3823 = vadd.f32 0.0, %v3822
    %v3824 = vpop.f32.mrf.mxu0
    %3825 = vdwg.mxu0
    %v3826 = vmul.f32 %v3823, 0.5
    %v3827 = vmul.f32 %v3826, %v3826
    %v3829 = vrot.slane %v3827, 7
    %v3831 = vsub.f32 %v3826, %v3829
    %v3832 = vmax.f32 %v3831, 0.0
    %v3833 = vadd.f32 %v3832, 1e-05
    %v3834 = vrsqrt.pop %v3833
    %v3836 = vrot.slane %v3834, 1
    %3837 = vrot.lane.b32.xlu0 %v3836, 64
    %v3838 = vpop.permute.xlu0 %3837
    %v3840 = vmul.f32 %v1056, %v3838
    %3842 = vrot.lane.b32.xlu0 %v3840, 64
    %v3843 = vpop.permute.xlu0 %3842
    %v3845 = vmul.f32 %v3826, %v3843
    %3847 = vrot.lane.b32.xlu0 %v3845, 64
    %v3848 = vpop.permute.xlu0 %3847
    %v3850 = vsub.f32 %v1057, %v3848
    %v3852 = vrot.slane %v3850, 7
    %v3854 = vsel %vm944, %v3840, %v3852
    %v3855 = vld [vmem:[%s4 + $0x80] sm:$0xff]
    %v3856 = vld [vmem:[%s4 + $0x90] sm:$0xff]
    %v3857 = vld [vmem:[%s4 + $0xa0] sm:$0xff]
    %v3858 = vld [vmem:[%s4 + $0xb0] sm:$0xff]
    %3860 = vrot.lane.b32.xlu0 %v3854, 64
    %v3861 = vpop.permute.xlu0 %3860
    %v3862 = vsel %vm1078, %v3861, 0
    %3864 = vmatprep.subr.mxu0 0.0
    %3865 = vmatpush1.msra.mxu0 0.0
    %3866 = vmatprep.subr.mxu0 0.0
    %3867 = vmatpush1.msra.mxu0 0.0
    %3868 = vmatprep.subr.mxu0 0.0
    %3869 = vmatpush1.msra.mxu0 0.0
    %3870 = vmatprep.subr.mxu0 0.0
    %3871 = vmatpush1.msra.mxu0 0.0
    %3872 = vmatprep.subr.mxu0 0.0
    %3873 = vmatpush1.msra.mxu0 0.0
    %3874 = vmatprep.subr.mxu0 0.0
    %3875 = vmatpush1.msra.mxu0 0.0
    %3876 = vmatprep.subr.mxu0 0.0
    %3877 = vmatpush1.msra.mxu0 0.0
    %3878 = vmatprep.subr.mxu0 0.0
    %3879 = vmatpush1.msra.mxu0 0.0
    %3880 = vmatprep.subr.mxu0 0.0
    %3881 = vmatpush1.msra.mxu0 0.0
    %3882 = vmatprep.subr.mxu0 0.0
    %3883 = vmatpush1.msra.mxu0 0.0
    %3884 = vmatprep.subr.mxu0 0.0
    %3885 = vmatpush1.msra.mxu0 0.0
    %3886 = vmatprep.subr.mxu0 0.0
    %3887 = vmatpush1.msra.mxu0 0.0
    %3888 = vmatprep.subr.mxu0 0.0
    %3889 = vmatpush1.msra.mxu0 %v3858
    %3890 = vmatprep.subr.mxu0 0.0
    %3891 = vmatpush1.msra.mxu0 %v3857
    %3892 = vmatprep.subr.mxu0 0.0
    %3893 = vmatpush1.msra.mxu0 %v3856
    %3894 = vmatprep.subr.mxu0 0.0
    %3895 = vmatpush1.msra.mxu0 %v3855
    %3896 = vmatprep.subr.mxu0 0.0
    %3897 = vmatpush2.msra.mxu0 0.0
    %3898 = vmatprep.subr.mxu0 0.0
    %3899 = vmatpush2.msra.mxu0 0.0
    %3900 = vmatprep.subr.mxu0 0.0
    %3901 = vmatpush2.msra.mxu0 0.0
    %3902 = vmatprep.subr.mxu0 0.0
    %3903 = vmatpush2.msra.mxu0 0.0
    %3904 = vmatprep.subr.mxu0 0.0
    %3905 = vmatpush2.msra.mxu0 0.0
    %3906 = vmatprep.subr.mxu0 0.0
    %3907 = vmatpush2.msra.mxu0 0.0
    %3908 = vmatprep.subr.mxu0 0.0
    %3909 = vmatpush2.msra.mxu0 0.0
    %3910 = vmatprep.subr.mxu0 0.0
    %3911 = vmatpush2.msra.mxu0 0.0
    %3912 = vmatprep.subr.mxu0 0.0
    %3913 = vmatpush2.msra.mxu0 0.0
    %3914 = vmatprep.subr.mxu0 0.0
    %3915 = vmatpush2.msra.mxu0 0.0
    %3916 = vmatprep.subr.mxu0 0.0
    %3917 = vmatpush2.msra.mxu0 0.0
    %3918 = vmatprep.subr.mxu0 0.0
    %3919 = vmatpush2.msra.mxu0 0.0
    %3920 = vmatprep.subr.mxu0 0.0
    %3921 = vmatpush2.msra.mxu0 0.0
    %3922 = vmatprep.subr.mxu0 0.0
    %3923 = vmatpush2.msra.mxu0 0.0
    %3924 = vmatprep.subr.mxu0 0.0
    %3925 = vmatpush2.msra.mxu0 0.0
    %3926 = vmatprep.subr.mxu0 0.0
    %3927 = vmatpush2.msra.mxu0 0.0
    %3928 = vmatprep.mubr.f32.mxu0 0.0
    %3929 = vmatmul.mubr.f32.gmra.mxu0 %v3862
    %v3930 = vpop.f32.mrf.mxu0
    %v3931 = vadd.f32 0.0, %v3930
    %v3932 = vpop.f32.mrf.mxu0
    %3933 = vdwg.mxu0
    %v3934 = vlaneseq
    %v3935 = vshrl.u32 %v3934, 7
    %v3936 = vsub.s32 0, %v3935
    %v3937 = vrot.slane %v3931, %v3936
    %v3938 = vmul.f32 %v3728, %v3937
    %v3939 = vlaneseq
    %v3940 = vshrl.u32 %v3939, 7
    %v3941 = vsub.s32 1, %v3940
    %v3942 = vrot.slane %v3931, %v3941
    %v3943 = vadd.f32 %v3938, %v3942
    %v3944 = vmax.f32 %v3943, 0.0
    %v3945 = vpack.c.bf16 %v3944, %v3944
    %v3946 = vld [vmem:[%s2 + $0xc80] sm:$0xf]
    %v3947 = vld [vmem:[%s2 + $0xc88] sm:$0xf]
    %v3948 = vld [vmem:[%s2 + $0xc90] sm:$0xf]
    %v3949 = vld [vmem:[%s2 + $0xc98] sm:$0xf]
    %v3950 = vld [vmem:[%s5 + $0x2] sm:$0x1]
    %v3951 = vlaneseq
    %v3952 = vshrl.u32 %v3951, 7
    %v3953 = vsub.s32 0, %v3952
    %v3954 = vrot.slane %v3950, %v3953
    %v3959 = vunpack.c.l.b16 %v3946
    %v3960 = vunpack.c.l.b16 %v3947
    %v3961 = vunpack.c.l.b16 %v3948
    %v3962 = vunpack.c.l.b16 %v3949
    %v3963 = vpack.c.b16 %v3960, %v3959
    %v3964 = vpack.c.b16 %v3962, %v3961
    %v3968 = vsel %vm1078, %v3945, 0
    %3970 = vmatprep.subr.bf16.mxu0 0
    %3971 = vmatpush1.bf16.msra.mxu0 0
    %3972 = vmatprep.subr.bf16.mxu0 0
    %3973 = vmatpush1.bf16.msra.mxu0 0
    %3974 = vmatprep.subr.bf16.mxu0 0
    %3975 = vmatpush1.bf16.msra.mxu0 0
    %3976 = vmatprep.subr.bf16.mxu0 0
    %3977 = vmatpush1.bf16.msra.mxu0 0
    %3978 = vmatprep.subr.bf16.mxu0 0
    %3979 = vmatpush1.bf16.msra.mxu0 0
    %3980 = vmatprep.subr.bf16.mxu0 0
    %3981 = vmatpush1.bf16.msra.mxu0 0
    %3982 = vmatprep.subr.bf16.mxu0 0
    %3983 = vmatpush1.bf16.msra.mxu0 %v3964
    %3984 = vmatprep.subr.bf16.mxu0 0
    %3985 = vmatpush1.bf16.msra.mxu0 %v3963
    %3986 = vmatprep.subr.bf16.mxu0 0
    %3987 = vmatpush2.bf16.msra.mxu0 0
    %3988 = vmatprep.subr.bf16.mxu0 0
    %3989 = vmatpush2.bf16.msra.mxu0 0
    %3990 = vmatprep.subr.bf16.mxu0 0
    %3991 = vmatpush2.bf16.msra.mxu0 0
    %3992 = vmatprep.subr.bf16.mxu0 0
    %3993 = vmatpush2.bf16.msra.mxu0 0
    %3994 = vmatprep.subr.bf16.mxu0 0
    %3995 = vmatpush2.bf16.msra.mxu0 0
    %3996 = vmatprep.subr.bf16.mxu0 0
    %3997 = vmatpush2.bf16.msra.mxu0 0
    %3998 = vmatprep.subr.bf16.mxu0 0
    %3999 = vmatpush2.bf16.msra.mxu0 0
    %4000 = vmatprep.subr.bf16.mxu0 0
    %4001 = vmatpush2.bf16.msra.mxu0 0
    %4002 = vmatprep.mubr.bf16.mxu0 0
    %4003 = vmatmul.mubr.bf16.gmra.mxu0 %v3968
    %v4004 = vpop.f32.mrf.mxu0
    %v4005 = vadd.f32 %v3954, %v4004
    %v4006 = vpop.f32.mrf.mxu0
    %v4007 = vpop.f32.mrf.mxu0
    %v4008 = vpop.f32.mrf.mxu0
    %4009 = vdwg.mxu0
    %vm4010 = vcmask 25600
    %4011 = vst.msk [vmem:[#allocation2] sm:$0x3] %vm4010, %v4005
    // Predicated region
    $region26: #{_lambda_.1} parent=1 // pred_check
      _
    $region27: #{_lambda_.1} parent=1 // pred_check_branch
      %4013 = sbr.rel (0) target = $region29
    $region28: #{_lambda_.1} parent=1 // pred_region
      %s4015 = ssub.s32 32, 32
      %4016 = vsyncadd [#allocation3], %s4015
      %s4018 = sshll.u32 [#allocation2], 4
      %s4019 = int_to_ptr.vmem [resolvable:$true] %s4018
      %4021 = dma.vmem_to_hbm [thread:$0]  %s4019, 32, %s6, [#allocation3]
    $region29: #{_lambda_.1} parent=1 // pred_fallthru
      _
    // Predicated region
    $region30: #{_lambda_.1} parent=1 // pred_check
      _
    $region31: #{_lambda_.1} parent=1 // pred_check_branch
      %4023 = sbr.rel (0) target = $region33
    $region32: #{_lambda_.1} parent=1 // pred_region
      %4024 = dma.done [#allocation3], 32
    $region33: #{_lambda_.1} parent=1 // pred_fallthru
      _
    %4025 = vsyncpa [#allocation3], 1

</llo_original>
